<compile_context>
chip_gen: v5e
topology: v5e:2x2
jax: 0.10.0
libtpu: 0.0.40
codegen_flags: <defaults>
</compile_context>

<pallas_src>
import functools

import jax
import jax.numpy as jnp
from jax.experimental import pallas as pl
from jax.experimental.pallas import tpu as pltpu

# ----------------------- model hyper-parameters (small config) -----------------------
# (real model: IMG=224, D=768, NH=12, DEPTH=12, MLP=3072 — would need K-tiled / Buffered
#  weight specs + raised vmem_limit_bytes on v7x's 64 MiB VMEM; whole-array blocks are
#  fine at this size, ~1 MB of bf16 weights total.)
IMG = 32          # image size
PATCH = 16        # patch size
IN_CH = 3         # RGB
NP = (IMG // PATCH) ** 2          # number of patches = 4
NTOK = NP + 1                     # +cls token = 5
D = 128           # embed dim
NH = 4            # heads
HD = D // NH      # head dim = 32
DEPTH = 2         # transformer depth
MLP = 4 * D       # mlp hidden = 512
PROJ_HID = 128    # projection head hidden
PROJ_OUT = 128    # proj_dim
LN_EPS = 1e-6
BN_EPS = 1e-5
CPP = IN_CH * PATCH * PATCH       # flattened patch size = 768


def _rep_spec(shape):
    """Whole-array block, replicated (constant block index) across the grid axis."""
    return pl.BlockSpec(shape, lambda c: (0,) * len(shape))


# --------------------------------- in-kernel helpers ---------------------------------
def _layernorm(x, g, b):
    mean = jnp.mean(x, axis=-1, keepdims=True)
    xc = x - mean
    var = jnp.mean(xc * xc, axis=-1, keepdims=True)
    return xc * jax.lax.rsqrt(var + LN_EPS) * g + b


def _gelu(x):
    # tanh-form GELU: one EUP tanh + a handful of VALU ops.
    # TODO(synk): torch.nn.GELU default is exact erf-GELU; tanh form differs by <= ~3e-4.
    c = 0.7978845608028654  # sqrt(2/pi)
    return 0.5 * x * (1.0 + jnp.tanh(c * (x + 0.044715 * x * x * x)))


# ------------------------------------- fused kernel -----------------------------------
def _fused_vit_kernel(chunk_b,
                      p_ref, rb_ref, pw_ref,
                      ln1g_ref, ln1b_ref, qkvw_ref,
                      projw_ref, projb_ref, ln2g_ref, ln2b_ref,
                      fc1w_ref, fc1b_ref, fc2w_ref, fc2b_ref,
                      ng_ref, nb_ref, w1_ref, t1_ref, w2_ref, t2_ref,
                      o_ref):
    R = chunk_b * NTOK                                      # rows resident in VMEM

    # ---- patch embed: matmul only the NP patch rows, fuse cls token + pos embed ----
    emb = jnp.dot(p_ref[0], pw_ref[...],
                  preferred_element_type=jnp.float32)       # (chunk_b*NP, D) f32
    cls_row = rb_ref[0:1, :]                                # cls + pos[0]
    pos_rows = rb_ref[1:NTOK, :]                            # patch_b + pos[1:]
    if chunk_b == 1:
        x = jnp.concatenate([cls_row, emb + pos_rows], axis=0)          # (NTOK, D)
    else:
        pieces = []
        for bi in range(chunk_b):
            pieces.append(cls_row)
            pieces.append(emb[bi * NP:(bi + 1) * NP, :] + pos_rows)
        x = jnp.concatenate(pieces, axis=0)                             # (R, D)

    # block-diagonal attention bias so several images can share the row dimension
    if chunk_b > 1:
        rid = jax.lax.broadcasted_iota(jnp.int32, (R, R), 0) // NTOK
        cid = jax.lax.broadcasted_iota(jnp.int32, (R, R), 1) // NTOK
        attn_bias = jnp.where(rid == cid, 0.0, -1e30).astype(jnp.float32)
    else:
        attn_bias = None

    # ---- DEPTH transformer blocks, statically unrolled, all VMEM-resident ----
    for l in range(DEPTH):
        # attention sub-block (pre-LN); q-scale already folded into qkv_w columns 0:D
        h = _layernorm(x, ln1g_ref[l], ln1b_ref[l])
        qkv = jnp.dot(h.astype(jnp.bfloat16), qkvw_ref[l],
                      preferred_element_type=jnp.float32)   # (R, 3D), qkv_bias=False
        a = jnp.zeros((R, D), jnp.float32)                  # proj-output accumulator
        for hh in range(NH):                                # static unroll over heads
            lo = hh * HD
            qh = qkv[:, lo:lo + HD]
            kh = qkv[:, D + lo:D + lo + HD]
            vh = qkv[:, 2 * D + lo:2 * D + lo + HD]
            s = jax.lax.dot_general(qh, kh, (((1,), (1,)), ((), ())),
                                    preferred_element_type=jnp.float32)   # (R, R)
            if attn_bias is not None:
                s = s + attn_bias
            s = s - jnp.max(s, axis=-1, keepdims=True)
            pr = jnp.exp(s)
            pr = pr * pl.reciprocal(jnp.sum(pr, axis=-1, keepdims=True), approx=True)
            ho = jnp.dot(pr, vh, preferred_element_type=jnp.float32)      # (R, HD)
            # accumulate straight into the lane-dense (R, D) proj output (no head concat)
            a = a + jnp.dot(ho.astype(jnp.bfloat16), projw_ref[l, lo:lo + HD, :],
                            preferred_element_type=jnp.float32)
        x = x + a + projb_ref[l]                            # residual fused in-kernel

        # MLP sub-block (pre-LN)
        h = _layernorm(x, ln2g_ref[l], ln2b_ref[l])
        h = jnp.dot(h.astype(jnp.bfloat16), fc1w_ref[l],
                    preferred_element_type=jnp.float32) + fc1b_ref[l]
        h = _gelu(h)
        h = jnp.dot(h.astype(jnp.bfloat16), fc2w_ref[l],
                    preferred_element_type=jnp.float32) + fc2b_ref[l]
        x = x + h

    # ---- cls pooling + final LayerNorm + projection head (eval-BN folded) ----
    if chunk_b == 1:
        feat = x[0:1, :]                                    # (1, D)
    else:
        feat = jnp.concatenate(
            [x[bi * NTOK:bi * NTOK + 1, :] for bi in range(chunk_b)], axis=0)
    h = _layernorm(feat, ng_ref[...], nb_ref[...])
    h = jnp.dot(h.astype(jnp.bfloat16), w1_ref[...],
                preferred_element_type=jnp.float32) + t1_ref[...]
    h = jnp.maximum(h, 0.0)
    o_ref[0] = jnp.dot(h.astype(jnp.bfloat16), w2_ref[...],
                       preferred_element_type=jnp.float32) + t2_ref[...]


# --------------------------------- kernel wrapper --------------------------------------
def fused_forward(prep, patches, num_chunks, chunk_b):
    kernel = functools.partial(_fused_vit_kernel, chunk_b)
    return pl.pallas_call(
        kernel,
        grid=(num_chunks,),
        in_specs=[
            pl.BlockSpec((1, chunk_b * NP, CPP), lambda c: (c, 0, 0)),   # patches (chunked)
            _rep_spec((NTOK, D)),                                        # row_bias (cls/pos)
            _rep_spec((CPP, D)),                                         # patch_w
            _rep_spec((DEPTH, 1, D)), _rep_spec((DEPTH, 1, D)),          # ln1 g/b
            _rep_spec((DEPTH, D, 3 * D)),                                # qkv_w (q-scaled)
            _rep_spec((DEPTH, D, D)), _rep_spec((DEPTH, 1, D)),          # proj w/b
            _rep_spec((DEPTH, 1, D)), _rep_spec((DEPTH, 1, D)),          # ln2 g/b
            _rep_spec((DEPTH, D, MLP)), _rep_spec((DEPTH, 1, MLP)),      # fc1 w/b
            _rep_spec((DEPTH, MLP, D)), _rep_spec((DEPTH, 1, D)),        # fc2 w/b
            _rep_spec((1, D)), _rep_spec((1, D)),                        # final LN g/b
            _rep_spec((D, PROJ_HID)), _rep_spec((1, PROJ_HID)),          # head w1/t1
            _rep_spec((PROJ_HID, PROJ_OUT)), _rep_spec((1, PROJ_OUT)),   # head w2/t2
        ],
        out_specs=pl.BlockSpec((1, chunk_b, PROJ_OUT), lambda c: (c, 0, 0)),
        out_shape=jax.ShapeDtypeStruct((num_chunks, chunk_b, PROJ_OUT), jnp.float32),
        compiler_params=pltpu.CompilerParams(dimension_semantics=("parallel",)),
    )(patches, prep["row_bias"], prep["patch_w"],
      prep["ln1_g"], prep["ln1_b"], prep["qkv_w"],
      prep["proj_w"], prep["proj_b"], prep["ln2_g"], prep["ln2_b"],
      prep["fc1_w"], prep["fc1_b"], prep["fc2_w"], prep["fc2_b"],
      prep["norm_g"], prep["norm_b"],
      prep["head_w1"], prep["head_t1"], prep["head_w2"], prep["head_t2"])


# ------------------------------------- parameters --------------------------------------
def init_params(key):
    keys = iter(jax.random.split(key, 64))

    def nrm(shape, std=0.02):
        return std * jax.random.normal(next(keys), shape, jnp.float32)

    p = {
        "patch_w": nrm((CPP, D)),
        "patch_b": jnp.zeros((D,), jnp.float32),
        "cls": nrm((1, 1, D)),
        "pos": nrm((1, NTOK, D)),
        "norm_g": jnp.ones((D,), jnp.float32),
        "norm_b": jnp.zeros((D,), jnp.float32),
        "blocks": [],
        # projection head: Linear(no bias)->BN->ReLU->Linear(no bias)->BN (eval-mode BN)
        "proj1_w": nrm((D, PROJ_HID)),
        "bn1_g": jnp.ones((PROJ_HID,), jnp.float32),
        "bn1_b": jnp.zeros((PROJ_HID,), jnp.float32),
        "bn1_mean": jnp.zeros((PROJ_HID,), jnp.float32),
        "bn1_var": jnp.ones((PROJ_HID,), jnp.float32),
        "proj2_w": nrm((PROJ_HID, PROJ_OUT)),
        "bn2_g": jnp.ones((PROJ_OUT,), jnp.float32),
        "bn2_b": jnp.zeros((PROJ_OUT,), jnp.float32),
        "bn2_mean": jnp.zeros((PROJ_OUT,), jnp.float32),
        "bn2_var": jnp.ones((PROJ_OUT,), jnp.float32),
    }
    for _ in range(DEPTH):
        p["blocks"].append({
            "ln1_g": jnp.ones((D,), jnp.float32), "ln1_b": jnp.zeros((D,), jnp.float32),
            "qkv_w": nrm((D, 3 * D)),                       # qkv_bias=False
            "proj_w": nrm((D, D)), "proj_b": jnp.zeros((D,), jnp.float32),
            "ln2_g": jnp.ones((D,), jnp.float32), "ln2_b": jnp.zeros((D,), jnp.float32),
            "fc1_w": nrm((D, MLP)), "fc1_b": jnp.zeros((MLP,), jnp.float32),
            "fc2_w": nrm((MLP, D)), "fc2_b": jnp.zeros((D,), jnp.float32),
        })
    return p


def prepare_params(p):
    """One-time eval-mode weight prep: stack per-layer weights, fold q-scale & BatchNorm."""
    def stack(key):
        return jnp.stack([blk[key] for blk in p["blocks"]])

    # fold 1/sqrt(HD) into the q output columns of qkv_w
    col_scale = jnp.concatenate(
        [jnp.full((D,), HD ** -0.5, jnp.float32), jnp.ones((2 * D,), jnp.float32)])[None, :]

    # cls token + per-patch bias + positional embedding as a single per-row bias
    row_bias = jnp.concatenate(
        [p["cls"].reshape(1, D),
         jnp.broadcast_to(p["patch_b"].reshape(1, D), (NP, D))], axis=0) \
        + p["pos"].reshape(NTOK, D)

    # fold eval-mode BatchNorm1d into the bias-free head Linears:  (x @ W) * s + t
    s1 = p["bn1_g"] / jnp.sqrt(p["bn1_var"] + BN_EPS)
    s2 = p["bn2_g"] / jnp.sqrt(p["bn2_var"] + BN_EPS)

    return {
        "patch_w": p["patch_w"].astype(jnp.bfloat16),
        "row_bias": row_bias,
        "ln1_g": stack("ln1_g").reshape(DEPTH, 1, D),
        "ln1_b": stack("ln1_b").reshape(DEPTH, 1, D),
        "qkv_w": (stack("qkv_w") * col_scale).astype(jnp.bfloat16),
        "proj_w": stack("proj_w").astype(jnp.bfloat16),
        "proj_b": stack("proj_b").reshape(DEPTH, 1, D),
        "ln2_g": stack("ln2_g").reshape(DEPTH, 1, D),
        "ln2_b": stack("ln2_b").reshape(DEPTH, 1, D),
        "fc1_w": stack("fc1_w").astype(jnp.bfloat16),
        "fc1_b": stack("fc1_b").reshape(DEPTH, 1, MLP),
        "fc2_w": stack("fc2_w").astype(jnp.bfloat16),
        "fc2_b": stack("fc2_b").reshape(DEPTH, 1, D),
        "norm_g": p["norm_g"].reshape(1, D),
        "norm_b": p["norm_b"].reshape(1, D),
        "head_w1": (p["proj1_w"] * s1[None, :]).astype(jnp.bfloat16),
        "head_t1": (p["bn1_b"] - p["bn1_mean"] * s1).reshape(1, PROJ_HID),
        "head_w2": (p["proj2_w"] * s2[None, :]).astype(jnp.bfloat16),
        "head_t2": (p["bn2_b"] - p["bn2_mean"] * s2).reshape(1, PROJ_OUT),
    }


# ------------------------------------- forward pass ------------------------------------
def patchify(x):
    """NCHW image -> (B, num_patches, C*P*P), matching Conv2d(stride=P) weight flattening."""
    B, C, H, W = x.shape
    ph, pw = H // PATCH, W // PATCH
    x = x.reshape(B, C, ph, PATCH, pw, PATCH)
    x = x.transpose(0, 2, 4, 1, 3, 5)               # B, ph, pw, C, p, p
    return x.reshape(B, ph * pw, C * PATCH * PATCH)


def vit_model_xray_forward(prep, x):
    B = x.shape[0]
    # >=2 parallel chunks so v7x uses both TensorCores; batch within a chunk is folded
    # into the row dimension inside the kernel (block-diagonal attention keeps images apart)
    num_chunks = 2 if (B % 2 == 0 and B >= 2) else 1
    chunk_b = B // num_chunks
    patches = patchify(x).astype(jnp.bfloat16).reshape(num_chunks, chunk_b * NP, CPP)
    out = fused_forward(prep, patches, num_chunks, chunk_b)     # (num_chunks, chunk_b, OUT)
    return out.reshape(B, PROJ_OUT)


# ------------------------------------- main ---------------------------------------------
if __name__ == "__main__":
    key = jax.random.PRNGKey(0)
    kx, kp = jax.random.split(key)
    x = jax.random.normal(kx, (2, IN_CH, IMG, IMG), jnp.float32)    # NCHW like PyTorch
    params = init_params(kp)
    prep = prepare_params(params)                                   # one-time weight folding

    fwd = jax.jit(vit_model_xray_forward)
    out = jax.block_until_ready(fwd(prep, x))
    assert out.shape == (2, PROJ_OUT), out.shape
    assert bool(jnp.all(jnp.isfinite(out)))
    print("KERNEL_OK")
</pallas_src>

<mosaic_0001>
module attributes {stable_mosaic.version = 11 : i64} {
  func.func @_fused_vit_kernel(%arg0: i32, %arg1: memref<1x4x768xbf16, #tpu.memory_space<vmem>>, %arg2: memref<5x128xf32, #tpu.memory_space<vmem>>, %arg3: memref<768x128xbf16, #tpu.memory_space<vmem>>, %arg4: memref<2x1x128xf32, #tpu.memory_space<vmem>>, %arg5: memref<2x1x128xf32, #tpu.memory_space<vmem>>, %arg6: memref<2x128x384xbf16, #tpu.memory_space<vmem>>, %arg7: memref<2x128x128xbf16, #tpu.memory_space<vmem>>, %arg8: memref<2x1x128xf32, #tpu.memory_space<vmem>>, %arg9: memref<2x1x128xf32, #tpu.memory_space<vmem>>, %arg10: memref<2x1x128xf32, #tpu.memory_space<vmem>>, %arg11: memref<2x128x512xbf16, #tpu.memory_space<vmem>>, %arg12: memref<2x1x512xf32, #tpu.memory_space<vmem>>, %arg13: memref<2x512x128xbf16, #tpu.memory_space<vmem>>, %arg14: memref<2x1x128xf32, #tpu.memory_space<vmem>>, %arg15: memref<1x128xf32, #tpu.memory_space<vmem>>, %arg16: memref<1x128xf32, #tpu.memory_space<vmem>>, %arg17: memref<128x128xbf16, #tpu.memory_space<vmem>>, %arg18: memref<1x128xf32, #tpu.memory_space<vmem>>, %arg19: memref<128x128xbf16, #tpu.memory_space<vmem>>, %arg20: memref<1x128xf32, #tpu.memory_space<vmem>>, %arg21: memref<1x1x128xf32, #tpu.memory_space<vmem>>) attributes {dimension_semantics = [#tpu.dimension_semantics<parallel>], iteration_bounds = array<i64: 2>, scalar_prefetch = 0 : i64, scratch_operands = 0 : i64, tpu.core_type = #tpu.core_type<tc>, window_params = [{transform_indices = @transform_0, window_bounds = array<i64: 1, 4, 768>}, {pipeline_mode = #tpu.pipeline_mode<synchronous>, transform_indices = @transform_1, window_bounds = array<i64: 5, 128>}, {pipeline_mode = #tpu.pipeline_mode<synchronous>, transform_indices = @transform_2, window_bounds = array<i64: 768, 128>}, {pipeline_mode = #tpu.pipeline_mode<synchronous>, transform_indices = @transform_3, window_bounds = array<i64: 2, 1, 128>}, {pipeline_mode = #tpu.pipeline_mode<synchronous>, transform_indices = @transform_4, window_bounds = array<i64: 2, 1, 128>}, {pipeline_mode = #tpu.pipeline_mode<synchronous>, transform_indices = @transform_5, window_bounds = array<i64: 2, 128, 384>}, {pipeline_mode = #tpu.pipeline_mode<synchronous>, transform_indices = @transform_6, window_bounds = array<i64: 2, 128, 128>}, {pipeline_mode = #tpu.pipeline_mode<synchronous>, transform_indices = @transform_7, window_bounds = array<i64: 2, 1, 128>}, {pipeline_mode = #tpu.pipeline_mode<synchronous>, transform_indices = @transform_8, window_bounds = array<i64: 2, 1, 128>}, {pipeline_mode = #tpu.pipeline_mode<synchronous>, transform_indices = @transform_9, window_bounds = array<i64: 2, 1, 128>}, {pipeline_mode = #tpu.pipeline_mode<synchronous>, transform_indices = @transform_10, window_bounds = array<i64: 2, 128, 512>}, {pipeline_mode = #tpu.pipeline_mode<synchronous>, transform_indices = @transform_11, window_bounds = array<i64: 2, 1, 512>}, {pipeline_mode = #tpu.pipeline_mode<synchronous>, transform_indices = @transform_12, window_bounds = array<i64: 2, 512, 128>}, {pipeline_mode = #tpu.pipeline_mode<synchronous>, transform_indices = @transform_13, window_bounds = array<i64: 2, 1, 128>}, {pipeline_mode = #tpu.pipeline_mode<synchronous>, transform_indices = @transform_14, window_bounds = array<i64: 1, 128>}, {pipeline_mode = #tpu.pipeline_mode<synchronous>, transform_indices = @transform_15, window_bounds = array<i64: 1, 128>}, {pipeline_mode = #tpu.pipeline_mode<synchronous>, transform_indices = @transform_16, window_bounds = array<i64: 128, 128>}, {pipeline_mode = #tpu.pipeline_mode<synchronous>, transform_indices = @transform_17, window_bounds = array<i64: 1, 128>}, {pipeline_mode = #tpu.pipeline_mode<synchronous>, transform_indices = @transform_18, window_bounds = array<i64: 128, 128>}, {pipeline_mode = #tpu.pipeline_mode<synchronous>, transform_indices = @transform_19, window_bounds = array<i64: 1, 128>}, {transform_indices = @transform_20, window_bounds = array<i64: 1, 1, 128>}]} {
    %c0 = arith.constant 0 : index
    %c0_0 = arith.constant 0 : index
    %c0_1 = arith.constant 0 : index
    %0 = vector.load %arg1[%c0, %c0_0, %c0_1] : memref<1x4x768xbf16, #tpu.memory_space<vmem>>, vector<1x4x768xbf16>
    %1 = vector.shape_cast %0 : vector<1x4x768xbf16> to vector<4x768xbf16>
    %c0_2 = arith.constant 0 : index
    %c0_3 = arith.constant 0 : index
    %2 = vector.load %arg3[%c0_2, %c0_3] : memref<768x128xbf16, #tpu.memory_space<vmem>>, vector<768x128xbf16>
    %cst = arith.constant dense<0.000000e+00> : vector<4x128xf32>
    %3 = tpu.matmul %1, %2, %cst {dimension_numbers = #tpu.dot_dimension_numbers<[1], [0], [0], [1], [0, 0, 1, 1], [], []>} : vector<4x768xbf16>, vector<768x128xbf16>, vector<4x128xf32> -> vector<4x128xf32>
    %c0_4 = arith.constant 0 : index
    %c0_5 = arith.constant 0 : index
    %4 = vector.load %arg2[%c0_4, %c0_5] : memref<5x128xf32, #tpu.memory_space<vmem>>, vector<1x128xf32>
    %c1 = arith.constant 1 : index
    %c0_6 = arith.constant 0 : index
    %5 = vector.load %arg2[%c1, %c0_6] : memref<5x128xf32, #tpu.memory_space<vmem>>, vector<4x128xf32>
    %6 = arith.addf %3, %5 : vector<4x128xf32>
    %7 = tpu.concatenate %4, %6 in 0 : vector<1x128xf32>, vector<4x128xf32> -> vector<5x128xf32>
    %c0_7 = arith.constant 0 : index
    %c0_8 = arith.constant 0 : index
    %c0_9 = arith.constant 0 : index
    %8 = vector.load %arg4[%c0_7, %c0_8, %c0_9] : memref<2x1x128xf32, #tpu.memory_space<vmem>>, vector<1x1x128xf32>
    %9 = vector.shape_cast %8 : vector<1x1x128xf32> to vector<1x128xf32>
    %c0_10 = arith.constant 0 : index
    %c0_11 = arith.constant 0 : index
    %c0_12 = arith.constant 0 : index
    %10 = vector.load %arg5[%c0_10, %c0_11, %c0_12] : memref<2x1x128xf32, #tpu.memory_space<vmem>>, vector<1x1x128xf32>
    %11 = vector.shape_cast %10 : vector<1x1x128xf32> to vector<1x128xf32>
    %cst_13 = arith.constant dense<0.000000e+00> : vector<5xf32>
    %12 = vector.multi_reduction <add>, %7, %cst_13 [1] : vector<5x128xf32> to vector<5xf32>
    %13 = vector.shape_cast %12 : vector<5xf32> to vector<5x1xf32>
    %cst_14 = arith.constant 1.280000e+02 : f32
    %14 = vector.broadcast %cst_14 : f32 to vector<5x1xf32>
    %15 = arith.divf %13, %14 : vector<5x1xf32>
    %16 = vector.broadcast %15 : vector<5x1xf32> to vector<5x128xf32>
    %17 = arith.subf %7, %16 : vector<5x128xf32>
    %18 = arith.mulf %17, %17 : vector<5x128xf32>
    %cst_15 = arith.constant dense<0.000000e+00> : vector<5xf32>
    %19 = vector.multi_reduction <add>, %18, %cst_15 [1] : vector<5x128xf32> to vector<5xf32>
    %20 = vector.shape_cast %19 : vector<5xf32> to vector<5x1xf32>
    %cst_16 = arith.constant 1.280000e+02 : f32
    %21 = vector.broadcast %cst_16 : f32 to vector<5x1xf32>
    %22 = arith.divf %20, %21 : vector<5x1xf32>
    %cst_17 = arith.constant 9.99999997E-7 : f32
    %23 = vector.broadcast %cst_17 : f32 to vector<5x1xf32>
    %24 = arith.addf %22, %23 : vector<5x1xf32>
    %25 = math.rsqrt %24 : vector<5x1xf32>
    %26 = vector.broadcast %25 : vector<5x1xf32> to vector<5x128xf32>
    %27 = arith.mulf %17, %26 : vector<5x128xf32>
    %28 = vector.broadcast %9 : vector<1x128xf32> to vector<5x128xf32>
    %29 = arith.mulf %27, %28 : vector<5x128xf32>
    %30 = vector.broadcast %11 : vector<1x128xf32> to vector<5x128xf32>
    %31 = arith.addf %29, %30 : vector<5x128xf32>
    %32 = arith.truncf %31 : vector<5x128xf32> to vector<5x128xbf16>
    %c0_18 = arith.constant 0 : index
    %c0_19 = arith.constant 0 : index
    %c0_20 = arith.constant 0 : index
    %33 = vector.load %arg6[%c0_18, %c0_19, %c0_20] : memref<2x128x384xbf16, #tpu.memory_space<vmem>>, vector<1x128x384xbf16>
    %34 = vector.shape_cast %33 : vector<1x128x384xbf16> to vector<128x384xbf16>
    %cst_21 = arith.constant dense<0.000000e+00> : vector<5x384xf32>
    %35 = tpu.matmul %32, %34, %cst_21 {dimension_numbers = #tpu.dot_dimension_numbers<[1], [0], [0], [1], [0, 0, 1, 1], [], []>} : vector<5x128xbf16>, vector<128x384xbf16>, vector<5x384xf32> -> vector<5x384xf32>
    %cst_22 = arith.constant 0.000000e+00 : f32
    %36 = vector.broadcast %cst_22 : f32 to vector<5x128xf32>
    %37 = vector.extract_strided_slice %35 {offsets = [0, 0], sizes = [5, 32], strides = [1, 1]} : vector<5x384xf32> to vector<5x32xf32>
    %38 = vector.extract_strided_slice %35 {offsets = [0, 128], sizes = [5, 32], strides = [1, 1]} : vector<5x384xf32> to vector<5x32xf32>
    %39 = vector.extract_strided_slice %35 {offsets = [0, 256], sizes = [5, 32], strides = [1, 1]} : vector<5x384xf32> to vector<5x32xf32>
    %cst_23 = arith.constant dense<0.000000e+00> : vector<5x5xf32>
    %40 = tpu.matmul %37, %38, %cst_23 {dimension_numbers = #tpu.dot_dimension_numbers<[1], [1], [0], [0], [0, 0, 1, 0], [], []>} : vector<5x32xf32>, vector<5x32xf32>, vector<5x5xf32> -> vector<5x5xf32>
    %cst_24 = arith.constant dense<0xFF800000> : vector<5xf32>
    %41 = vector.multi_reduction <maximumf>, %40, %cst_24 [1] : vector<5x5xf32> to vector<5xf32>
    %42 = vector.shape_cast %41 : vector<5xf32> to vector<5x1xf32>
    %43 = vector.broadcast %42 : vector<5x1xf32> to vector<5x5xf32>
    %44 = arith.subf %40, %43 : vector<5x5xf32>
    %45 = math.exp %44 : vector<5x5xf32>
    %cst_25 = arith.constant dense<0.000000e+00> : vector<5xf32>
    %46 = vector.multi_reduction <add>, %45, %cst_25 [1] : vector<5x5xf32> to vector<5xf32>
    %47 = vector.shape_cast %46 : vector<5xf32> to vector<5x1xf32>
    %48 = tpu.reciprocal %47 {approx = true} : vector<5x1xf32> -> vector<5x1xf32>
    %49 = vector.broadcast %48 : vector<5x1xf32> to vector<5x5xf32>
    %50 = arith.mulf %45, %49 : vector<5x5xf32>
    %cst_26 = arith.constant dense<0.000000e+00> : vector<5x32xf32>
    %51 = tpu.matmul %50, %39, %cst_26 {dimension_numbers = #tpu.dot_dimension_numbers<[1], [0], [0], [1], [0, 0, 1, 1], [], []>} : vector<5x5xf32>, vector<5x32xf32>, vector<5x32xf32> -> vector<5x32xf32>
    %52 = arith.truncf %51 : vector<5x32xf32> to vector<5x32xbf16>
    %c0_27 = arith.constant 0 : index
    %c0_28 = arith.constant 0 : index
    %c0_29 = arith.constant 0 : index
    %53 = vector.load %arg7[%c0_27, %c0_28, %c0_29] : memref<2x128x128xbf16, #tpu.memory_space<vmem>>, vector<1x32x128xbf16>
    %54 = vector.shape_cast %53 : vector<1x32x128xbf16> to vector<32x128xbf16>
    %cst_30 = arith.constant dense<0.000000e+00> : vector<5x128xf32>
    %55 = tpu.matmul %52, %54, %cst_30 {dimension_numbers = #tpu.dot_dimension_numbers<[1], [0], [0], [1], [0, 0, 1, 1], [], []>} : vector<5x32xbf16>, vector<32x128xbf16>, vector<5x128xf32> -> vector<5x128xf32>
    %56 = arith.addf %36, %55 : vector<5x128xf32>
    %57 = vector.extract_strided_slice %35 {offsets = [0, 32], sizes = [5, 32], strides = [1, 1]} : vector<5x384xf32> to vector<5x32xf32>
    %58 = vector.extract_strided_slice %35 {offsets = [0, 160], sizes = [5, 32], strides = [1, 1]} : vector<5x384xf32> to vector<5x32xf32>
    %59 = vector.extract_strided_slice %35 {offsets = [0, 288], sizes = [5, 32], strides = [1, 1]} : vector<5x384xf32> to vector<5x32xf32>
    %cst_31 = arith.constant dense<0.000000e+00> : vector<5x5xf32>
    %60 = tpu.matmul %57, %58, %cst_31 {dimension_numbers = #tpu.dot_dimension_numbers<[1], [1], [0], [0], [0, 0, 1, 0], [], []>} : vector<5x32xf32>, vector<5x32xf32>, vector<5x5xf32> -> vector<5x5xf32>
    %cst_32 = arith.constant dense<0xFF800000> : vector<5xf32>
    %61 = vector.multi_reduction <maximumf>, %60, %cst_32 [1] : vector<5x5xf32> to vector<5xf32>
    %62 = vector.shape_cast %61 : vector<5xf32> to vector<5x1xf32>
    %63 = vector.broadcast %62 : vector<5x1xf32> to vector<5x5xf32>
    %64 = arith.subf %60, %63 : vector<5x5xf32>
    %65 = math.exp %64 : vector<5x5xf32>
    %cst_33 = arith.constant dense<0.000000e+00> : vector<5xf32>
    %66 = vector.multi_reduction <add>, %65, %cst_33 [1] : vector<5x5xf32> to vector<5xf32>
    %67 = vector.shape_cast %66 : vector<5xf32> to vector<5x1xf32>
    %68 = tpu.reciprocal %67 {approx = true} : vector<5x1xf32> -> vector<5x1xf32>
    %69 = vector.broadcast %68 : vector<5x1xf32> to vector<5x5xf32>
    %70 = arith.mulf %65, %69 : vector<5x5xf32>
    %cst_34 = arith.constant dense<0.000000e+00> : vector<5x32xf32>
    %71 = tpu.matmul %70, %59, %cst_34 {dimension_numbers = #tpu.dot_dimension_numbers<[1], [0], [0], [1], [0, 0, 1, 1], [], []>} : vector<5x5xf32>, vector<5x32xf32>, vector<5x32xf32> -> vector<5x32xf32>
    %72 = arith.truncf %71 : vector<5x32xf32> to vector<5x32xbf16>
    %c0_35 = arith.constant 0 : index
    %c32 = arith.constant 32 : index
    %c0_36 = arith.constant 0 : index
    %73 = vector.load %arg7[%c0_35, %c32, %c0_36] : memref<2x128x128xbf16, #tpu.memory_space<vmem>>, vector<1x32x128xbf16>
    %74 = vector.shape_cast %73 : vector<1x32x128xbf16> to vector<32x128xbf16>
    %cst_37 = arith.constant dense<0.000000e+00> : vector<5x128xf32>
    %75 = tpu.matmul %72, %74, %cst_37 {dimension_numbers = #tpu.dot_dimension_numbers<[1], [0], [0], [1], [0, 0, 1, 1], [], []>} : vector<5x32xbf16>, vector<32x128xbf16>, vector<5x128xf32> -> vector<5x128xf32>
    %76 = arith.addf %56, %75 : vector<5x128xf32>
    %77 = vector.extract_strided_slice %35 {offsets = [0, 64], sizes = [5, 32], strides = [1, 1]} : vector<5x384xf32> to vector<5x32xf32>
    %78 = vector.extract_strided_slice %35 {offsets = [0, 192], sizes = [5, 32], strides = [1, 1]} : vector<5x384xf32> to vector<5x32xf32>
    %79 = vector.extract_strided_slice %35 {offsets = [0, 320], sizes = [5, 32], strides = [1, 1]} : vector<5x384xf32> to vector<5x32xf32>
    %cst_38 = arith.constant dense<0.000000e+00> : vector<5x5xf32>
    %80 = tpu.matmul %77, %78, %cst_38 {dimension_numbers = #tpu.dot_dimension_numbers<[1], [1], [0], [0], [0, 0, 1, 0], [], []>} : vector<5x32xf32>, vector<5x32xf32>, vector<5x5xf32> -> vector<5x5xf32>
    %cst_39 = arith.constant dense<0xFF800000> : vector<5xf32>
    %81 = vector.multi_reduction <maximumf>, %80, %cst_39 [1] : vector<5x5xf32> to vector<5xf32>
    %82 = vector.shape_cast %81 : vector<5xf32> to vector<5x1xf32>
    %83 = vector.broadcast %82 : vector<5x1xf32> to vector<5x5xf32>
    %84 = arith.subf %80, %83 : vector<5x5xf32>
    %85 = math.exp %84 : vector<5x5xf32>
    %cst_40 = arith.constant dense<0.000000e+00> : vector<5xf32>
    %86 = vector.multi_reduction <add>, %85, %cst_40 [1] : vector<5x5xf32> to vector<5xf32>
    %87 = vector.shape_cast %86 : vector<5xf32> to vector<5x1xf32>
    %88 = tpu.reciprocal %87 {approx = true} : vector<5x1xf32> -> vector<5x1xf32>
    %89 = vector.broadcast %88 : vector<5x1xf32> to vector<5x5xf32>
    %90 = arith.mulf %85, %89 : vector<5x5xf32>
    %cst_41 = arith.constant dense<0.000000e+00> : vector<5x32xf32>
    %91 = tpu.matmul %90, %79, %cst_41 {dimension_numbers = #tpu.dot_dimension_numbers<[1], [0], [0], [1], [0, 0, 1, 1], [], []>} : vector<5x5xf32>, vector<5x32xf32>, vector<5x32xf32> -> vector<5x32xf32>
    %92 = arith.truncf %91 : vector<5x32xf32> to vector<5x32xbf16>
    %c0_42 = arith.constant 0 : index
    %c64 = arith.constant 64 : index
    %c0_43 = arith.constant 0 : index
    %93 = vector.load %arg7[%c0_42, %c64, %c0_43] : memref<2x128x128xbf16, #tpu.memory_space<vmem>>, vector<1x32x128xbf16>
    %94 = vector.shape_cast %93 : vector<1x32x128xbf16> to vector<32x128xbf16>
    %cst_44 = arith.constant dense<0.000000e+00> : vector<5x128xf32>
    %95 = tpu.matmul %92, %94, %cst_44 {dimension_numbers = #tpu.dot_dimension_numbers<[1], [0], [0], [1], [0, 0, 1, 1], [], []>} : vector<5x32xbf16>, vector<32x128xbf16>, vector<5x128xf32> -> vector<5x128xf32>
    %96 = arith.addf %76, %95 : vector<5x128xf32>
    %97 = vector.extract_strided_slice %35 {offsets = [0, 96], sizes = [5, 32], strides = [1, 1]} : vector<5x384xf32> to vector<5x32xf32>
    %98 = vector.extract_strided_slice %35 {offsets = [0, 224], sizes = [5, 32], strides = [1, 1]} : vector<5x384xf32> to vector<5x32xf32>
    %99 = vector.extract_strided_slice %35 {offsets = [0, 352], sizes = [5, 32], strides = [1, 1]} : vector<5x384xf32> to vector<5x32xf32>
    %cst_45 = arith.constant dense<0.000000e+00> : vector<5x5xf32>
    %100 = tpu.matmul %97, %98, %cst_45 {dimension_numbers = #tpu.dot_dimension_numbers<[1], [1], [0], [0], [0, 0, 1, 0], [], []>} : vector<5x32xf32>, vector<5x32xf32>, vector<5x5xf32> -> vector<5x5xf32>
    %cst_46 = arith.constant dense<0xFF800000> : vector<5xf32>
    %101 = vector.multi_reduction <maximumf>, %100, %cst_46 [1] : vector<5x5xf32> to vector<5xf32>
    %102 = vector.shape_cast %101 : vector<5xf32> to vector<5x1xf32>
    %103 = vector.broadcast %102 : vector<5x1xf32> to vector<5x5xf32>
    %104 = arith.subf %100, %103 : vector<5x5xf32>
    %105 = math.exp %104 : vector<5x5xf32>
    %cst_47 = arith.constant dense<0.000000e+00> : vector<5xf32>
    %106 = vector.multi_reduction <add>, %105, %cst_47 [1] : vector<5x5xf32> to vector<5xf32>
    %107 = vector.shape_cast %106 : vector<5xf32> to vector<5x1xf32>
    %108 = tpu.reciprocal %107 {approx = true} : vector<5x1xf32> -> vector<5x1xf32>
    %109 = vector.broadcast %108 : vector<5x1xf32> to vector<5x5xf32>
    %110 = arith.mulf %105, %109 : vector<5x5xf32>
    %cst_48 = arith.constant dense<0.000000e+00> : vector<5x32xf32>
    %111 = tpu.matmul %110, %99, %cst_48 {dimension_numbers = #tpu.dot_dimension_numbers<[1], [0], [0], [1], [0, 0, 1, 1], [], []>} : vector<5x5xf32>, vector<5x32xf32>, vector<5x32xf32> -> vector<5x32xf32>
    %112 = arith.truncf %111 : vector<5x32xf32> to vector<5x32xbf16>
    %c0_49 = arith.constant 0 : index
    %c96 = arith.constant 96 : index
    %c0_50 = arith.constant 0 : index
    %113 = vector.load %arg7[%c0_49, %c96, %c0_50] : memref<2x128x128xbf16, #tpu.memory_space<vmem>>, vector<1x32x128xbf16>
    %114 = vector.shape_cast %113 : vector<1x32x128xbf16> to vector<32x128xbf16>
    %cst_51 = arith.constant dense<0.000000e+00> : vector<5x128xf32>
    %115 = tpu.matmul %112, %114, %cst_51 {dimension_numbers = #tpu.dot_dimension_numbers<[1], [0], [0], [1], [0, 0, 1, 1], [], []>} : vector<5x32xbf16>, vector<32x128xbf16>, vector<5x128xf32> -> vector<5x128xf32>
    %116 = arith.addf %96, %115 : vector<5x128xf32>
    %117 = arith.addf %7, %116 : vector<5x128xf32>
    %c0_52 = arith.constant 0 : index
    %c0_53 = arith.constant 0 : index
    %c0_54 = arith.constant 0 : index
    %118 = vector.load %arg8[%c0_52, %c0_53, %c0_54] : memref<2x1x128xf32, #tpu.memory_space<vmem>>, vector<1x1x128xf32>
    %119 = vector.shape_cast %118 : vector<1x1x128xf32> to vector<1x128xf32>
    %120 = vector.broadcast %119 : vector<1x128xf32> to vector<5x128xf32>
    %121 = arith.addf %117, %120 : vector<5x128xf32>
    %c0_55 = arith.constant 0 : index
    %c0_56 = arith.constant 0 : index
    %c0_57 = arith.constant 0 : index
    %122 = vector.load %arg9[%c0_55, %c0_56, %c0_57] : memref<2x1x128xf32, #tpu.memory_space<vmem>>, vector<1x1x128xf32>
    %123 = vector.shape_cast %122 : vector<1x1x128xf32> to vector<1x128xf32>
    %c0_58 = arith.constant 0 : index
    %c0_59 = arith.constant 0 : index
    %c0_60 = arith.constant 0 : index
    %124 = vector.load %arg10[%c0_58, %c0_59, %c0_60] : memref<2x1x128xf32, #tpu.memory_space<vmem>>, vector<1x1x128xf32>
    %125 = vector.shape_cast %124 : vector<1x1x128xf32> to vector<1x128xf32>
    %cst_61 = arith.constant dense<0.000000e+00> : vector<5xf32>
    %126 = vector.multi_reduction <add>, %121, %cst_61 [1] : vector<5x128xf32> to vector<5xf32>
    %127 = vector.shape_cast %126 : vector<5xf32> to vector<5x1xf32>
    %cst_62 = arith.constant 1.280000e+02 : f32
    %128 = vector.broadcast %cst_62 : f32 to vector<5x1xf32>
    %129 = arith.divf %127, %128 : vector<5x1xf32>
    %130 = vector.broadcast %129 : vector<5x1xf32> to vector<5x128xf32>
    %131 = arith.subf %121, %130 : vector<5x128xf32>
    %132 = arith.mulf %131, %131 : vector<5x128xf32>
    %cst_63 = arith.constant dense<0.000000e+00> : vector<5xf32>
    %133 = vector.multi_reduction <add>, %132, %cst_63 [1] : vector<5x128xf32> to vector<5xf32>
    %134 = vector.shape_cast %133 : vector<5xf32> to vector<5x1xf32>
    %cst_64 = arith.constant 1.280000e+02 : f32
    %135 = vector.broadcast %cst_64 : f32 to vector<5x1xf32>
    %136 = arith.divf %134, %135 : vector<5x1xf32>
    %cst_65 = arith.constant 9.99999997E-7 : f32
    %137 = vector.broadcast %cst_65 : f32 to vector<5x1xf32>
    %138 = arith.addf %136, %137 : vector<5x1xf32>
    %139 = math.rsqrt %138 : vector<5x1xf32>
    %140 = vector.broadcast %139 : vector<5x1xf32> to vector<5x128xf32>
    %141 = arith.mulf %131, %140 : vector<5x128xf32>
    %142 = vector.broadcast %123 : vector<1x128xf32> to vector<5x128xf32>
    %143 = arith.mulf %141, %142 : vector<5x128xf32>
    %144 = vector.broadcast %125 : vector<1x128xf32> to vector<5x128xf32>
    %145 = arith.addf %143, %144 : vector<5x128xf32>
    %146 = arith.truncf %145 : vector<5x128xf32> to vector<5x128xbf16>
    %c0_66 = arith.constant 0 : index
    %c0_67 = arith.constant 0 : index
    %c0_68 = arith.constant 0 : index
    %147 = vector.load %arg11[%c0_66, %c0_67, %c0_68] : memref<2x128x512xbf16, #tpu.memory_space<vmem>>, vector<1x128x512xbf16>
    %148 = vector.shape_cast %147 : vector<1x128x512xbf16> to vector<128x512xbf16>
    %cst_69 = arith.constant dense<0.000000e+00> : vector<5x512xf32>
    %149 = tpu.matmul %146, %148, %cst_69 {dimension_numbers = #tpu.dot_dimension_numbers<[1], [0], [0], [1], [0, 0, 1, 1], [], []>} : vector<5x128xbf16>, vector<128x512xbf16>, vector<5x512xf32> -> vector<5x512xf32>
    %c0_70 = arith.constant 0 : index
    %c0_71 = arith.constant 0 : index
    %c0_72 = arith.constant 0 : index
    %150 = vector.load %arg12[%c0_70, %c0_71, %c0_72] : memref<2x1x512xf32, #tpu.memory_space<vmem>>, vector<1x1x512xf32>
    %151 = vector.shape_cast %150 : vector<1x1x512xf32> to vector<1x512xf32>
    %152 = vector.broadcast %151 : vector<1x512xf32> to vector<5x512xf32>
    %153 = arith.addf %149, %152 : vector<5x512xf32>
    %cst_73 = arith.constant 5.000000e-01 : f32
    %154 = vector.broadcast %cst_73 : f32 to vector<5x512xf32>
    %155 = arith.mulf %154, %153 : vector<5x512xf32>
    %cst_74 = arith.constant 4.471500e-02 : f32
    %156 = vector.broadcast %cst_74 : f32 to vector<5x512xf32>
    %157 = arith.mulf %156, %153 : vector<5x512xf32>
    %158 = arith.mulf %157, %153 : vector<5x512xf32>
    %159 = arith.mulf %158, %153 : vector<5x512xf32>
    %160 = arith.addf %153, %159 : vector<5x512xf32>
    %cst_75 = arith.constant 0.797884583 : f32
    %161 = vector.broadcast %cst_75 : f32 to vector<5x512xf32>
    %162 = arith.mulf %161, %160 : vector<5x512xf32>
    %163 = math.tanh %162 : vector<5x512xf32>
    %cst_76 = arith.constant 1.000000e+00 : f32
    %164 = vector.broadcast %cst_76 : f32 to vector<5x512xf32>
    %165 = arith.addf %164, %163 : vector<5x512xf32>
    %166 = arith.mulf %155, %165 : vector<5x512xf32>
    %167 = arith.truncf %166 : vector<5x512xf32> to vector<5x512xbf16>
    %c0_77 = arith.constant 0 : index
    %c0_78 = arith.constant 0 : index
    %c0_79 = arith.constant 0 : index
    %168 = vector.load %arg13[%c0_77, %c0_78, %c0_79] : memref<2x512x128xbf16, #tpu.memory_space<vmem>>, vector<1x512x128xbf16>
    %169 = vector.shape_cast %168 : vector<1x512x128xbf16> to vector<512x128xbf16>
    %cst_80 = arith.constant dense<0.000000e+00> : vector<5x128xf32>
    %170 = tpu.matmul %167, %169, %cst_80 {dimension_numbers = #tpu.dot_dimension_numbers<[1], [0], [0], [1], [0, 0, 1, 1], [], []>} : vector<5x512xbf16>, vector<512x128xbf16>, vector<5x128xf32> -> vector<5x128xf32>
    %c0_81 = arith.constant 0 : index
    %c0_82 = arith.constant 0 : index
    %c0_83 = arith.constant 0 : index
    %171 = vector.load %arg14[%c0_81, %c0_82, %c0_83] : memref<2x1x128xf32, #tpu.memory_space<vmem>>, vector<1x1x128xf32>
    %172 = vector.shape_cast %171 : vector<1x1x128xf32> to vector<1x128xf32>
    %173 = vector.broadcast %172 : vector<1x128xf32> to vector<5x128xf32>
    %174 = arith.addf %170, %173 : vector<5x128xf32>
    %175 = arith.addf %121, %174 : vector<5x128xf32>
    %c1_84 = arith.constant 1 : index
    %c0_85 = arith.constant 0 : index
    %c0_86 = arith.constant 0 : index
    %176 = vector.load %arg4[%c1_84, %c0_85, %c0_86] : memref<2x1x128xf32, #tpu.memory_space<vmem>>, vector<1x1x128xf32>
    %177 = vector.shape_cast %176 : vector<1x1x128xf32> to vector<1x128xf32>
    %c1_87 = arith.constant 1 : index
    %c0_88 = arith.constant 0 : index
    %c0_89 = arith.constant 0 : index
    %178 = vector.load %arg5[%c1_87, %c0_88, %c0_89] : memref<2x1x128xf32, #tpu.memory_space<vmem>>, vector<1x1x128xf32>
    %179 = vector.shape_cast %178 : vector<1x1x128xf32> to vector<1x128xf32>
    %cst_90 = arith.constant dense<0.000000e+00> : vector<5xf32>
    %180 = vector.multi_reduction <add>, %175, %cst_90 [1] : vector<5x128xf32> to vector<5xf32>
    %181 = vector.shape_cast %180 : vector<5xf32> to vector<5x1xf32>
    %cst_91 = arith.constant 1.280000e+02 : f32
    %182 = vector.broadcast %cst_91 : f32 to vector<5x1xf32>
    %183 = arith.divf %181, %182 : vector<5x1xf32>
    %184 = vector.broadcast %183 : vector<5x1xf32> to vector<5x128xf32>
    %185 = arith.subf %175, %184 : vector<5x128xf32>
    %186 = arith.mulf %185, %185 : vector<5x128xf32>
    %cst_92 = arith.constant dense<0.000000e+00> : vector<5xf32>
    %187 = vector.multi_reduction <add>, %186, %cst_92 [1] : vector<5x128xf32> to vector<5xf32>
    %188 = vector.shape_cast %187 : vector<5xf32> to vector<5x1xf32>
    %cst_93 = arith.constant 1.280000e+02 : f32
    %189 = vector.broadcast %cst_93 : f32 to vector<5x1xf32>
    %190 = arith.divf %188, %189 : vector<5x1xf32>
    %cst_94 = arith.constant 9.99999997E-7 : f32
    %191 = vector.broadcast %cst_94 : f32 to vector<5x1xf32>
    %192 = arith.addf %190, %191 : vector<5x1xf32>
    %193 = math.rsqrt %192 : vector<5x1xf32>
    %194 = vector.broadcast %193 : vector<5x1xf32> to vector<5x128xf32>
    %195 = arith.mulf %185, %194 : vector<5x128xf32>
    %196 = vector.broadcast %177 : vector<1x128xf32> to vector<5x128xf32>
    %197 = arith.mulf %195, %196 : vector<5x128xf32>
    %198 = vector.broadcast %179 : vector<1x128xf32> to vector<5x128xf32>
    %199 = arith.addf %197, %198 : vector<5x128xf32>
    %200 = arith.truncf %199 : vector<5x128xf32> to vector<5x128xbf16>
    %c1_95 = arith.constant 1 : index
    %c0_96 = arith.constant 0 : index
    %c0_97 = arith.constant 0 : index
    %201 = vector.load %arg6[%c1_95, %c0_96, %c0_97] : memref<2x128x384xbf16, #tpu.memory_space<vmem>>, vector<1x128x384xbf16>
    %202 = vector.shape_cast %201 : vector<1x128x384xbf16> to vector<128x384xbf16>
    %cst_98 = arith.constant dense<0.000000e+00> : vector<5x384xf32>
    %203 = tpu.matmul %200, %202, %cst_98 {dimension_numbers = #tpu.dot_dimension_numbers<[1], [0], [0], [1], [0, 0, 1, 1], [], []>} : vector<5x128xbf16>, vector<128x384xbf16>, vector<5x384xf32> -> vector<5x384xf32>
    %cst_99 = arith.constant 0.000000e+00 : f32
    %204 = vector.broadcast %cst_99 : f32 to vector<5x128xf32>
    %205 = vector.extract_strided_slice %203 {offsets = [0, 0], sizes = [5, 32], strides = [1, 1]} : vector<5x384xf32> to vector<5x32xf32>
    %206 = vector.extract_strided_slice %203 {offsets = [0, 128], sizes = [5, 32], strides = [1, 1]} : vector<5x384xf32> to vector<5x32xf32>
    %207 = vector.extract_strided_slice %203 {offsets = [0, 256], sizes = [5, 32], strides = [1, 1]} : vector<5x384xf32> to vector<5x32xf32>
    %cst_100 = arith.constant dense<0.000000e+00> : vector<5x5xf32>
    %208 = tpu.matmul %205, %206, %cst_100 {dimension_numbers = #tpu.dot_dimension_numbers<[1], [1], [0], [0], [0, 0, 1, 0], [], []>} : vector<5x32xf32>, vector<5x32xf32>, vector<5x5xf32> -> vector<5x5xf32>
    %cst_101 = arith.constant dense<0xFF800000> : vector<5xf32>
    %209 = vector.multi_reduction <maximumf>, %208, %cst_101 [1] : vector<5x5xf32> to vector<5xf32>
    %210 = vector.shape_cast %209 : vector<5xf32> to vector<5x1xf32>
    %211 = vector.broadcast %210 : vector<5x1xf32> to vector<5x5xf32>
    %212 = arith.subf %208, %211 : vector<5x5xf32>
    %213 = math.exp %212 : vector<5x5xf32>
    %cst_102 = arith.constant dense<0.000000e+00> : vector<5xf32>
    %214 = vector.multi_reduction <add>, %213, %cst_102 [1] : vector<5x5xf32> to vector<5xf32>
    %215 = vector.shape_cast %214 : vector<5xf32> to vector<5x1xf32>
    %216 = tpu.reciprocal %215 {approx = true} : vector<5x1xf32> -> vector<5x1xf32>
    %217 = vector.broadcast %216 : vector<5x1xf32> to vector<5x5xf32>
    %218 = arith.mulf %213, %217 : vector<5x5xf32>
    %cst_103 = arith.constant dense<0.000000e+00> : vector<5x32xf32>
    %219 = tpu.matmul %218, %207, %cst_103 {dimension_numbers = #tpu.dot_dimension_numbers<[1], [0], [0], [1], [0, 0, 1, 1], [], []>} : vector<5x5xf32>, vector<5x32xf32>, vector<5x32xf32> -> vector<5x32xf32>
    %220 = arith.truncf %219 : vector<5x32xf32> to vector<5x32xbf16>
    %c1_104 = arith.constant 1 : index
    %c0_105 = arith.constant 0 : index
    %c0_106 = arith.constant 0 : index
    %221 = vector.load %arg7[%c1_104, %c0_105, %c0_106] : memref<2x128x128xbf16, #tpu.memory_space<vmem>>, vector<1x32x128xbf16>
    %222 = vector.shape_cast %221 : vector<1x32x128xbf16> to vector<32x128xbf16>
    %cst_107 = arith.constant dense<0.000000e+00> : vector<5x128xf32>
    %223 = tpu.matmul %220, %222, %cst_107 {dimension_numbers = #tpu.dot_dimension_numbers<[1], [0], [0], [1], [0, 0, 1, 1], [], []>} : vector<5x32xbf16>, vector<32x128xbf16>, vector<5x128xf32> -> vector<5x128xf32>
    %224 = arith.addf %204, %223 : vector<5x128xf32>
    %225 = vector.extract_strided_slice %203 {offsets = [0, 32], sizes = [5, 32], strides = [1, 1]} : vector<5x384xf32> to vector<5x32xf32>
    %226 = vector.extract_strided_slice %203 {offsets = [0, 160], sizes = [5, 32], strides = [1, 1]} : vector<5x384xf32> to vector<5x32xf32>
    %227 = vector.extract_strided_slice %203 {offsets = [0, 288], sizes = [5, 32], strides = [1, 1]} : vector<5x384xf32> to vector<5x32xf32>
    %cst_108 = arith.constant dense<0.000000e+00> : vector<5x5xf32>
    %228 = tpu.matmul %225, %226, %cst_108 {dimension_numbers = #tpu.dot_dimension_numbers<[1], [1], [0], [0], [0, 0, 1, 0], [], []>} : vector<5x32xf32>, vector<5x32xf32>, vector<5x5xf32> -> vector<5x5xf32>
    %cst_109 = arith.constant dense<0xFF800000> : vector<5xf32>
    %229 = vector.multi_reduction <maximumf>, %228, %cst_109 [1] : vector<5x5xf32> to vector<5xf32>
    %230 = vector.shape_cast %229 : vector<5xf32> to vector<5x1xf32>
    %231 = vector.broadcast %230 : vector<5x1xf32> to vector<5x5xf32>
    %232 = arith.subf %228, %231 : vector<5x5xf32>
    %233 = math.exp %232 : vector<5x5xf32>
    %cst_110 = arith.constant dense<0.000000e+00> : vector<5xf32>
    %234 = vector.multi_reduction <add>, %233, %cst_110 [1] : vector<5x5xf32> to vector<5xf32>
    %235 = vector.shape_cast %234 : vector<5xf32> to vector<5x1xf32>
    %236 = tpu.reciprocal %235 {approx = true} : vector<5x1xf32> -> vector<5x1xf32>
    %237 = vector.broadcast %236 : vector<5x1xf32> to vector<5x5xf32>
    %238 = arith.mulf %233, %237 : vector<5x5xf32>
    %cst_111 = arith.constant dense<0.000000e+00> : vector<5x32xf32>
    %239 = tpu.matmul %238, %227, %cst_111 {dimension_numbers = #tpu.dot_dimension_numbers<[1], [0], [0], [1], [0, 0, 1, 1], [], []>} : vector<5x5xf32>, vector<5x32xf32>, vector<5x32xf32> -> vector<5x32xf32>
    %240 = arith.truncf %239 : vector<5x32xf32> to vector<5x32xbf16>
    %c1_112 = arith.constant 1 : index
    %c32_113 = arith.constant 32 : index
    %c0_114 = arith.constant 0 : index
    %241 = vector.load %arg7[%c1_112, %c32_113, %c0_114] : memref<2x128x128xbf16, #tpu.memory_space<vmem>>, vector<1x32x128xbf16>
    %242 = vector.shape_cast %241 : vector<1x32x128xbf16> to vector<32x128xbf16>
    %cst_115 = arith.constant dense<0.000000e+00> : vector<5x128xf32>
    %243 = tpu.matmul %240, %242, %cst_115 {dimension_numbers = #tpu.dot_dimension_numbers<[1], [0], [0], [1], [0, 0, 1, 1], [], []>} : vector<5x32xbf16>, vector<32x128xbf16>, vector<5x128xf32> -> vector<5x128xf32>
    %244 = arith.addf %224, %243 : vector<5x128xf32>
    %245 = vector.extract_strided_slice %203 {offsets = [0, 64], sizes = [5, 32], strides = [1, 1]} : vector<5x384xf32> to vector<5x32xf32>
    %246 = vector.extract_strided_slice %203 {offsets = [0, 192], sizes = [5, 32], strides = [1, 1]} : vector<5x384xf32> to vector<5x32xf32>
    %247 = vector.extract_strided_slice %203 {offsets = [0, 320], sizes = [5, 32], strides = [1, 1]} : vector<5x384xf32> to vector<5x32xf32>
    %cst_116 = arith.constant dense<0.000000e+00> : vector<5x5xf32>
    %248 = tpu.matmul %245, %246, %cst_116 {dimension_numbers = #tpu.dot_dimension_numbers<[1], [1], [0], [0], [0, 0, 1, 0], [], []>} : vector<5x32xf32>, vector<5x32xf32>, vector<5x5xf32> -> vector<5x5xf32>
    %cst_117 = arith.constant dense<0xFF800000> : vector<5xf32>
    %249 = vector.multi_reduction <maximumf>, %248, %cst_117 [1] : vector<5x5xf32> to vector<5xf32>
    %250 = vector.shape_cast %249 : vector<5xf32> to vector<5x1xf32>
    %251 = vector.broadcast %250 : vector<5x1xf32> to vector<5x5xf32>
    %252 = arith.subf %248, %251 : vector<5x5xf32>
    %253 = math.exp %252 : vector<5x5xf32>
    %cst_118 = arith.constant dense<0.000000e+00> : vector<5xf32>
    %254 = vector.multi_reduction <add>, %253, %cst_118 [1] : vector<5x5xf32> to vector<5xf32>
    %255 = vector.shape_cast %254 : vector<5xf32> to vector<5x1xf32>
    %256 = tpu.reciprocal %255 {approx = true} : vector<5x1xf32> -> vector<5x1xf32>
    %257 = vector.broadcast %256 : vector<5x1xf32> to vector<5x5xf32>
    %258 = arith.mulf %253, %257 : vector<5x5xf32>
    %cst_119 = arith.constant dense<0.000000e+00> : vector<5x32xf32>
    %259 = tpu.matmul %258, %247, %cst_119 {dimension_numbers = #tpu.dot_dimension_numbers<[1], [0], [0], [1], [0, 0, 1, 1], [], []>} : vector<5x5xf32>, vector<5x32xf32>, vector<5x32xf32> -> vector<5x32xf32>
    %260 = arith.truncf %259 : vector<5x32xf32> to vector<5x32xbf16>
    %c1_120 = arith.constant 1 : index
    %c64_121 = arith.constant 64 : index
    %c0_122 = arith.constant 0 : index
    %261 = vector.load %arg7[%c1_120, %c64_121, %c0_122] : memref<2x128x128xbf16, #tpu.memory_space<vmem>>, vector<1x32x128xbf16>
    %262 = vector.shape_cast %261 : vector<1x32x128xbf16> to vector<32x128xbf16>
    %cst_123 = arith.constant dense<0.000000e+00> : vector<5x128xf32>
    %263 = tpu.matmul %260, %262, %cst_123 {dimension_numbers = #tpu.dot_dimension_numbers<[1], [0], [0], [1], [0, 0, 1, 1], [], []>} : vector<5x32xbf16>, vector<32x128xbf16>, vector<5x128xf32> -> vector<5x128xf32>
    %264 = arith.addf %244, %263 : vector<5x128xf32>
    %265 = vector.extract_strided_slice %203 {offsets = [0, 96], sizes = [5, 32], strides = [1, 1]} : vector<5x384xf32> to vector<5x32xf32>
    %266 = vector.extract_strided_slice %203 {offsets = [0, 224], sizes = [5, 32], strides = [1, 1]} : vector<5x384xf32> to vector<5x32xf32>
    %267 = vector.extract_strided_slice %203 {offsets = [0, 352], sizes = [5, 32], strides = [1, 1]} : vector<5x384xf32> to vector<5x32xf32>
    %cst_124 = arith.constant dense<0.000000e+00> : vector<5x5xf32>
    %268 = tpu.matmul %265, %266, %cst_124 {dimension_numbers = #tpu.dot_dimension_numbers<[1], [1], [0], [0], [0, 0, 1, 0], [], []>} : vector<5x32xf32>, vector<5x32xf32>, vector<5x5xf32> -> vector<5x5xf32>
    %cst_125 = arith.constant dense<0xFF800000> : vector<5xf32>
    %269 = vector.multi_reduction <maximumf>, %268, %cst_125 [1] : vector<5x5xf32> to vector<5xf32>
    %270 = vector.shape_cast %269 : vector<5xf32> to vector<5x1xf32>
    %271 = vector.broadcast %270 : vector<5x1xf32> to vector<5x5xf32>
    %272 = arith.subf %268, %271 : vector<5x5xf32>
    %273 = math.exp %272 : vector<5x5xf32>
    %cst_126 = arith.constant dense<0.000000e+00> : vector<5xf32>
    %274 = vector.multi_reduction <add>, %273, %cst_126 [1] : vector<5x5xf32> to vector<5xf32>
    %275 = vector.shape_cast %274 : vector<5xf32> to vector<5x1xf32>
    %276 = tpu.reciprocal %275 {approx = true} : vector<5x1xf32> -> vector<5x1xf32>
    %277 = vector.broadcast %276 : vector<5x1xf32> to vector<5x5xf32>
    %278 = arith.mulf %273, %277 : vector<5x5xf32>
    %cst_127 = arith.constant dense<0.000000e+00> : vector<5x32xf32>
    %279 = tpu.matmul %278, %267, %cst_127 {dimension_numbers = #tpu.dot_dimension_numbers<[1], [0], [0], [1], [0, 0, 1, 1], [], []>} : vector<5x5xf32>, vector<5x32xf32>, vector<5x32xf32> -> vector<5x32xf32>
    %280 = arith.truncf %279 : vector<5x32xf32> to vector<5x32xbf16>
    %c1_128 = arith.constant 1 : index
    %c96_129 = arith.constant 96 : index
    %c0_130 = arith.constant 0 : index
    %281 = vector.load %arg7[%c1_128, %c96_129, %c0_130] : memref<2x128x128xbf16, #tpu.memory_space<vmem>>, vector<1x32x128xbf16>
    %282 = vector.shape_cast %281 : vector<1x32x128xbf16> to vector<32x128xbf16>
    %cst_131 = arith.constant dense<0.000000e+00> : vector<5x128xf32>
    %283 = tpu.matmul %280, %282, %cst_131 {dimension_numbers = #tpu.dot_dimension_numbers<[1], [0], [0], [1], [0, 0, 1, 1], [], []>} : vector<5x32xbf16>, vector<32x128xbf16>, vector<5x128xf32> -> vector<5x128xf32>
    %284 = arith.addf %264, %283 : vector<5x128xf32>
    %285 = arith.addf %175, %284 : vector<5x128xf32>
    %c1_132 = arith.constant 1 : index
    %c0_133 = arith.constant 0 : index
    %c0_134 = arith.constant 0 : index
    %286 = vector.load %arg8[%c1_132, %c0_133, %c0_134] : memref<2x1x128xf32, #tpu.memory_space<vmem>>, vector<1x1x128xf32>
    %287 = vector.shape_cast %286 : vector<1x1x128xf32> to vector<1x128xf32>
    %288 = vector.broadcast %287 : vector<1x128xf32> to vector<5x128xf32>
    %289 = arith.addf %285, %288 : vector<5x128xf32>
    %c1_135 = arith.constant 1 : index
    %c0_136 = arith.constant 0 : index
    %c0_137 = arith.constant 0 : index
    %290 = vector.load %arg9[%c1_135, %c0_136, %c0_137] : memref<2x1x128xf32, #tpu.memory_space<vmem>>, vector<1x1x128xf32>
    %291 = vector.shape_cast %290 : vector<1x1x128xf32> to vector<1x128xf32>
    %c1_138 = arith.constant 1 : index
    %c0_139 = arith.constant 0 : index
    %c0_140 = arith.constant 0 : index
    %292 = vector.load %arg10[%c1_138, %c0_139, %c0_140] : memref<2x1x128xf32, #tpu.memory_space<vmem>>, vector<1x1x128xf32>
    %293 = vector.shape_cast %292 : vector<1x1x128xf32> to vector<1x128xf32>
    %cst_141 = arith.constant dense<0.000000e+00> : vector<5xf32>
    %294 = vector.multi_reduction <add>, %289, %cst_141 [1] : vector<5x128xf32> to vector<5xf32>
    %295 = vector.shape_cast %294 : vector<5xf32> to vector<5x1xf32>
    %cst_142 = arith.constant 1.280000e+02 : f32
    %296 = vector.broadcast %cst_142 : f32 to vector<5x1xf32>
    %297 = arith.divf %295, %296 : vector<5x1xf32>
    %298 = vector.broadcast %297 : vector<5x1xf32> to vector<5x128xf32>
    %299 = arith.subf %289, %298 : vector<5x128xf32>
    %300 = arith.mulf %299, %299 : vector<5x128xf32>
    %cst_143 = arith.constant dense<0.000000e+00> : vector<5xf32>
    %301 = vector.multi_reduction <add>, %300, %cst_143 [1] : vector<5x128xf32> to vector<5xf32>
    %302 = vector.shape_cast %301 : vector<5xf32> to vector<5x1xf32>
    %cst_144 = arith.constant 1.280000e+02 : f32
    %303 = vector.broadcast %cst_144 : f32 to vector<5x1xf32>
    %304 = arith.divf %302, %303 : vector<5x1xf32>
    %cst_145 = arith.constant 9.99999997E-7 : f32
    %305 = vector.broadcast %cst_145 : f32 to vector<5x1xf32>
    %306 = arith.addf %304, %305 : vector<5x1xf32>
    %307 = math.rsqrt %306 : vector<5x1xf32>
    %308 = vector.broadcast %307 : vector<5x1xf32> to vector<5x128xf32>
    %309 = arith.mulf %299, %308 : vector<5x128xf32>
    %310 = vector.broadcast %291 : vector<1x128xf32> to vector<5x128xf32>
    %311 = arith.mulf %309, %310 : vector<5x128xf32>
    %312 = vector.broadcast %293 : vector<1x128xf32> to vector<5x128xf32>
    %313 = arith.addf %311, %312 : vector<5x128xf32>
    %314 = arith.truncf %313 : vector<5x128xf32> to vector<5x128xbf16>
    %c1_146 = arith.constant 1 : index
    %c0_147 = arith.constant 0 : index
    %c0_148 = arith.constant 0 : index
    %315 = vector.load %arg11[%c1_146, %c0_147, %c0_148] : memref<2x128x512xbf16, #tpu.memory_space<vmem>>, vector<1x128x512xbf16>
    %316 = vector.shape_cast %315 : vector<1x128x512xbf16> to vector<128x512xbf16>
    %cst_149 = arith.constant dense<0.000000e+00> : vector<5x512xf32>
    %317 = tpu.matmul %314, %316, %cst_149 {dimension_numbers = #tpu.dot_dimension_numbers<[1], [0], [0], [1], [0, 0, 1, 1], [], []>} : vector<5x128xbf16>, vector<128x512xbf16>, vector<5x512xf32> -> vector<5x512xf32>
    %c1_150 = arith.constant 1 : index
    %c0_151 = arith.constant 0 : index
    %c0_152 = arith.constant 0 : index
    %318 = vector.load %arg12[%c1_150, %c0_151, %c0_152] : memref<2x1x512xf32, #tpu.memory_space<vmem>>, vector<1x1x512xf32>
    %319 = vector.shape_cast %318 : vector<1x1x512xf32> to vector<1x512xf32>
    %320 = vector.broadcast %319 : vector<1x512xf32> to vector<5x512xf32>
    %321 = arith.addf %317, %320 : vector<5x512xf32>
    %cst_153 = arith.constant 5.000000e-01 : f32
    %322 = vector.broadcast %cst_153 : f32 to vector<5x512xf32>
    %323 = arith.mulf %322, %321 : vector<5x512xf32>
    %cst_154 = arith.constant 4.471500e-02 : f32
    %324 = vector.broadcast %cst_154 : f32 to vector<5x512xf32>
    %325 = arith.mulf %324, %321 : vector<5x512xf32>
    %326 = arith.mulf %325, %321 : vector<5x512xf32>
    %327 = arith.mulf %326, %321 : vector<5x512xf32>
    %328 = arith.addf %321, %327 : vector<5x512xf32>
    %cst_155 = arith.constant 0.797884583 : f32
    %329 = vector.broadcast %cst_155 : f32 to vector<5x512xf32>
    %330 = arith.mulf %329, %328 : vector<5x512xf32>
    %331 = math.tanh %330 : vector<5x512xf32>
    %cst_156 = arith.constant 1.000000e+00 : f32
    %332 = vector.broadcast %cst_156 : f32 to vector<5x512xf32>
    %333 = arith.addf %332, %331 : vector<5x512xf32>
    %334 = arith.mulf %323, %333 : vector<5x512xf32>
    %335 = arith.truncf %334 : vector<5x512xf32> to vector<5x512xbf16>
    %c1_157 = arith.constant 1 : index
    %c0_158 = arith.constant 0 : index
    %c0_159 = arith.constant 0 : index
    %336 = vector.load %arg13[%c1_157, %c0_158, %c0_159] : memref<2x512x128xbf16, #tpu.memory_space<vmem>>, vector<1x512x128xbf16>
    %337 = vector.shape_cast %336 : vector<1x512x128xbf16> to vector<512x128xbf16>
    %cst_160 = arith.constant dense<0.000000e+00> : vector<5x128xf32>
    %338 = tpu.matmul %335, %337, %cst_160 {dimension_numbers = #tpu.dot_dimension_numbers<[1], [0], [0], [1], [0, 0, 1, 1], [], []>} : vector<5x512xbf16>, vector<512x128xbf16>, vector<5x128xf32> -> vector<5x128xf32>
    %c1_161 = arith.constant 1 : index
    %c0_162 = arith.constant 0 : index
    %c0_163 = arith.constant 0 : index
    %339 = vector.load %arg14[%c1_161, %c0_162, %c0_163] : memref<2x1x128xf32, #tpu.memory_space<vmem>>, vector<1x1x128xf32>
    %340 = vector.shape_cast %339 : vector<1x1x128xf32> to vector<1x128xf32>
    %341 = vector.broadcast %340 : vector<1x128xf32> to vector<5x128xf32>
    %342 = arith.addf %338, %341 : vector<5x128xf32>
    %343 = arith.addf %289, %342 : vector<5x128xf32>
    %344 = vector.extract_strided_slice %343 {offsets = [0, 0], sizes = [1, 128], strides = [1, 1]} : vector<5x128xf32> to vector<1x128xf32>
    %c0_164 = arith.constant 0 : index
    %c0_165 = arith.constant 0 : index
    %345 = vector.load %arg15[%c0_164, %c0_165] : memref<1x128xf32, #tpu.memory_space<vmem>>, vector<1x128xf32>
    %c0_166 = arith.constant 0 : index
    %c0_167 = arith.constant 0 : index
    %346 = vector.load %arg16[%c0_166, %c0_167] : memref<1x128xf32, #tpu.memory_space<vmem>>, vector<1x128xf32>
    %cst_168 = arith.constant dense<0.000000e+00> : vector<1xf32>
    %347 = vector.multi_reduction <add>, %344, %cst_168 [1] : vector<1x128xf32> to vector<1xf32>
    %348 = vector.shape_cast %347 : vector<1xf32> to vector<1x1xf32>
    %cst_169 = arith.constant 1.280000e+02 : f32
    %349 = vector.broadcast %cst_169 : f32 to vector<1x1xf32>
    %350 = arith.divf %348, %349 : vector<1x1xf32>
    %351 = vector.broadcast %350 : vector<1x1xf32> to vector<1x128xf32>
    %352 = arith.subf %344, %351 : vector<1x128xf32>
    %353 = arith.mulf %352, %352 : vector<1x128xf32>
    %cst_170 = arith.constant dense<0.000000e+00> : vector<1xf32>
    %354 = vector.multi_reduction <add>, %353, %cst_170 [1] : vector<1x128xf32> to vector<1xf32>
    %355 = vector.shape_cast %354 : vector<1xf32> to vector<1x1xf32>
    %cst_171 = arith.constant 1.280000e+02 : f32
    %356 = vector.broadcast %cst_171 : f32 to vector<1x1xf32>
    %357 = arith.divf %355, %356 : vector<1x1xf32>
    %cst_172 = arith.constant 9.99999997E-7 : f32
    %358 = vector.broadcast %cst_172 : f32 to vector<1x1xf32>
    %359 = arith.addf %357, %358 : vector<1x1xf32>
    %360 = math.rsqrt %359 : vector<1x1xf32>
    %361 = vector.broadcast %360 : vector<1x1xf32> to vector<1x128xf32>
    %362 = arith.mulf %352, %361 : vector<1x128xf32>
    %363 = arith.mulf %362, %345 : vector<1x128xf32>
    %364 = arith.addf %363, %346 : vector<1x128xf32>
    %365 = arith.truncf %364 : vector<1x128xf32> to vector<1x128xbf16>
    %c0_173 = arith.constant 0 : index
    %c0_174 = arith.constant 0 : index
    %366 = vector.load %arg17[%c0_173, %c0_174] : memref<128x128xbf16, #tpu.memory_space<vmem>>, vector<128x128xbf16>
    %cst_175 = arith.constant dense<0.000000e+00> : vector<1x128xf32>
    %367 = tpu.matmul %365, %366, %cst_175 {dimension_numbers = #tpu.dot_dimension_numbers<[1], [0], [0], [1], [0, 0, 1, 1], [], []>} : vector<1x128xbf16>, vector<128x128xbf16>, vector<1x128xf32> -> vector<1x128xf32>
    %c0_176 = arith.constant 0 : index
    %c0_177 = arith.constant 0 : index
    %368 = vector.load %arg18[%c0_176, %c0_177] : memref<1x128xf32, #tpu.memory_space<vmem>>, vector<1x128xf32>
    %369 = arith.addf %367, %368 : vector<1x128xf32>
    %cst_178 = arith.constant 0.000000e+00 : f32
    %370 = vector.broadcast %cst_178 : f32 to vector<1x128xf32>
    %371 = arith.maximumf %369, %370 : vector<1x128xf32>
    %372 = arith.truncf %371 : vector<1x128xf32> to vector<1x128xbf16>
    %c0_179 = arith.constant 0 : index
    %c0_180 = arith.constant 0 : index
    %373 = vector.load %arg19[%c0_179, %c0_180] : memref<128x128xbf16, #tpu.memory_space<vmem>>, vector<128x128xbf16>
    %cst_181 = arith.constant dense<0.000000e+00> : vector<1x128xf32>
    %374 = tpu.matmul %372, %373, %cst_181 {dimension_numbers = #tpu.dot_dimension_numbers<[1], [0], [0], [1], [0, 0, 1, 1], [], []>} : vector<1x128xbf16>, vector<128x128xbf16>, vector<1x128xf32> -> vector<1x128xf32>
    %c0_182 = arith.constant 0 : index
    %c0_183 = arith.constant 0 : index
    %375 = vector.load %arg20[%c0_182, %c0_183] : memref<1x128xf32, #tpu.memory_space<vmem>>, vector<1x128xf32>
    %376 = arith.addf %374, %375 : vector<1x128xf32>
    %c0_184 = arith.constant 0 : index
    %c0_185 = arith.constant 0 : index
    %c0_186 = arith.constant 0 : index
    %377 = vector.load %arg21[%c0_184, %c0_185, %c0_186] : memref<1x1x128xf32, #tpu.memory_space<vmem>>, vector<1x1x128xf32>
    %378 = vector.shape_cast %377 : vector<1x1x128xf32> to vector<1x128xf32>
    %379 = vector.shape_cast %376 : vector<1x128xf32> to vector<1x1x128xf32>
    tpu.vector_store %arg21[%c0_184, %c0_185, %c0_186], %379 {strides = array<i32>} : memref<1x1x128xf32, #tpu.memory_space<vmem>>, vector<1x1x128xf32>,
    return
  }
  func.func @transform_0(%arg0: i32) -> (i32, i32, i32) {
    %c0_i32 = arith.constant 0 : i32
    %c0_i32_0 = arith.constant 0 : i32
    %c0_i32_1 = arith.constant 0 : i32
    return %arg0, %c0_i32, %c0_i32_0 : i32, i32, i32
  }
  func.func @transform_1(%arg0: i32) -> (i32, i32) {
    %c0_i32 = arith.constant 0 : i32
    %c0_i32_0 = arith.constant 0 : i32
    %c0_i32_1 = arith.constant 0 : i32
    return %c0_i32, %c0_i32_0 : i32, i32
  }
  func.func @transform_2(%arg0: i32) -> (i32, i32) {
    %c0_i32 = arith.constant 0 : i32
    %c0_i32_0 = arith.constant 0 : i32
    %c0_i32_1 = arith.constant 0 : i32
    return %c0_i32, %c0_i32_0 : i32, i32
  }
  func.func @transform_3(%arg0: i32) -> (i32, i32, i32) {
    %c0_i32 = arith.constant 0 : i32
    %c0_i32_0 = arith.constant 0 : i32
    %c0_i32_1 = arith.constant 0 : i32
    %c0_i32_2 = arith.constant 0 : i32
    return %c0_i32, %c0_i32_0, %c0_i32_1 : i32, i32, i32
  }
  func.func @transform_4(%arg0: i32) -> (i32, i32, i32) {
    %c0_i32 = arith.constant 0 : i32
    %c0_i32_0 = arith.constant 0 : i32
    %c0_i32_1 = arith.constant 0 : i32
    %c0_i32_2 = arith.constant 0 : i32
    return %c0_i32, %c0_i32_0, %c0_i32_1 : i32, i32, i32
  }
  func.func @transform_5(%arg0: i32) -> (i32, i32, i32) {
    %c0_i32 = arith.constant 0 : i32
    %c0_i32_0 = arith.constant 0 : i32
    %c0_i32_1 = arith.constant 0 : i32
    %c0_i32_2 = arith.constant 0 : i32
    return %c0_i32, %c0_i32_0, %c0_i32_1 : i32, i32, i32
  }
  func.func @transform_6(%arg0: i32) -> (i32, i32, i32) {
    %c0_i32 = arith.constant 0 : i32
    %c0_i32_0 = arith.constant 0 : i32
    %c0_i32_1 = arith.constant 0 : i32
    %c0_i32_2 = arith.constant 0 : i32
    return %c0_i32, %c0_i32_0, %c0_i32_1 : i32, i32, i32
  }
  func.func @transform_7(%arg0: i32) -> (i32, i32, i32) {
    %c0_i32 = arith.constant 0 : i32
    %c0_i32_0 = arith.constant 0 : i32
    %c0_i32_1 = arith.constant 0 : i32
    %c0_i32_2 = arith.constant 0 : i32
    return %c0_i32, %c0_i32_0, %c0_i32_1 : i32, i32, i32
  }
  func.func @transform_8(%arg0: i32) -> (i32, i32, i32) {
    %c0_i32 = arith.constant 0 : i32
    %c0_i32_0 = arith.constant 0 : i32
    %c0_i32_1 = arith.constant 0 : i32
    %c0_i32_2 = arith.constant 0 : i32
    return %c0_i32, %c0_i32_0, %c0_i32_1 : i32, i32, i32
  }
  func.func @transform_9(%arg0: i32) -> (i32, i32, i32) {
    %c0_i32 = arith.constant 0 : i32
    %c0_i32_0 = arith.constant 0 : i32
    %c0_i32_1 = arith.constant 0 : i32
    %c0_i32_2 = arith.constant 0 : i32
    return %c0_i32, %c0_i32_0, %c0_i32_1 : i32, i32, i32
  }
  func.func @transform_10(%arg0: i32) -> (i32, i32, i32) {
    %c0_i32 = arith.constant 0 : i32
    %c0_i32_0 = arith.constant 0 : i32
    %c0_i32_1 = arith.constant 0 : i32
    %c0_i32_2 = arith.constant 0 : i32
    return %c0_i32, %c0_i32_0, %c0_i32_1 : i32, i32, i32
  }
  func.func @transform_11(%arg0: i32) -> (i32, i32, i32) {
    %c0_i32 = arith.constant 0 : i32
    %c0_i32_0 = arith.constant 0 : i32
    %c0_i32_1 = arith.constant 0 : i32
    %c0_i32_2 = arith.constant 0 : i32
    return %c0_i32, %c0_i32_0, %c0_i32_1 : i32, i32, i32
  }
  func.func @transform_12(%arg0: i32) -> (i32, i32, i32) {
    %c0_i32 = arith.constant 0 : i32
    %c0_i32_0 = arith.constant 0 : i32
    %c0_i32_1 = arith.constant 0 : i32
    %c0_i32_2 = arith.constant 0 : i32
    return %c0_i32, %c0_i32_0, %c0_i32_1 : i32, i32, i32
  }
  func.func @transform_13(%arg0: i32) -> (i32, i32, i32) {
    %c0_i32 = arith.constant 0 : i32
    %c0_i32_0 = arith.constant 0 : i32
    %c0_i32_1 = arith.constant 0 : i32
    %c0_i32_2 = arith.constant 0 : i32
    return %c0_i32, %c0_i32_0, %c0_i32_1 : i32, i32, i32
  }
  func.func @transform_14(%arg0: i32) -> (i32, i32) {
    %c0_i32 = arith.constant 0 : i32
    %c0_i32_0 = arith.constant 0 : i32
    %c0_i32_1 = arith.constant 0 : i32
    return %c0_i32, %c0_i32_0 : i32, i32
  }
  func.func @transform_15(%arg0: i32) -> (i32, i32) {
    %c0_i32 = arith.constant 0 : i32
    %c0_i32_0 = arith.constant 0 : i32
    %c0_i32_1 = arith.constant 0 : i32
    return %c0_i32, %c0_i32_0 : i32, i32
  }
  func.func @transform_16(%arg0: i32) -> (i32, i32) {
    %c0_i32 = arith.constant 0 : i32
    %c0_i32_0 = arith.constant 0 : i32
    %c0_i32_1 = arith.constant 0 : i32
    return %c0_i32, %c0_i32_0 : i32, i32
  }
  func.func @transform_17(%arg0: i32) -> (i32, i32) {
    %c0_i32 = arith.constant 0 : i32
    %c0_i32_0 = arith.constant 0 : i32
    %c0_i32_1 = arith.constant 0 : i32
    return %c0_i32, %c0_i32_0 : i32, i32
  }
  func.func @transform_18(%arg0: i32) -> (i32, i32) {
    %c0_i32 = arith.constant 0 : i32
    %c0_i32_0 = arith.constant 0 : i32
    %c0_i32_1 = arith.constant 0 : i32
    return %c0_i32, %c0_i32_0 : i32, i32
  }
  func.func @transform_19(%arg0: i32) -> (i32, i32) {
    %c0_i32 = arith.constant 0 : i32
    %c0_i32_0 = arith.constant 0 : i32
    %c0_i32_1 = arith.constant 0 : i32
    return %c0_i32, %c0_i32_0 : i32, i32
  }
  func.func @transform_20(%arg0: i32) -> (i32, i32, i32) {
    %c0_i32 = arith.constant 0 : i32
    %c0_i32_0 = arith.constant 0 : i32
    %c0_i32_1 = arith.constant 0 : i32
    return %arg0, %c0_i32, %c0_i32_0 : i32, i32, i32
  }
}

</mosaic_0001>

<llo_original>
// kernel: vit_model_xray_forward.1
$region0: #{vit_model_xray_forward.1}
  #allocation0 [shape = 'u32[]', space=smem, size = 0x4, offset = 0x4, fixed_abs, tag = 'smem constant byte address 0x4 - core index']
  #allocation1 [shape = 'u32[72,128]{1,0:T(1,128)}', space=vmem, size = 0x9000, scoped, tag = 'internal scratch']
  %s0 = inlined_call_operand.vmem [shape: bf16[2,4,768], index: 0, kind: input, shape index: {}]
  %s1 = inlined_call_operand.vmem [shape: f32[5,128], index: 1, kind: input, shape index: {}]
  %s2 = inlined_call_operand.hbm [shape: bf16[768,128], index: 2, kind: input, shape index: {}]
  %s3 = inlined_call_operand.vmem [shape: f32[2,1,128], index: 3, kind: input, shape index: {}]
  %s4 = inlined_call_operand.vmem [shape: f32[2,1,128], index: 4, kind: input, shape index: {}]
  %s5 = inlined_call_operand.hbm [shape: bf16[2,128,384], index: 5, kind: input, shape index: {}]
  %s6 = inlined_call_operand.vmem [shape: bf16[2,128,128], index: 6, kind: input, shape index: {}]
  %s7 = inlined_call_operand.vmem [shape: f32[2,1,128], index: 7, kind: input, shape index: {}]
  %s8 = inlined_call_operand.vmem [shape: f32[2,1,128], index: 8, kind: input, shape index: {}]
  %s9 = inlined_call_operand.hbm [shape: f32[2,1,128], index: 9, kind: input, shape index: {}]
  %s10 = inlined_call_operand.vmem [shape: bf16[2,128,512], index: 10, kind: input, shape index: {}]
  %s11 = inlined_call_operand.vmem [shape: f32[2,1,512], index: 11, kind: input, shape index: {}]
  %s12 = inlined_call_operand.vmem [shape: bf16[2,512,128], index: 12, kind: input, shape index: {}]
  %s13 = inlined_call_operand.hbm [shape: f32[2,1,128], index: 13, kind: input, shape index: {}]
  %s14 = inlined_call_operand.vmem [shape: f32[1,128], index: 14, kind: input, shape index: {}]
  %s15 = inlined_call_operand.hbm [shape: f32[1,128], index: 15, kind: input, shape index: {}]
  %s16 = inlined_call_operand.hbm [shape: bf16[128,128], index: 16, kind: input, shape index: {}]
  %s17 = inlined_call_operand.hbm [shape: f32[1,128], index: 17, kind: input, shape index: {}]
  %s18 = inlined_call_operand.hbm [shape: bf16[128,128], index: 18, kind: input, shape index: {}]
  %s19 = inlined_call_operand.hbm [shape: f32[1,128], index: 19, kind: input, shape index: {}]
  %s20 = inlined_call_operand.hbm [shape: f32[2,1,128], index: 20, kind: output, shape index: {}]
  %s21 = sld [smem:[#allocation0]]
  $region149: #{vit_model_xray_forward.1} parent=0
    _
  %s23 = ssub.s32 1, %s21
  %s24 = scalar_select 0, %s23, %s21
  $region1: #{vit_model_xray_forward.1} parent=0
    #allocation2 [shape = 'u8[196608]{0}', space=vmem, size = 0x30000, scoped, tag = 'input window, operand 2, single buffered']
    #allocation3 [shape = 's32[2]{0}', space=sflag, size = 0x8, scoped, tag = 'scoped memory for vit_model_xray_forward.1']
    #allocation4 [shape = 's32[2]{0}', space=sflag, size = 0x8, scoped, tag = 'scoped memory for vit_model_xray_forward.1']
    #allocation5 [shape = 'u8[196608]{0}', space=vmem, size = 0x30000, scoped, tag = 'input window, operand 5, single buffered']
    #allocation6 [shape = 's32[1]{0}', space=sflag, size = 0x4, scoped, tag = 'scoped memory for vit_model_xray_forward.1']
    #allocation7 [shape = 'u8[1024]{0}', space=vmem, size = 0x400, scoped, tag = 'input window, operand 9, single buffered']
    #allocation8 [shape = 'u8[1024]{0}', space=vmem, size = 0x400, scoped, tag = 'input window, operand 13, single buffered']
    #allocation9 [shape = 's32[1]{0}', space=sflag, size = 0x4, scoped, tag = 'scoped memory for vit_model_xray_forward.1']
    #allocation10 [shape = 'u8[512]{0}', space=vmem, size = 0x400, scoped, tag = 'input window, operand 15, single buffered']
    #allocation11 [shape = 'u8[32768]{0}', space=vmem, size = 0x8000, scoped, tag = 'input window, operand 16, single buffered']
    #allocation12 [shape = 's32[1]{0}', space=sflag, size = 0x4, scoped, tag = 'scoped memory for vit_model_xray_forward.1']
    #allocation13 [shape = 'u8[512]{0}', space=vmem, size = 0x400, scoped, tag = 'input window, operand 17, single buffered']
    #allocation14 [shape = 'u8[32768]{0}', space=vmem, size = 0x8000, scoped, tag = 'input window, operand 18, single buffered']
    #allocation15 [shape = 's32[1]{0}', space=sflag, size = 0x4, scoped, tag = 'scoped memory for vit_model_xray_forward.1']
    #allocation16 [shape = 'u8[512]{0}', space=vmem, size = 0x400, scoped, tag = 'input window, operand 19, single buffered']
    #allocation17 [shape = 'u8[1024]{0}', space=vmem, size = 0x400, scoped, tag = 'output window, operand 0']
    %25 = vsyncpa [#allocation3], 0
    %26 = vsyncpa [#allocation6], 0
    %27 = vsyncpa [#allocation9], 0
    %28 = vsyncpa [#allocation12], 0
    %29 = vsyncpa [#allocation15], 0
    %30 = vsyncpa [#allocation4], 0
    %s31 = scalar_lea.sflag [#allocation4], 1
    %32 = vsyncpa %s31, 0
    loop: start=0, step=1, limit=4
    $region2: #{vit_model_xray_forward.1} parent=1 // loop_pre_header
      _
    $region3: #{vit_model_xray_forward.1} parent=1 // loop_header
      %s34 = sphi 0, %s38
      %p35 = scmp.ge.s32.totalorder %s34, 4
      %s44 = sphi 0, %s46
      %s47 = sphi 0, %s44
      %s48 = sphi 0, %s47
      %s64 = sphi 0, %s48
      %s68 = sphi 0, %s68
      %s70 = sphi 0, %s68
      %s71 = sphi 0, %s70
      %s85 = sphi 0, %s71
      %s89 = sphi 0, %s89
      %s91 = sphi 0, %s89
      %s92 = sphi 0, %s91
      %s106 = sphi 0, %s92
      %s110 = sphi 0, %s110
      %s112 = sphi 0, %s110
      %s113 = sphi 0, %s112
      %s127 = sphi 0, %s113
      %s131 = sphi 0, %s131
      %s133 = sphi 0, %s131
      %s134 = sphi 0, %s133
      %s148 = sphi 0, %s134
      %s152 = sphi 0, %s152
      %s154 = sphi 0, %s152
      %s155 = sphi 0, %s154
      %s169 = sphi 0, %s155
      %s173 = sphi 0, %s173
      %s175 = sphi 0, %s173
      %s176 = sphi 0, %s175
      %s190 = sphi 0, %s176
      %s194 = sphi 0, %s194
      %s196 = sphi 0, %s194
      %s197 = sphi 0, %s196
      %s211 = sphi 0, %s197
      %s215 = sphi 0, %s215
      %s217 = sphi 0, %s215
      %s218 = sphi 0, %s217
      %s232 = sphi 0, %s218
      %s236 = sphi 0, %s236
      %s238 = sphi 0, %s236
      %s239 = sphi 0, %s238
      %s253 = sphi 0, %s239
      %s257 = sphi 0, %s257
      %s259 = sphi 0, %s257
      %s260 = sphi 0, %s259
      %s274 = sphi 0, %s260
      %s278 = sphi 0, %s278
      %s280 = sphi 0, %s278
      %s281 = sphi 0, %s280
      %s295 = sphi 0, %s281
      %s299 = sphi 0, %s299
      %s301 = sphi 0, %s299
      %s302 = sphi 0, %s301
      %s316 = sphi 0, %s302
      %s320 = sphi 0, %s320
      %s322 = sphi 0, %s320
      %s323 = sphi 0, %s322
      %s337 = sphi 0, %s323
      %s341 = sphi 0, %s341
      %s343 = sphi 0, %s341
      %s344 = sphi 0, %s343
      %s358 = sphi 0, %s344
      %s362 = sphi 0, %s362
      %s364 = sphi 0, %s362
      %s365 = sphi 0, %s364
      %s379 = sphi 0, %s365
      %s383 = sphi 0, %s383
      %s385 = sphi 0, %s383
      %s386 = sphi 0, %s385
      %s400 = sphi 0, %s386
      %s404 = sphi 0, %s404
      %s406 = sphi 0, %s404
      %s407 = sphi 0, %s406
      %s421 = sphi 0, %s407
      %s425 = sphi 0, %s425
      %s427 = sphi 0, %s425
      %s428 = sphi 0, %s427
      %s442 = sphi 0, %s428
      %s446 = sphi 0, %s446
      %s448 = sphi 0, %s446
      %s449 = sphi 0, %s448
      %s463 = sphi 0, %s449
      %s469 = sphi 0, %s471
      %s472 = sphi 0, %s469
      %s473 = sphi 0, %s472
      %s489 = sphi 0, %s473
    $region4: #{vit_model_xray_forward.1} parent=1 // loop_header_branch
      %37 = sbr.rel (%p35) target = $region8
    $region5: #{vit_model_xray_forward.1} parent=1 // loop_body
      %s39 = ssub.s32 %s34, 1
      %s40 = ssub.s32 %s34, 2
      %s41 = sadd.s32 %s34, 1
      %s42 = ssub.s32 %s34, %s41
      %p43 = scmp.eq.s32.totalorder %s42, 0
      %s45 = sadd.s32 %s44, 1
      %s46 = scalar_select %p43, %s44, %s45
      %p49 = pneg %p43
      %p50 = scmp.eq.s32.totalorder %s34, 1
      %p51 = por %p49, %p50
      %p52 = scmp.ne.s32.totalorder %s44, %s47
      %p53 = scmp.eq.s32.totalorder %s34, 0
      %p54 = por %p52, %p53
      %p55 = scmp.ne.s32.totalorder %s44, %s47
      %p56 = scmp.eq.s32.totalorder %s39, 1
      %p57 = por %p55, %p56
      %p58 = scmp.ne.s32.totalorder %s47, %s48
      %p59 = scmp.eq.s32.totalorder %s39, 0
      %p60 = por %p58, %p59
      %p61 = scmp.ne.s32.totalorder %s47, %s48
      %p62 = scmp.eq.s32.totalorder %s40, 1
      %p63 = por %p61, %p62
      %p65 = scmp.ne.s32.totalorder %s48, %s64
      %p66 = scmp.eq.s32.totalorder %s40, 0
      %p67 = por %p65, %p66
      %s69 = sadd.s32 %s68, 1
      %p72 = scmp.eq.s32.totalorder %s34, 1
      %p73 = scmp.ne.s32.totalorder %s68, %s70
      %p74 = scmp.eq.s32.totalorder %s34, 0
      %p75 = por %p73, %p74
      %p76 = scmp.ne.s32.totalorder %s68, %s70
      %p77 = scmp.eq.s32.totalorder %s39, 1
      %p78 = por %p76, %p77
      %p79 = scmp.ne.s32.totalorder %s70, %s71
      %p80 = scmp.eq.s32.totalorder %s39, 0
      %p81 = por %p79, %p80
      %p82 = scmp.ne.s32.totalorder %s70, %s71
      %p83 = scmp.eq.s32.totalorder %s40, 1
      %p84 = por %p82, %p83
      %p86 = scmp.ne.s32.totalorder %s71, %s85
      %p87 = scmp.eq.s32.totalorder %s40, 0
      %p88 = por %p86, %p87
      %s90 = sadd.s32 %s89, 1
      %p93 = scmp.eq.s32.totalorder %s34, 1
      %p94 = scmp.ne.s32.totalorder %s89, %s91
      %p95 = scmp.eq.s32.totalorder %s34, 0
      %p96 = por %p94, %p95
      %p97 = scmp.ne.s32.totalorder %s89, %s91
      %p98 = scmp.eq.s32.totalorder %s39, 1
      %p99 = por %p97, %p98
      %p100 = scmp.ne.s32.totalorder %s91, %s92
      %p101 = scmp.eq.s32.totalorder %s39, 0
      %p102 = por %p100, %p101
      %p103 = scmp.ne.s32.totalorder %s91, %s92
      %p104 = scmp.eq.s32.totalorder %s40, 1
      %p105 = por %p103, %p104
      %p107 = scmp.ne.s32.totalorder %s92, %s106
      %p108 = scmp.eq.s32.totalorder %s40, 0
      %p109 = por %p107, %p108
      %s111 = sadd.s32 %s110, 1
      %p114 = scmp.eq.s32.totalorder %s34, 1
      %p115 = scmp.ne.s32.totalorder %s110, %s112
      %p116 = scmp.eq.s32.totalorder %s34, 0
      %p117 = por %p115, %p116
      %p118 = scmp.ne.s32.totalorder %s110, %s112
      %p119 = scmp.eq.s32.totalorder %s39, 1
      %p120 = por %p118, %p119
      %p121 = scmp.ne.s32.totalorder %s112, %s113
      %p122 = scmp.eq.s32.totalorder %s39, 0
      %p123 = por %p121, %p122
      %p124 = scmp.ne.s32.totalorder %s112, %s113
      %p125 = scmp.eq.s32.totalorder %s40, 1
      %p126 = por %p124, %p125
      %p128 = scmp.ne.s32.totalorder %s113, %s127
      %p129 = scmp.eq.s32.totalorder %s40, 0
      %p130 = por %p128, %p129
      %s132 = sadd.s32 %s131, 1
      %p135 = scmp.eq.s32.totalorder %s34, 1
      %p136 = scmp.ne.s32.totalorder %s131, %s133
      %p137 = scmp.eq.s32.totalorder %s34, 0
      %p138 = por %p136, %p137
      %p139 = scmp.ne.s32.totalorder %s131, %s133
      %p140 = scmp.eq.s32.totalorder %s39, 1
      %p141 = por %p139, %p140
      %p142 = scmp.ne.s32.totalorder %s133, %s134
      %p143 = scmp.eq.s32.totalorder %s39, 0
      %p144 = por %p142, %p143
      %p145 = scmp.ne.s32.totalorder %s133, %s134
      %p146 = scmp.eq.s32.totalorder %s40, 1
      %p147 = por %p145, %p146
      %p149 = scmp.ne.s32.totalorder %s134, %s148
      %p150 = scmp.eq.s32.totalorder %s40, 0
      %p151 = por %p149, %p150
      %s153 = sadd.s32 %s152, 1
      %p156 = scmp.eq.s32.totalorder %s34, 1
      %p157 = scmp.ne.s32.totalorder %s152, %s154
      %p158 = scmp.eq.s32.totalorder %s34, 0
      %p159 = por %p157, %p158
      %p160 = scmp.ne.s32.totalorder %s152, %s154
      %p161 = scmp.eq.s32.totalorder %s39, 1
      %p162 = por %p160, %p161
      %p163 = scmp.ne.s32.totalorder %s154, %s155
      %p164 = scmp.eq.s32.totalorder %s39, 0
      %p165 = por %p163, %p164
      %p166 = scmp.ne.s32.totalorder %s154, %s155
      %p167 = scmp.eq.s32.totalorder %s40, 1
      %p168 = por %p166, %p167
      %p170 = scmp.ne.s32.totalorder %s155, %s169
      %p171 = scmp.eq.s32.totalorder %s40, 0
      %p172 = por %p170, %p171
      %s174 = sadd.s32 %s173, 1
      %p177 = scmp.eq.s32.totalorder %s34, 1
      %p178 = scmp.ne.s32.totalorder %s173, %s175
      %p179 = scmp.eq.s32.totalorder %s34, 0
      %p180 = por %p178, %p179
      %p181 = scmp.ne.s32.totalorder %s173, %s175
      %p182 = scmp.eq.s32.totalorder %s39, 1
      %p183 = por %p181, %p182
      %p184 = scmp.ne.s32.totalorder %s175, %s176
      %p185 = scmp.eq.s32.totalorder %s39, 0
      %p186 = por %p184, %p185
      %p187 = scmp.ne.s32.totalorder %s175, %s176
      %p188 = scmp.eq.s32.totalorder %s40, 1
      %p189 = por %p187, %p188
      %p191 = scmp.ne.s32.totalorder %s176, %s190
      %p192 = scmp.eq.s32.totalorder %s40, 0
      %p193 = por %p191, %p192
      %s195 = sadd.s32 %s194, 1
      %p198 = scmp.eq.s32.totalorder %s34, 1
      %p199 = scmp.ne.s32.totalorder %s194, %s196
      %p200 = scmp.eq.s32.totalorder %s34, 0
      %p201 = por %p199, %p200
      %p202 = scmp.ne.s32.totalorder %s194, %s196
      %p203 = scmp.eq.s32.totalorder %s39, 1
      %p204 = por %p202, %p203
      %p205 = scmp.ne.s32.totalorder %s196, %s197
      %p206 = scmp.eq.s32.totalorder %s39, 0
      %p207 = por %p205, %p206
      %p208 = scmp.ne.s32.totalorder %s196, %s197
      %p209 = scmp.eq.s32.totalorder %s40, 1
      %p210 = por %p208, %p209
      %p212 = scmp.ne.s32.totalorder %s197, %s211
      %p213 = scmp.eq.s32.totalorder %s40, 0
      %p214 = por %p212, %p213
      %s216 = sadd.s32 %s215, 1
      %p219 = scmp.eq.s32.totalorder %s34, 1
      %p220 = scmp.ne.s32.totalorder %s215, %s217
      %p221 = scmp.eq.s32.totalorder %s34, 0
      %p222 = por %p220, %p221
      %p223 = scmp.ne.s32.totalorder %s215, %s217
      %p224 = scmp.eq.s32.totalorder %s39, 1
      %p225 = por %p223, %p224
      %p226 = scmp.ne.s32.totalorder %s217, %s218
      %p227 = scmp.eq.s32.totalorder %s39, 0
      %p228 = por %p226, %p227
      %p229 = scmp.ne.s32.totalorder %s217, %s218
      %p230 = scmp.eq.s32.totalorder %s40, 1
      %p231 = por %p229, %p230
      %p233 = scmp.ne.s32.totalorder %s218, %s232
      %p234 = scmp.eq.s32.totalorder %s40, 0
      %p235 = por %p233, %p234
      %s237 = sadd.s32 %s236, 1
      %p240 = scmp.eq.s32.totalorder %s34, 1
      %p241 = scmp.ne.s32.totalorder %s236, %s238
      %p242 = scmp.eq.s32.totalorder %s34, 0
      %p243 = por %p241, %p242
      %p244 = scmp.ne.s32.totalorder %s236, %s238
      %p245 = scmp.eq.s32.totalorder %s39, 1
      %p246 = por %p244, %p245
      %p247 = scmp.ne.s32.totalorder %s238, %s239
      %p248 = scmp.eq.s32.totalorder %s39, 0
      %p249 = por %p247, %p248
      %p250 = scmp.ne.s32.totalorder %s238, %s239
      %p251 = scmp.eq.s32.totalorder %s40, 1
      %p252 = por %p250, %p251
      %p254 = scmp.ne.s32.totalorder %s239, %s253
      %p255 = scmp.eq.s32.totalorder %s40, 0
      %p256 = por %p254, %p255
      %s258 = sadd.s32 %s257, 1
      %p261 = scmp.eq.s32.totalorder %s34, 1
      %p262 = scmp.ne.s32.totalorder %s257, %s259
      %p263 = scmp.eq.s32.totalorder %s34, 0
      %p264 = por %p262, %p263
      %p265 = scmp.ne.s32.totalorder %s257, %s259
      %p266 = scmp.eq.s32.totalorder %s39, 1
      %p267 = por %p265, %p266
      %p268 = scmp.ne.s32.totalorder %s259, %s260
      %p269 = scmp.eq.s32.totalorder %s39, 0
      %p270 = por %p268, %p269
      %p271 = scmp.ne.s32.totalorder %s259, %s260
      %p272 = scmp.eq.s32.totalorder %s40, 1
      %p273 = por %p271, %p272
      %p275 = scmp.ne.s32.totalorder %s260, %s274
      %p276 = scmp.eq.s32.totalorder %s40, 0
      %p277 = por %p275, %p276
      %s279 = sadd.s32 %s278, 1
      %p282 = scmp.eq.s32.totalorder %s34, 1
      %p283 = scmp.ne.s32.totalorder %s278, %s280
      %p284 = scmp.eq.s32.totalorder %s34, 0
      %p285 = por %p283, %p284
      %p286 = scmp.ne.s32.totalorder %s278, %s280
      %p287 = scmp.eq.s32.totalorder %s39, 1
      %p288 = por %p286, %p287
      %p289 = scmp.ne.s32.totalorder %s280, %s281
      %p290 = scmp.eq.s32.totalorder %s39, 0
      %p291 = por %p289, %p290
      %p292 = scmp.ne.s32.totalorder %s280, %s281
      %p293 = scmp.eq.s32.totalorder %s40, 1
      %p294 = por %p292, %p293
      %p296 = scmp.ne.s32.totalorder %s281, %s295
      %p297 = scmp.eq.s32.totalorder %s40, 0
      %p298 = por %p296, %p297
      %s300 = sadd.s32 %s299, 1
      %p303 = scmp.eq.s32.totalorder %s34, 1
      %p304 = scmp.ne.s32.totalorder %s299, %s301
      %p305 = scmp.eq.s32.totalorder %s34, 0
      %p306 = por %p304, %p305
      %p307 = scmp.ne.s32.totalorder %s299, %s301
      %p308 = scmp.eq.s32.totalorder %s39, 1
      %p309 = por %p307, %p308
      %p310 = scmp.ne.s32.totalorder %s301, %s302
      %p311 = scmp.eq.s32.totalorder %s39, 0
      %p312 = por %p310, %p311
      %p313 = scmp.ne.s32.totalorder %s301, %s302
      %p314 = scmp.eq.s32.totalorder %s40, 1
      %p315 = por %p313, %p314
      %p317 = scmp.ne.s32.totalorder %s302, %s316
      %p318 = scmp.eq.s32.totalorder %s40, 0
      %p319 = por %p317, %p318
      %s321 = sadd.s32 %s320, 1
      %p324 = scmp.eq.s32.totalorder %s34, 1
      %p325 = scmp.ne.s32.totalorder %s320, %s322
      %p326 = scmp.eq.s32.totalorder %s34, 0
      %p327 = por %p325, %p326
      %p328 = scmp.ne.s32.totalorder %s320, %s322
      %p329 = scmp.eq.s32.totalorder %s39, 1
      %p330 = por %p328, %p329
      %p331 = scmp.ne.s32.totalorder %s322, %s323
      %p332 = scmp.eq.s32.totalorder %s39, 0
      %p333 = por %p331, %p332
      %p334 = scmp.ne.s32.totalorder %s322, %s323
      %p335 = scmp.eq.s32.totalorder %s40, 1
      %p336 = por %p334, %p335
      %p338 = scmp.ne.s32.totalorder %s323, %s337
      %p339 = scmp.eq.s32.totalorder %s40, 0
      %p340 = por %p338, %p339
      %s342 = sadd.s32 %s341, 1
      %p345 = scmp.eq.s32.totalorder %s34, 1
      %p346 = scmp.ne.s32.totalorder %s341, %s343
      %p347 = scmp.eq.s32.totalorder %s34, 0
      %p348 = por %p346, %p347
      %p349 = scmp.ne.s32.totalorder %s341, %s343
      %p350 = scmp.eq.s32.totalorder %s39, 1
      %p351 = por %p349, %p350
      %p352 = scmp.ne.s32.totalorder %s343, %s344
      %p353 = scmp.eq.s32.totalorder %s39, 0
      %p354 = por %p352, %p353
      %p355 = scmp.ne.s32.totalorder %s343, %s344
      %p356 = scmp.eq.s32.totalorder %s40, 1
      %p357 = por %p355, %p356
      %p359 = scmp.ne.s32.totalorder %s344, %s358
      %p360 = scmp.eq.s32.totalorder %s40, 0
      %p361 = por %p359, %p360
      %s363 = sadd.s32 %s362, 1
      %p366 = scmp.eq.s32.totalorder %s34, 1
      %p367 = scmp.ne.s32.totalorder %s362, %s364
      %p368 = scmp.eq.s32.totalorder %s34, 0
      %p369 = por %p367, %p368
      %p370 = scmp.ne.s32.totalorder %s362, %s364
      %p371 = scmp.eq.s32.totalorder %s39, 1
      %p372 = por %p370, %p371
      %p373 = scmp.ne.s32.totalorder %s364, %s365
      %p374 = scmp.eq.s32.totalorder %s39, 0
      %p375 = por %p373, %p374
      %p376 = scmp.ne.s32.totalorder %s364, %s365
      %p377 = scmp.eq.s32.totalorder %s40, 1
      %p378 = por %p376, %p377
      %p380 = scmp.ne.s32.totalorder %s365, %s379
      %p381 = scmp.eq.s32.totalorder %s40, 0
      %p382 = por %p380, %p381
      %s384 = sadd.s32 %s383, 1
      %p387 = scmp.eq.s32.totalorder %s34, 1
      %p388 = scmp.ne.s32.totalorder %s383, %s385
      %p389 = scmp.eq.s32.totalorder %s34, 0
      %p390 = por %p388, %p389
      %p391 = scmp.ne.s32.totalorder %s383, %s385
      %p392 = scmp.eq.s32.totalorder %s39, 1
      %p393 = por %p391, %p392
      %p394 = scmp.ne.s32.totalorder %s385, %s386
      %p395 = scmp.eq.s32.totalorder %s39, 0
      %p396 = por %p394, %p395
      %p397 = scmp.ne.s32.totalorder %s385, %s386
      %p398 = scmp.eq.s32.totalorder %s40, 1
      %p399 = por %p397, %p398
      %p401 = scmp.ne.s32.totalorder %s386, %s400
      %p402 = scmp.eq.s32.totalorder %s40, 0
      %p403 = por %p401, %p402
      %s405 = sadd.s32 %s404, 1
      %p408 = scmp.eq.s32.totalorder %s34, 1
      %p409 = scmp.ne.s32.totalorder %s404, %s406
      %p410 = scmp.eq.s32.totalorder %s34, 0
      %p411 = por %p409, %p410
      %p412 = scmp.ne.s32.totalorder %s404, %s406
      %p413 = scmp.eq.s32.totalorder %s39, 1
      %p414 = por %p412, %p413
      %p415 = scmp.ne.s32.totalorder %s406, %s407
      %p416 = scmp.eq.s32.totalorder %s39, 0
      %p417 = por %p415, %p416
      %p418 = scmp.ne.s32.totalorder %s406, %s407
      %p419 = scmp.eq.s32.totalorder %s40, 1
      %p420 = por %p418, %p419
      %p422 = scmp.ne.s32.totalorder %s407, %s421
      %p423 = scmp.eq.s32.totalorder %s40, 0
      %p424 = por %p422, %p423
      %s426 = sadd.s32 %s425, 1
      %p429 = scmp.eq.s32.totalorder %s34, 1
      %p430 = scmp.ne.s32.totalorder %s425, %s427
      %p431 = scmp.eq.s32.totalorder %s34, 0
      %p432 = por %p430, %p431
      %p433 = scmp.ne.s32.totalorder %s425, %s427
      %p434 = scmp.eq.s32.totalorder %s39, 1
      %p435 = por %p433, %p434
      %p436 = scmp.ne.s32.totalorder %s427, %s428
      %p437 = scmp.eq.s32.totalorder %s39, 0
      %p438 = por %p436, %p437
      %p439 = scmp.ne.s32.totalorder %s427, %s428
      %p440 = scmp.eq.s32.totalorder %s40, 1
      %p441 = por %p439, %p440
      %p443 = scmp.ne.s32.totalorder %s428, %s442
      %p444 = scmp.eq.s32.totalorder %s40, 0
      %p445 = por %p443, %p444
      %s447 = sadd.s32 %s446, 1
      %p450 = scmp.eq.s32.totalorder %s34, 1
      %p451 = scmp.ne.s32.totalorder %s446, %s448
      %p452 = scmp.eq.s32.totalorder %s34, 0
      %p453 = por %p451, %p452
      %p454 = scmp.ne.s32.totalorder %s446, %s448
      %p455 = scmp.eq.s32.totalorder %s39, 1
      %p456 = por %p454, %p455
      %p457 = scmp.ne.s32.totalorder %s448, %s449
      %p458 = scmp.eq.s32.totalorder %s39, 0
      %p459 = por %p457, %p458
      %p460 = scmp.ne.s32.totalorder %s448, %s449
      %p461 = scmp.eq.s32.totalorder %s40, 1
      %p462 = por %p460, %p461
      %p464 = scmp.ne.s32.totalorder %s449, %s463
      %p465 = scmp.eq.s32.totalorder %s40, 0
      %p466 = por %p464, %p465
      %s467 = ssub.s32 %s34, %s41
      %p468 = scmp.eq.s32.totalorder %s467, 0
      %s470 = sadd.s32 %s469, 1
      %s471 = scalar_select %p468, %s469, %s470
      %p474 = pneg %p468
      %p475 = scmp.eq.s32.totalorder %s34, 1
      %p476 = por %p474, %p475
      %p477 = scmp.ne.s32.totalorder %s469, %s472
      %p478 = scmp.eq.s32.totalorder %s34, 0
      %p479 = por %p477, %p478
      %p480 = scmp.ne.s32.totalorder %s469, %s472
      %p481 = scmp.eq.s32.totalorder %s39, 1
      %p482 = por %p480, %p481
      %p483 = scmp.ne.s32.totalorder %s472, %s473
      %p484 = scmp.eq.s32.totalorder %s39, 0
      %p485 = por %p483, %p484
      %p486 = scmp.ne.s32.totalorder %s472, %s473
      %p487 = scmp.eq.s32.totalorder %s40, 1
      %p488 = por %p486, %p487
      %p490 = scmp.ne.s32.totalorder %s473, %s489
      %p491 = scmp.eq.s32.totalorder %s40, 0
      %p492 = por %p490, %p491
      %p493 = scmp.le.s32.totalorder 1, %s34
      %p494 = scmp.lt.s32.totalorder %s34, 3
      %p495 = pnand %p493, %p494
      %p496 = pneg %p495
      // Predicated region
      $region9: #{vit_model_xray_forward.1} parent=5 // pred_check
        _
      $region10: #{vit_model_xray_forward.1} parent=5 // pred_check_branch
        %498 = sbr.rel (%p495) target = $region12
      $region11: #{vit_model_xray_forward.1} parent=5 // pred_region
        %s499 = ssub.s32 %s34, 1
        // Predicated region
        $region13: #{vit_model_xray_forward.1} parent=11 // pred_check
          %p500 = pneg %p81
        $region14: #{vit_model_xray_forward.1} parent=11 // pred_check_branch
          %502 = sbr.rel (%p500) target = $region16
        $region15: #{vit_model_xray_forward.1} parent=11 // pred_region
          _
        $region16: #{vit_model_xray_forward.1} parent=11 // pred_fallthru
          _
        // Predicated region
        $region17: #{vit_model_xray_forward.1} parent=11 // pred_check
          %p503 = pneg %p102
        $region18: #{vit_model_xray_forward.1} parent=11 // pred_check_branch
          %505 = sbr.rel (%p503) target = $region20
        $region19: #{vit_model_xray_forward.1} parent=11 // pred_region
          %507 = vsyncadd [#allocation3], 0
          %s508 = sshll.u32 %s2, 4
          %s509 = int_to_ptr.hbm [resolvable:$true] %s508
          %s510 = sshll.u32 [#allocation2], 4
          %s511 = int_to_ptr.vmem [resolvable:$true] %s510
          %516 = dma.hbm_to_vmem [thread:$0]  %s509, 6144, %s511, [#allocation3], 64, 64, 4
        $region20: #{vit_model_xray_forward.1} parent=11 // pred_fallthru
          _
        // Predicated region
        $region21: #{vit_model_xray_forward.1} parent=11 // pred_check
          %p517 = pneg %p123
        $region22: #{vit_model_xray_forward.1} parent=11 // pred_check_branch
          %519 = sbr.rel (%p517) target = $region24
        $region23: #{vit_model_xray_forward.1} parent=11 // pred_region
          _
        $region24: #{vit_model_xray_forward.1} parent=11 // pred_fallthru
          _
        // Predicated region
        $region25: #{vit_model_xray_forward.1} parent=11 // pred_check
          %p520 = pneg %p144
        $region26: #{vit_model_xray_forward.1} parent=11 // pred_check_branch
          %522 = sbr.rel (%p520) target = $region28
        $region27: #{vit_model_xray_forward.1} parent=11 // pred_region
          _
        $region28: #{vit_model_xray_forward.1} parent=11 // pred_fallthru
          _
        // Predicated region
        $region29: #{vit_model_xray_forward.1} parent=11 // pred_check
          %p523 = pneg %p165
        $region30: #{vit_model_xray_forward.1} parent=11 // pred_check_branch
          %525 = sbr.rel (%p523) target = $region32
        $region31: #{vit_model_xray_forward.1} parent=11 // pred_region
          %527 = vsyncadd [#allocation6], 0
          %s528 = sshll.u32 %s5, 4
          %s529 = int_to_ptr.hbm [resolvable:$true] %s528
          %s530 = sshll.u32 [#allocation5], 4
          %s531 = int_to_ptr.vmem [resolvable:$true] %s530
          %536 = dma.hbm_to_vmem [thread:$0]  %s529, 6144, %s531, [#allocation6], 192, 192, 12
        $region32: #{vit_model_xray_forward.1} parent=11 // pred_fallthru
          _
        // Predicated region
        $region33: #{vit_model_xray_forward.1} parent=11 // pred_check
          %p537 = pneg %p186
        $region34: #{vit_model_xray_forward.1} parent=11 // pred_check_branch
          %539 = sbr.rel (%p537) target = $region36
        $region35: #{vit_model_xray_forward.1} parent=11 // pred_region
          _
        $region36: #{vit_model_xray_forward.1} parent=11 // pred_fallthru
          _
        // Predicated region
        $region37: #{vit_model_xray_forward.1} parent=11 // pred_check
          %p540 = pneg %p207
        $region38: #{vit_model_xray_forward.1} parent=11 // pred_check_branch
          %542 = sbr.rel (%p540) target = $region40
        $region39: #{vit_model_xray_forward.1} parent=11 // pred_region
          _
        $region40: #{vit_model_xray_forward.1} parent=11 // pred_fallthru
          _
        // Predicated region
        $region41: #{vit_model_xray_forward.1} parent=11 // pred_check
          %p543 = pneg %p228
        $region42: #{vit_model_xray_forward.1} parent=11 // pred_check_branch
          %545 = sbr.rel (%p543) target = $region44
        $region43: #{vit_model_xray_forward.1} parent=11 // pred_region
          _
        $region44: #{vit_model_xray_forward.1} parent=11 // pred_fallthru
          _
        // Predicated region
        $region45: #{vit_model_xray_forward.1} parent=11 // pred_check
          %p546 = pneg %p249
        $region46: #{vit_model_xray_forward.1} parent=11 // pred_check_branch
          %548 = sbr.rel (%p546) target = $region48
        $region47: #{vit_model_xray_forward.1} parent=11 // pred_region
          %550 = vsyncadd [#allocation6], 0
          %s551 = sshll.u32 %s9, 4
          %s552 = int_to_ptr.hbm [resolvable:$true] %s551
          %s553 = sshll.u32 [#allocation7], 4
          %s554 = int_to_ptr.vmem [resolvable:$true] %s553
          %559 = dma.hbm_to_vmem [thread:$0]  %s552, 32, %s554, [#allocation6], 16, 16, 1
        $region48: #{vit_model_xray_forward.1} parent=11 // pred_fallthru
          _
        // Predicated region
        $region49: #{vit_model_xray_forward.1} parent=11 // pred_check
          %p560 = pneg %p270
        $region50: #{vit_model_xray_forward.1} parent=11 // pred_check_branch
          %562 = sbr.rel (%p560) target = $region52
        $region51: #{vit_model_xray_forward.1} parent=11 // pred_region
          _
        $region52: #{vit_model_xray_forward.1} parent=11 // pred_fallthru
          _
        // Predicated region
        $region53: #{vit_model_xray_forward.1} parent=11 // pred_check
          %p563 = pneg %p291
        $region54: #{vit_model_xray_forward.1} parent=11 // pred_check_branch
          %565 = sbr.rel (%p563) target = $region56
        $region55: #{vit_model_xray_forward.1} parent=11 // pred_region
          _
        $region56: #{vit_model_xray_forward.1} parent=11 // pred_fallthru
          _
        // Predicated region
        $region57: #{vit_model_xray_forward.1} parent=11 // pred_check
          %p566 = pneg %p312
        $region58: #{vit_model_xray_forward.1} parent=11 // pred_check_branch
          %568 = sbr.rel (%p566) target = $region60
        $region59: #{vit_model_xray_forward.1} parent=11 // pred_region
          _
        $region60: #{vit_model_xray_forward.1} parent=11 // pred_fallthru
          _
        // Predicated region
        $region61: #{vit_model_xray_forward.1} parent=11 // pred_check
          %p569 = pneg %p333
        $region62: #{vit_model_xray_forward.1} parent=11 // pred_check_branch
          %571 = sbr.rel (%p569) target = $region64
        $region63: #{vit_model_xray_forward.1} parent=11 // pred_region
          %573 = vsyncadd [#allocation9], 0
          %s574 = sshll.u32 %s13, 4
          %s575 = int_to_ptr.hbm [resolvable:$true] %s574
          %s576 = sshll.u32 [#allocation8], 4
          %s577 = int_to_ptr.vmem [resolvable:$true] %s576
          %582 = dma.hbm_to_vmem [thread:$0]  %s575, 32, %s577, [#allocation9], 16, 16, 1
        $region64: #{vit_model_xray_forward.1} parent=11 // pred_fallthru
          _
        // Predicated region
        $region65: #{vit_model_xray_forward.1} parent=11 // pred_check
          %p583 = pneg %p354
        $region66: #{vit_model_xray_forward.1} parent=11 // pred_check_branch
          %585 = sbr.rel (%p583) target = $region68
        $region67: #{vit_model_xray_forward.1} parent=11 // pred_region
          _
        $region68: #{vit_model_xray_forward.1} parent=11 // pred_fallthru
          _
        // Predicated region
        $region69: #{vit_model_xray_forward.1} parent=11 // pred_check
          %p586 = pneg %p375
        $region70: #{vit_model_xray_forward.1} parent=11 // pred_check_branch
          %588 = sbr.rel (%p586) target = $region72
        $region71: #{vit_model_xray_forward.1} parent=11 // pred_region
          %590 = vsyncadd [#allocation9], 0
          %s592 = sshll.u32 %s15, 4
          %s593 = int_to_ptr.hbm [resolvable:$true] %s592
          %s594 = sshll.u32 [#allocation10], 4
          %s595 = int_to_ptr.vmem [resolvable:$true] %s594
          %597 = dma.hbm_to_vmem [thread:$0]  %s593, 16, %s595, [#allocation9]
        $region72: #{vit_model_xray_forward.1} parent=11 // pred_fallthru
          _
        // Predicated region
        $region73: #{vit_model_xray_forward.1} parent=11 // pred_check
          %p598 = pneg %p396
        $region74: #{vit_model_xray_forward.1} parent=11 // pred_check_branch
          %600 = sbr.rel (%p598) target = $region76
        $region75: #{vit_model_xray_forward.1} parent=11 // pred_region
          %602 = vsyncadd [#allocation12], 0
          %s603 = sshll.u32 %s16, 4
          %s604 = int_to_ptr.hbm [resolvable:$true] %s603
          %s605 = sshll.u32 [#allocation11], 4
          %s606 = int_to_ptr.vmem [resolvable:$true] %s605
          %611 = dma.hbm_to_vmem [thread:$0]  %s604, 1024, %s606, [#allocation12], 64, 64, 4
        $region76: #{vit_model_xray_forward.1} parent=11 // pred_fallthru
          _
        // Predicated region
        $region77: #{vit_model_xray_forward.1} parent=11 // pred_check
          %p612 = pneg %p417
        $region78: #{vit_model_xray_forward.1} parent=11 // pred_check_branch
          %614 = sbr.rel (%p612) target = $region80
        $region79: #{vit_model_xray_forward.1} parent=11 // pred_region
          %616 = vsyncadd [#allocation12], 0
          %s618 = sshll.u32 %s17, 4
          %s619 = int_to_ptr.hbm [resolvable:$true] %s618
          %s620 = sshll.u32 [#allocation13], 4
          %s621 = int_to_ptr.vmem [resolvable:$true] %s620
          %623 = dma.hbm_to_vmem [thread:$0]  %s619, 16, %s621, [#allocation12]
        $region80: #{vit_model_xray_forward.1} parent=11 // pred_fallthru
          _
        // Predicated region
        $region81: #{vit_model_xray_forward.1} parent=11 // pred_check
          %p624 = pneg %p438
        $region82: #{vit_model_xray_forward.1} parent=11 // pred_check_branch
          %626 = sbr.rel (%p624) target = $region84
        $region83: #{vit_model_xray_forward.1} parent=11 // pred_region
          %628 = vsyncadd [#allocation15], 0
          %s629 = sshll.u32 %s18, 4
          %s630 = int_to_ptr.hbm [resolvable:$true] %s629
          %s631 = sshll.u32 [#allocation14], 4
          %s632 = int_to_ptr.vmem [resolvable:$true] %s631
          %637 = dma.hbm_to_vmem [thread:$0]  %s630, 1024, %s632, [#allocation15], 64, 64, 4
        $region84: #{vit_model_xray_forward.1} parent=11 // pred_fallthru
          _
        // Predicated region
        $region85: #{vit_model_xray_forward.1} parent=11 // pred_check
          %p638 = pneg %p459
        $region86: #{vit_model_xray_forward.1} parent=11 // pred_check_branch
          %640 = sbr.rel (%p638) target = $region88
        $region87: #{vit_model_xray_forward.1} parent=11 // pred_region
          %642 = vsyncadd [#allocation15], 0
          %s644 = sshll.u32 %s19, 4
          %s645 = int_to_ptr.hbm [resolvable:$true] %s644
          %s646 = sshll.u32 [#allocation16], 4
          %s647 = int_to_ptr.vmem [resolvable:$true] %s646
          %649 = dma.hbm_to_vmem [thread:$0]  %s645, 16, %s647, [#allocation15]
        $region88: #{vit_model_xray_forward.1} parent=11 // pred_fallthru
          _
      $region12: #{vit_model_xray_forward.1} parent=5 // pred_fallthru
        _
      %p650 = scmp.lt.s32.totalorder %s34, 2
      // Predicated region
      $region89: #{vit_model_xray_forward.1} parent=5 // pred_check
        %p651 = pneg %p650
      $region90: #{vit_model_xray_forward.1} parent=5 // pred_check_branch
        %653 = sbr.rel (%p651) target = $region92
      $region91: #{vit_model_xray_forward.1} parent=5 // pred_region
        // Predicated region
        $region93: #{vit_model_xray_forward.1} parent=91 // pred_check
          %p654 = pneg %p54
        $region94: #{vit_model_xray_forward.1} parent=91 // pred_check_branch
          %656 = sbr.rel (%p654) target = $region96
        $region95: #{vit_model_xray_forward.1} parent=91 // pred_region
          %p657 = scmp.lt.s32.totalorder %s34, 1
          %s658 = scalar_select %p657, %s34, 1
          %s659 = smul.addr %s658, 6
          %s660 = smul.addr %s659, 2
          %s661 = scalar_lea.vmem %s0, %s660
        $region96: #{vit_model_xray_forward.1} parent=91 // pred_fallthru
          _
      $region92: #{vit_model_xray_forward.1} parent=5 // pred_fallthru
        _
      %p662 = scmp.le.s32.totalorder 1, %s34
      %p663 = scmp.lt.s32.totalorder %s34, 3
      %p664 = pnand %p662, %p663
      %p665 = pneg %p664
      // Predicated region
      $region97: #{vit_model_xray_forward.1} parent=5 // pred_check
        _
      $region98: #{vit_model_xray_forward.1} parent=5 // pred_check_branch
        %667 = sbr.rel (%p664) target = $region100
      $region99: #{vit_model_xray_forward.1} parent=5 // pred_region
        %s668 = ssub.s32 %s34, 1
        // Predicated region
        $region101: #{vit_model_xray_forward.1} parent=99 // pred_check
          %p669 = pneg %p102
        $region102: #{vit_model_xray_forward.1} parent=99 // pred_check_branch
          %671 = sbr.rel (%p669) target = $region104
        $region103: #{vit_model_xray_forward.1} parent=99 // pred_region
          %673 = dma.done [#allocation3], 6144
        $region104: #{vit_model_xray_forward.1} parent=99 // pred_fallthru
          _
        // Predicated region
        $region105: #{vit_model_xray_forward.1} parent=99 // pred_check
          %p674 = pneg %p165
        $region106: #{vit_model_xray_forward.1} parent=99 // pred_check_branch
          %676 = sbr.rel (%p674) target = $region108
        $region107: #{vit_model_xray_forward.1} parent=99 // pred_region
          %678 = dma.done [#allocation6], 6144
        $region108: #{vit_model_xray_forward.1} parent=99 // pred_fallthru
          _
        // Predicated region
        $region109: #{vit_model_xray_forward.1} parent=99 // pred_check
          %p679 = pneg %p249
        $region110: #{vit_model_xray_forward.1} parent=99 // pred_check_branch
          %681 = sbr.rel (%p679) target = $region112
        $region111: #{vit_model_xray_forward.1} parent=99 // pred_region
          %683 = dma.done [#allocation6], 32
        $region112: #{vit_model_xray_forward.1} parent=99 // pred_fallthru
          _
        // Predicated region
        $region113: #{vit_model_xray_forward.1} parent=99 // pred_check
          %p684 = pneg %p333
        $region114: #{vit_model_xray_forward.1} parent=99 // pred_check_branch
          %686 = sbr.rel (%p684) target = $region116
        $region115: #{vit_model_xray_forward.1} parent=99 // pred_region
          %688 = dma.done [#allocation9], 32
        $region116: #{vit_model_xray_forward.1} parent=99 // pred_fallthru
          _
        // Predicated region
        $region117: #{vit_model_xray_forward.1} parent=99 // pred_check
          %p689 = pneg %p375
        $region118: #{vit_model_xray_forward.1} parent=99 // pred_check_branch
          %691 = sbr.rel (%p689) target = $region120
        $region119: #{vit_model_xray_forward.1} parent=99 // pred_region
          %693 = dma.done [#allocation9], 16
        $region120: #{vit_model_xray_forward.1} parent=99 // pred_fallthru
          _
        // Predicated region
        $region121: #{vit_model_xray_forward.1} parent=99 // pred_check
          %p694 = pneg %p396
        $region122: #{vit_model_xray_forward.1} parent=99 // pred_check_branch
          %696 = sbr.rel (%p694) target = $region124
        $region123: #{vit_model_xray_forward.1} parent=99 // pred_region
          %698 = dma.done [#allocation12], 1024
        $region124: #{vit_model_xray_forward.1} parent=99 // pred_fallthru
          _
        // Predicated region
        $region125: #{vit_model_xray_forward.1} parent=99 // pred_check
          %p699 = pneg %p417
        $region126: #{vit_model_xray_forward.1} parent=99 // pred_check_branch
          %701 = sbr.rel (%p699) target = $region128
        $region127: #{vit_model_xray_forward.1} parent=99 // pred_region
          %703 = dma.done [#allocation12], 16
        $region128: #{vit_model_xray_forward.1} parent=99 // pred_fallthru
          _
        // Predicated region
        $region129: #{vit_model_xray_forward.1} parent=99 // pred_check
          %p704 = pneg %p438
        $region130: #{vit_model_xray_forward.1} parent=99 // pred_check_branch
          %706 = sbr.rel (%p704) target = $region132
        $region131: #{vit_model_xray_forward.1} parent=99 // pred_region
          %708 = dma.done [#allocation15], 1024
        $region132: #{vit_model_xray_forward.1} parent=99 // pred_fallthru
          _
        // Predicated region
        $region133: #{vit_model_xray_forward.1} parent=99 // pred_check
          %p709 = pneg %p459
        $region134: #{vit_model_xray_forward.1} parent=99 // pred_check_branch
          %711 = sbr.rel (%p709) target = $region136
        $region135: #{vit_model_xray_forward.1} parent=99 // pred_region
          %713 = dma.done [#allocation15], 16
        $region136: #{vit_model_xray_forward.1} parent=99 // pred_fallthru
          _
        %p714 = scmp.lt.s32.totalorder %s39, 1
        %s715 = scalar_select %p714, %s39, 1
        %s716 = smul.addr %s715, 6
        %s717 = smul.addr %s716, 2
        %s718 = scalar_lea.vmem %s0, %s717
        %p719 = pneg %p60
        %p720 = pneg %p57
        %p721 = pneg %p81
        %p722 = pneg %p78
        %p723 = pneg %p102
        %p724 = pneg %p99
        %p725 = pneg %p123
        %p726 = pneg %p120
        %p727 = pneg %p144
        %p728 = pneg %p141
        %p729 = pneg %p165
        %p730 = pneg %p162
        %p731 = pneg %p186
        %p732 = pneg %p183
        %p733 = pneg %p207
        %p734 = pneg %p204
        %p735 = pneg %p228
        %p736 = pneg %p225
        %p737 = pneg %p249
        %p738 = pneg %p246
        %p739 = pneg %p270
        %p740 = pneg %p267
        %p741 = pneg %p291
        %p742 = pneg %p288
        %p743 = pneg %p312
        %p744 = pneg %p309
        %p745 = pneg %p333
        %p746 = pneg %p330
        %p747 = pneg %p354
        %p748 = pneg %p351
        %p749 = pneg %p375
        %p750 = pneg %p372
        %p751 = pneg %p396
        %p752 = pneg %p393
        %p753 = pneg %p417
        %p754 = pneg %p414
        %p755 = pneg %p438
        %p756 = pneg %p435
        %p757 = pneg %p459
        %p758 = pneg %p456
        %p759 = pneg %p485
        %p760 = pneg %p482
        %s761 = sand.u32 %s472, 1
        %s762 = scalar_lea.sflag [#allocation4], %s761
        %s763 = sand.u32 %s472, 1
        %s764 = scalar_lea.vmem [#allocation17], %s763
        %p765 = scmp.lt.s32.totalorder %s39, 1
        %s766 = scalar_select %p765, %s39, 1
        %s767 = smul.addr %s766, 6
        %s768 = smul.addr %s767, 2
        %s769 = scalar_lea.vmem %s0, %s768
        %v771 = vld [vmem:[%s769] sm:$0xff]
        %v772 = vld [vmem:[%s769 + $0x8] sm:$0xf]
        %v773 = vld [vmem:[#allocation2] sm:$0xf]
        %v774 = vld [vmem:[#allocation2 + $0x4] sm:$0xf]
        %v775 = vld [vmem:[#allocation2 + $0x8] sm:$0xf]
        %v776 = vld [vmem:[#allocation2 + $0xc] sm:$0xf]
        %v777 = vld [vmem:[#allocation2 + $0x10] sm:$0xf]
        %v778 = vld [vmem:[#allocation2 + $0x14] sm:$0xf]
        %v779 = vld [vmem:[#allocation2 + $0x18] sm:$0xf]
        %v780 = vld [vmem:[#allocation2 + $0x1c] sm:$0xf]
        %v781 = vld [vmem:[#allocation2 + $0x20] sm:$0xf]
        %v782 = vld [vmem:[#allocation2 + $0x24] sm:$0xf]
        %v783 = vld [vmem:[#allocation2 + $0x28] sm:$0xf]
        %v784 = vld [vmem:[#allocation2 + $0x2c] sm:$0xf]
        %v785 = vld [vmem:[#allocation2 + $0x30] sm:$0xf]
        %v786 = vld [vmem:[#allocation2 + $0x34] sm:$0xf]
        %v787 = vld [vmem:[#allocation2 + $0x38] sm:$0xf]
        %v788 = vld [vmem:[#allocation2 + $0x3c] sm:$0xf]
        %v789 = vld [vmem:[#allocation2 + $0x40] sm:$0xf]
        %v790 = vld [vmem:[#allocation2 + $0x44] sm:$0xf]
        %v791 = vld [vmem:[#allocation2 + $0x48] sm:$0xf]
        %v792 = vld [vmem:[#allocation2 + $0x4c] sm:$0xf]
        %v793 = vld [vmem:[#allocation2 + $0x50] sm:$0xf]
        %v794 = vld [vmem:[#allocation2 + $0x54] sm:$0xf]
        %v795 = vld [vmem:[#allocation2 + $0x58] sm:$0xf]
        %v796 = vld [vmem:[#allocation2 + $0x5c] sm:$0xf]
        %v797 = vld [vmem:[#allocation2 + $0x60] sm:$0xf]
        %v798 = vld [vmem:[#allocation2 + $0x64] sm:$0xf]
        %v799 = vld [vmem:[#allocation2 + $0x68] sm:$0xf]
        %v800 = vld [vmem:[#allocation2 + $0x6c] sm:$0xf]
        %v801 = vld [vmem:[#allocation2 + $0x70] sm:$0xf]
        %v802 = vld [vmem:[#allocation2 + $0x74] sm:$0xf]
        %v803 = vld [vmem:[#allocation2 + $0x78] sm:$0xf]
        %v804 = vld [vmem:[#allocation2 + $0x7c] sm:$0xf]
        %v805 = vld [vmem:[#allocation2 + $0x80] sm:$0xf]
        %v806 = vld [vmem:[#allocation2 + $0x84] sm:$0xf]
        %v807 = vld [vmem:[#allocation2 + $0x88] sm:$0xf]
        %v808 = vld [vmem:[#allocation2 + $0x8c] sm:$0xf]
        %v809 = vld [vmem:[#allocation2 + $0x90] sm:$0xf]
        %v810 = vld [vmem:[#allocation2 + $0x94] sm:$0xf]
        %v811 = vld [vmem:[#allocation2 + $0x98] sm:$0xf]
        %v812 = vld [vmem:[#allocation2 + $0x9c] sm:$0xf]
        %v813 = vld [vmem:[#allocation2 + $0xa0] sm:$0xf]
        %v814 = vld [vmem:[#allocation2 + $0xa4] sm:$0xf]
        %v815 = vld [vmem:[#allocation2 + $0xa8] sm:$0xf]
        %v816 = vld [vmem:[#allocation2 + $0xac] sm:$0xf]
        %v817 = vld [vmem:[#allocation2 + $0xb0] sm:$0xf]
        %v818 = vld [vmem:[#allocation2 + $0xb4] sm:$0xf]
        %v819 = vld [vmem:[#allocation2 + $0xb8] sm:$0xf]
        %v820 = vld [vmem:[#allocation2 + $0xbc] sm:$0xf]
        %v821 = vld [vmem:[#allocation2 + $0xc0] sm:$0xf]
        %v822 = vld [vmem:[#allocation2 + $0xc4] sm:$0xf]
        %v823 = vld [vmem:[#allocation2 + $0xc8] sm:$0xf]
        %v824 = vld [vmem:[#allocation2 + $0xcc] sm:$0xf]
        %v825 = vld [vmem:[#allocation2 + $0xd0] sm:$0xf]
        %v826 = vld [vmem:[#allocation2 + $0xd4] sm:$0xf]
        %v827 = vld [vmem:[#allocation2 + $0xd8] sm:$0xf]
        %v828 = vld [vmem:[#allocation2 + $0xdc] sm:$0xf]
        %v829 = vld [vmem:[#allocation2 + $0xe0] sm:$0xf]
        %v830 = vld [vmem:[#allocation2 + $0xe4] sm:$0xf]
        %v831 = vld [vmem:[#allocation2 + $0xe8] sm:$0xf]
        %v832 = vld [vmem:[#allocation2 + $0xec] sm:$0xf]
        %v833 = vld [vmem:[#allocation2 + $0xf0] sm:$0xf]
        %v834 = vld [vmem:[#allocation2 + $0xf4] sm:$0xf]
        %v835 = vld [vmem:[#allocation2 + $0xf8] sm:$0xf]
        %v836 = vld [vmem:[#allocation2 + $0xfc] sm:$0xf]
        %v837 = vld [vmem:[#allocation2 + $0x100] sm:$0xf]
        %v838 = vld [vmem:[#allocation2 + $0x104] sm:$0xf]
        %v839 = vld [vmem:[#allocation2 + $0x108] sm:$0xf]
        %v840 = vld [vmem:[#allocation2 + $0x10c] sm:$0xf]
        %v841 = vld [vmem:[#allocation2 + $0x110] sm:$0xf]
        %v842 = vld [vmem:[#allocation2 + $0x114] sm:$0xf]
        %v843 = vld [vmem:[#allocation2 + $0x118] sm:$0xf]
        %v844 = vld [vmem:[#allocation2 + $0x11c] sm:$0xf]
        %v845 = vld [vmem:[#allocation2 + $0x120] sm:$0xf]
        %v846 = vld [vmem:[#allocation2 + $0x124] sm:$0xf]
        %v847 = vld [vmem:[#allocation2 + $0x128] sm:$0xf]
        %v848 = vld [vmem:[#allocation2 + $0x12c] sm:$0xf]
        %v849 = vld [vmem:[#allocation2 + $0x130] sm:$0xf]
        %v850 = vld [vmem:[#allocation2 + $0x134] sm:$0xf]
        %v851 = vld [vmem:[#allocation2 + $0x138] sm:$0xf]
        %v852 = vld [vmem:[#allocation2 + $0x13c] sm:$0xf]
        %v853 = vld [vmem:[#allocation2 + $0x140] sm:$0xf]
        %v854 = vld [vmem:[#allocation2 + $0x144] sm:$0xf]
        %v855 = vld [vmem:[#allocation2 + $0x148] sm:$0xf]
        %v856 = vld [vmem:[#allocation2 + $0x14c] sm:$0xf]
        %v857 = vld [vmem:[#allocation2 + $0x150] sm:$0xf]
        %v858 = vld [vmem:[#allocation2 + $0x154] sm:$0xf]
        %v859 = vld [vmem:[#allocation2 + $0x158] sm:$0xf]
        %v860 = vld [vmem:[#allocation2 + $0x15c] sm:$0xf]
        %v861 = vld [vmem:[#allocation2 + $0x160] sm:$0xf]
        %v862 = vld [vmem:[#allocation2 + $0x164] sm:$0xf]
        %v863 = vld [vmem:[#allocation2 + $0x168] sm:$0xf]
        %v864 = vld [vmem:[#allocation2 + $0x16c] sm:$0xf]
        %v865 = vld [vmem:[#allocation2 + $0x170] sm:$0xf]
        %v866 = vld [vmem:[#allocation2 + $0x174] sm:$0xf]
        %v867 = vld [vmem:[#allocation2 + $0x178] sm:$0xf]
        %v868 = vld [vmem:[#allocation2 + $0x17c] sm:$0xf]
        %v869 = vld [vmem:[%s1] sm:$0x1]
        %v870 = vld [vmem:[%s1 + $0x1] sm:$0xf]
        %872 = vst [vmem:[#allocation1] ss:$4 sm:$0xff] %v771
        %s874 = scalar_lea.vmem [#allocation1], 32
        %875 = vst [vmem:[%s874] ss:$4 sm:$0xff] %v772
        %v876 = vld.sshfl [vmem:[#allocation1] sm:$0xff pattern:$0x73625140]
        %v877 = vld.sshfl [vmem:[#allocation1 + $0x8] sm:$0xff pattern:$0x73625140]
        %v878 = vld.sshfl [vmem:[#allocation1 + $0x10] sm:$0xff pattern:$0x73625140]
        %v879 = vld.sshfl [vmem:[#allocation1 + $0x18] sm:$0xff pattern:$0x73625140]
        %v880 = vld.sshfl [vmem:[#allocation1 + $0x20] sm:$0xff pattern:$0x73625140]
        %v881 = vld.sshfl [vmem:[#allocation1 + $0x28] sm:$0xff pattern:$0x73625140]
        %v984 = vunpack.c.l.b16 %v773
        %v985 = vunpack.c.l.b16 %v774
        %v986 = vunpack.c.l.b16 %v775
        %v987 = vunpack.c.l.b16 %v776
        %v988 = vunpack.c.l.b16 %v777
        %v989 = vunpack.c.l.b16 %v778
        %v990 = vunpack.c.l.b16 %v779
        %v991 = vunpack.c.l.b16 %v780
        %v992 = vunpack.c.l.b16 %v781
        %v993 = vunpack.c.l.b16 %v782
        %v994 = vunpack.c.l.b16 %v783
        %v995 = vunpack.c.l.b16 %v784
        %v996 = vunpack.c.l.b16 %v785
        %v997 = vunpack.c.l.b16 %v786
        %v998 = vunpack.c.l.b16 %v787
        %v999 = vunpack.c.l.b16 %v788
        %v1000 = vunpack.c.l.b16 %v789
        %v1001 = vunpack.c.l.b16 %v790
        %v1002 = vunpack.c.l.b16 %v791
        %v1003 = vunpack.c.l.b16 %v792
        %v1004 = vunpack.c.l.b16 %v793
        %v1005 = vunpack.c.l.b16 %v794
        %v1006 = vunpack.c.l.b16 %v795
        %v1007 = vunpack.c.l.b16 %v796
        %v1008 = vunpack.c.l.b16 %v797
        %v1009 = vunpack.c.l.b16 %v798
        %v1010 = vunpack.c.l.b16 %v799
        %v1011 = vunpack.c.l.b16 %v800
        %v1012 = vunpack.c.l.b16 %v801
        %v1013 = vunpack.c.l.b16 %v802
        %v1014 = vunpack.c.l.b16 %v803
        %v1015 = vunpack.c.l.b16 %v804
        %v1016 = vunpack.c.l.b16 %v805
        %v1017 = vunpack.c.l.b16 %v806
        %v1018 = vunpack.c.l.b16 %v807
        %v1019 = vunpack.c.l.b16 %v808
        %v1020 = vunpack.c.l.b16 %v809
        %v1021 = vunpack.c.l.b16 %v810
        %v1022 = vunpack.c.l.b16 %v811
        %v1023 = vunpack.c.l.b16 %v812
        %v1024 = vunpack.c.l.b16 %v813
        %v1025 = vunpack.c.l.b16 %v814
        %v1026 = vunpack.c.l.b16 %v815
        %v1027 = vunpack.c.l.b16 %v816
        %v1028 = vunpack.c.l.b16 %v817
        %v1029 = vunpack.c.l.b16 %v818
        %v1030 = vunpack.c.l.b16 %v819
        %v1031 = vunpack.c.l.b16 %v820
        %v1032 = vunpack.c.l.b16 %v821
        %v1033 = vunpack.c.l.b16 %v822
        %v1034 = vunpack.c.l.b16 %v823
        %v1035 = vunpack.c.l.b16 %v824
        %v1036 = vunpack.c.l.b16 %v825
        %v1037 = vunpack.c.l.b16 %v826
        %v1038 = vunpack.c.l.b16 %v827
        %v1039 = vunpack.c.l.b16 %v828
        %v1040 = vunpack.c.l.b16 %v829
        %v1041 = vunpack.c.l.b16 %v830
        %v1042 = vunpack.c.l.b16 %v831
        %v1043 = vunpack.c.l.b16 %v832
        %v1044 = vunpack.c.l.b16 %v833
        %v1045 = vunpack.c.l.b16 %v834
        %v1046 = vunpack.c.l.b16 %v835
        %v1047 = vunpack.c.l.b16 %v836
        %v1048 = vunpack.c.l.b16 %v837
        %v1049 = vunpack.c.l.b16 %v838
        %v1050 = vunpack.c.l.b16 %v839
        %v1051 = vunpack.c.l.b16 %v840
        %v1052 = vunpack.c.l.b16 %v841
        %v1053 = vunpack.c.l.b16 %v842
        %v1054 = vunpack.c.l.b16 %v843
        %v1055 = vunpack.c.l.b16 %v844
        %v1056 = vunpack.c.l.b16 %v845
        %v1057 = vunpack.c.l.b16 %v846
        %v1058 = vunpack.c.l.b16 %v847
        %v1059 = vunpack.c.l.b16 %v848
        %v1060 = vunpack.c.l.b16 %v849
        %v1061 = vunpack.c.l.b16 %v850
        %v1062 = vunpack.c.l.b16 %v851
        %v1063 = vunpack.c.l.b16 %v852
        %v1064 = vunpack.c.l.b16 %v853
        %v1065 = vunpack.c.l.b16 %v854
        %v1066 = vunpack.c.l.b16 %v855
        %v1067 = vunpack.c.l.b16 %v856
        %v1068 = vunpack.c.l.b16 %v857
        %v1069 = vunpack.c.l.b16 %v858
        %v1070 = vunpack.c.l.b16 %v859
        %v1071 = vunpack.c.l.b16 %v860
        %v1072 = vunpack.c.l.b16 %v861
        %v1073 = vunpack.c.l.b16 %v862
        %v1074 = vunpack.c.l.b16 %v863
        %v1075 = vunpack.c.l.b16 %v864
        %v1076 = vunpack.c.l.b16 %v865
        %v1077 = vunpack.c.l.b16 %v866
        %v1078 = vunpack.c.l.b16 %v867
        %v1079 = vunpack.c.l.b16 %v868
        %v1080 = vpack.c.b16 %v985, %v984
        %v1081 = vpack.c.b16 %v987, %v986
        %v1082 = vpack.c.b16 %v989, %v988
        %v1083 = vpack.c.b16 %v991, %v990
        %v1084 = vpack.c.b16 %v993, %v992
        %v1085 = vpack.c.b16 %v995, %v994
        %v1086 = vpack.c.b16 %v997, %v996
        %v1087 = vpack.c.b16 %v999, %v998
        %v1088 = vpack.c.b16 %v1001, %v1000
        %v1089 = vpack.c.b16 %v1003, %v1002
        %v1090 = vpack.c.b16 %v1005, %v1004
        %v1091 = vpack.c.b16 %v1007, %v1006
        %v1092 = vpack.c.b16 %v1009, %v1008
        %v1093 = vpack.c.b16 %v1011, %v1010
        %v1094 = vpack.c.b16 %v1013, %v1012
        %v1095 = vpack.c.b16 %v1015, %v1014
        %v1096 = vpack.c.b16 %v1017, %v1016
        %v1097 = vpack.c.b16 %v1019, %v1018
        %v1098 = vpack.c.b16 %v1021, %v1020
        %v1099 = vpack.c.b16 %v1023, %v1022
        %v1100 = vpack.c.b16 %v1025, %v1024
        %v1101 = vpack.c.b16 %v1027, %v1026
        %v1102 = vpack.c.b16 %v1029, %v1028
        %v1103 = vpack.c.b16 %v1031, %v1030
        %v1104 = vpack.c.b16 %v1033, %v1032
        %v1105 = vpack.c.b16 %v1035, %v1034
        %v1106 = vpack.c.b16 %v1037, %v1036
        %v1107 = vpack.c.b16 %v1039, %v1038
        %v1108 = vpack.c.b16 %v1041, %v1040
        %v1109 = vpack.c.b16 %v1043, %v1042
        %v1110 = vpack.c.b16 %v1045, %v1044
        %v1111 = vpack.c.b16 %v1047, %v1046
        %v1112 = vpack.c.b16 %v1049, %v1048
        %v1113 = vpack.c.b16 %v1051, %v1050
        %v1114 = vpack.c.b16 %v1053, %v1052
        %v1115 = vpack.c.b16 %v1055, %v1054
        %v1116 = vpack.c.b16 %v1057, %v1056
        %v1117 = vpack.c.b16 %v1059, %v1058
        %v1118 = vpack.c.b16 %v1061, %v1060
        %v1119 = vpack.c.b16 %v1063, %v1062
        %v1120 = vpack.c.b16 %v1065, %v1064
        %v1121 = vpack.c.b16 %v1067, %v1066
        %v1122 = vpack.c.b16 %v1069, %v1068
        %v1123 = vpack.c.b16 %v1071, %v1070
        %v1124 = vpack.c.b16 %v1073, %v1072
        %v1125 = vpack.c.b16 %v1075, %v1074
        %v1126 = vpack.c.b16 %v1077, %v1076
        %v1127 = vpack.c.b16 %v1079, %v1078
        %1176 = vmatpush.bf16.msra.mxu0 %v1087
        %1177 = vmatpush.bf16.msra.mxu0 %v1086
        %1178 = vmatpush.bf16.msra.mxu0 %v1085
        %1179 = vmatpush.bf16.msra.mxu0 %v1084
        %1180 = vmatpush.bf16.msra.mxu0 %v1083
        %1181 = vmatpush.bf16.msra.mxu0 %v1082
        %1182 = vmatpush.bf16.msra.mxu0 %v1081
        %1183 = vmatpush.bf16.msra.mxu0 %v1080
        %1184 = vmatmul.bf16.gmra.mxu0 %v876
        %v1185 = vpop.f32.mrf.mxu0
        %v1186 = vadd.f32 %v870, %v1185
        %v1187 = vpop.f32.mrf.mxu0
        %1188 = vdwg.mxu0
        %1189 = vmatpush.bf16.msra.mxu0 %v1095
        %1190 = vmatpush.bf16.msra.mxu0 %v1094
        %1191 = vmatpush.bf16.msra.mxu0 %v1093
        %1192 = vmatpush.bf16.msra.mxu0 %v1092
        %1193 = vmatpush.bf16.msra.mxu0 %v1091
        %1194 = vmatpush.bf16.msra.mxu0 %v1090
        %1195 = vmatpush.bf16.msra.mxu0 %v1089
        %1196 = vmatpush.bf16.msra.mxu0 %v1088
        %1197 = vmatmul.bf16.gmra.mxu0 %v877
        %v1198 = vpop.f32.mrf.mxu0
        %v1199 = vadd.f32 %v1186, %v1198
        %v1200 = vpop.f32.mrf.mxu0
        %1201 = vdwg.mxu0
        %1202 = vmatpush.bf16.msra.mxu0 %v1103
        %1203 = vmatpush.bf16.msra.mxu0 %v1102
        %1204 = vmatpush.bf16.msra.mxu0 %v1101
        %1205 = vmatpush.bf16.msra.mxu0 %v1100
        %1206 = vmatpush.bf16.msra.mxu0 %v1099
        %1207 = vmatpush.bf16.msra.mxu0 %v1098
        %1208 = vmatpush.bf16.msra.mxu0 %v1097
        %1209 = vmatpush.bf16.msra.mxu0 %v1096
        %1210 = vmatmul.bf16.gmra.mxu0 %v878
        %v1211 = vpop.f32.mrf.mxu0
        %v1212 = vadd.f32 %v1199, %v1211
        %v1213 = vpop.f32.mrf.mxu0
        %1214 = vdwg.mxu0
        %1215 = vmatpush.bf16.msra.mxu0 %v1111
        %1216 = vmatpush.bf16.msra.mxu0 %v1110
        %1217 = vmatpush.bf16.msra.mxu0 %v1109
        %1218 = vmatpush.bf16.msra.mxu0 %v1108
        %1219 = vmatpush.bf16.msra.mxu0 %v1107
        %1220 = vmatpush.bf16.msra.mxu0 %v1106
        %1221 = vmatpush.bf16.msra.mxu0 %v1105
        %1222 = vmatpush.bf16.msra.mxu0 %v1104
        %1223 = vmatmul.bf16.gmra.mxu0 %v879
        %v1224 = vpop.f32.mrf.mxu0
        %v1225 = vadd.f32 %v1212, %v1224
        %v1226 = vpop.f32.mrf.mxu0
        %1227 = vdwg.mxu0
        %1228 = vmatpush.bf16.msra.mxu0 %v1119
        %1229 = vmatpush.bf16.msra.mxu0 %v1118
        %1230 = vmatpush.bf16.msra.mxu0 %v1117
        %1231 = vmatpush.bf16.msra.mxu0 %v1116
        %1232 = vmatpush.bf16.msra.mxu0 %v1115
        %1233 = vmatpush.bf16.msra.mxu0 %v1114
        %1234 = vmatpush.bf16.msra.mxu0 %v1113
        %1235 = vmatpush.bf16.msra.mxu0 %v1112
        %1236 = vmatmul.bf16.gmra.mxu0 %v880
        %v1237 = vpop.f32.mrf.mxu0
        %v1238 = vadd.f32 %v1225, %v1237
        %v1239 = vpop.f32.mrf.mxu0
        %1240 = vdwg.mxu0
        %1241 = vmatpush.bf16.msra.mxu0 %v1127
        %1242 = vmatpush.bf16.msra.mxu0 %v1126
        %1243 = vmatpush.bf16.msra.mxu0 %v1125
        %1244 = vmatpush.bf16.msra.mxu0 %v1124
        %1245 = vmatpush.bf16.msra.mxu0 %v1123
        %1246 = vmatpush.bf16.msra.mxu0 %v1122
        %1247 = vmatpush.bf16.msra.mxu0 %v1121
        %1248 = vmatpush.bf16.msra.mxu0 %v1120
        %1249 = vmatmul.bf16.gmra.mxu0 %v881
        %v1250 = vpop.f32.mrf.mxu0
        %v1251 = vadd.f32 %v1238, %v1250
        %v1252 = vpop.f32.mrf.mxu0
        %1253 = vdwg.mxu0
        %v1255 = vrot.slane %v1251, 7
        %vm1257 = vcmask 1040384
        %v1258 = vsel %vm1257, %v869, %v1255
        %v1259 = vld [vmem:[%s3] sm:$0x1]
        %v1260 = vld [vmem:[%s4] sm:$0x1]
        %vm1261 = vcmask 1044480
        %v1262 = vsel %vm1261, %v1258, 0.0
        %1263 = vadd.xlane.f32.xlu0 %v1262
        %v1264 = vpop.xlane.xlu0 %1263
        %v1265 = vrcp.pop 128.0
        %v1266 = vmul.f32 128.0, %v1265
        %v1267 = vsub.f32 1.0, %v1266
        %v1268 = vmul.f32 %v1265, %v1267
        %v1269 = vadd.f32 %v1265, %v1268
        %vm1270 = vweird.f32 %v1265
        %v1271 = vsel %vm1270, %v1265, %v1269
        %v1272 = vmul.f32 %v1264, %v1271
        %v1273 = vsub.f32 %v1258, %v1272
        %v1274 = vmul.f32 %v1273, %v1273
        %v1275 = vsel %vm1261, %v1274, 0.0
        %1276 = vadd.xlane.f32.xlu0 %v1275
        %v1277 = vpop.xlane.xlu0 %1276
        %v1278 = vmul.f32 %v1277, %v1271
        %v1279 = vadd.f32 %v1278, 1e-06
        %v1280 = vrsqrt.pop %v1279
        %v1281 = vmul.f32 %v1280, %v1279
        %v1282 = vmul.f32 %v1281, %v1280
        %v1283 = vmul.f32 0.5, %v1282
        %v1284 = vsub.f32 1.5, %v1283
        %v1285 = vmul.f32 %v1280, %v1284
        %vm1286 = vweird.f32 %v1279
        %vm1287 = vweird.f32 %v1280
        %vm1288 = vmor %vm1286, %vm1287
        %v1289 = vsel %vm1288, %v1280, %v1285
        %v1290 = vmul.f32 %v1273, %v1289
        %v1292 = vperm.slane %v1259, 0
        %v1294 = vmul.f32 %v1290, %v1292
        %v1296 = vperm.slane %v1260, 0
        %v1298 = vadd.f32 %v1294, %v1296
        %v1299 = vpack.c.bf16 %v1298, %v1298
        %v1300 = vld [vmem:[#allocation5] sm:$0xff]
        %v1301 = vld [vmem:[#allocation5 + $0x8] sm:$0xf]
        %v1302 = vld [vmem:[#allocation5 + $0xc] sm:$0xff]
        %v1303 = vld [vmem:[#allocation5 + $0x14] sm:$0xf]
        %v1304 = vld [vmem:[#allocation5 + $0x18] sm:$0xff]
        %v1305 = vld [vmem:[#allocation5 + $0x20] sm:$0xf]
        %v1306 = vld [vmem:[#allocation5 + $0x24] sm:$0xff]
        %v1307 = vld [vmem:[#allocation5 + $0x2c] sm:$0xf]
        %v1308 = vld [vmem:[#allocation5 + $0x30] sm:$0xff]
        %v1309 = vld [vmem:[#allocation5 + $0x38] sm:$0xf]
        %v1310 = vld [vmem:[#allocation5 + $0x3c] sm:$0xff]
        %v1311 = vld [vmem:[#allocation5 + $0x44] sm:$0xf]
        %v1312 = vld [vmem:[#allocation5 + $0x48] sm:$0xff]
        %v1313 = vld [vmem:[#allocation5 + $0x50] sm:$0xf]
        %v1314 = vld [vmem:[#allocation5 + $0x54] sm:$0xff]
        %v1315 = vld [vmem:[#allocation5 + $0x5c] sm:$0xf]
        %v1316 = vld [vmem:[#allocation5 + $0x60] sm:$0xff]
        %v1317 = vld [vmem:[#allocation5 + $0x68] sm:$0xf]
        %v1318 = vld [vmem:[#allocation5 + $0x6c] sm:$0xff]
        %v1319 = vld [vmem:[#allocation5 + $0x74] sm:$0xf]
        %v1320 = vld [vmem:[#allocation5 + $0x78] sm:$0xff]
        %v1321 = vld [vmem:[#allocation5 + $0x80] sm:$0xf]
        %v1322 = vld [vmem:[#allocation5 + $0x84] sm:$0xff]
        %v1323 = vld [vmem:[#allocation5 + $0x8c] sm:$0xf]
        %v1324 = vld [vmem:[#allocation5 + $0x90] sm:$0xff]
        %v1325 = vld [vmem:[#allocation5 + $0x98] sm:$0xf]
        %v1326 = vld [vmem:[#allocation5 + $0x9c] sm:$0xff]
        %v1327 = vld [vmem:[#allocation5 + $0xa4] sm:$0xf]
        %v1328 = vld [vmem:[#allocation5 + $0xa8] sm:$0xff]
        %v1329 = vld [vmem:[#allocation5 + $0xb0] sm:$0xf]
        %v1330 = vld [vmem:[#allocation5 + $0xb4] sm:$0xff]
        %v1331 = vld [vmem:[#allocation5 + $0xbc] sm:$0xf]
        %v1364 = vunpack.c.l.b16 %v1300
        %v1365 = vunpack.c.h.b16 %v1300
        %v1366 = vunpack.c.l.b16 %v1301
        %v1367 = vunpack.c.l.b16 %v1302
        %v1368 = vunpack.c.h.b16 %v1302
        %v1369 = vunpack.c.l.b16 %v1303
        %v1370 = vunpack.c.l.b16 %v1304
        %v1371 = vunpack.c.h.b16 %v1304
        %v1372 = vunpack.c.l.b16 %v1305
        %v1373 = vunpack.c.l.b16 %v1306
        %v1374 = vunpack.c.h.b16 %v1306
        %v1375 = vunpack.c.l.b16 %v1307
        %v1376 = vunpack.c.l.b16 %v1308
        %v1377 = vunpack.c.h.b16 %v1308
        %v1378 = vunpack.c.l.b16 %v1309
        %v1379 = vunpack.c.l.b16 %v1310
        %v1380 = vunpack.c.h.b16 %v1310
        %v1381 = vunpack.c.l.b16 %v1311
        %v1382 = vunpack.c.l.b16 %v1312
        %v1383 = vunpack.c.h.b16 %v1312
        %v1384 = vunpack.c.l.b16 %v1313
        %v1385 = vunpack.c.l.b16 %v1314
        %v1386 = vunpack.c.h.b16 %v1314
        %v1387 = vunpack.c.l.b16 %v1315
        %v1388 = vunpack.c.l.b16 %v1316
        %v1389 = vunpack.c.h.b16 %v1316
        %v1390 = vunpack.c.l.b16 %v1317
        %v1391 = vunpack.c.l.b16 %v1318
        %v1392 = vunpack.c.h.b16 %v1318
        %v1393 = vunpack.c.l.b16 %v1319
        %v1394 = vunpack.c.l.b16 %v1320
        %v1395 = vunpack.c.h.b16 %v1320
        %v1396 = vunpack.c.l.b16 %v1321
        %v1397 = vunpack.c.l.b16 %v1322
        %v1398 = vunpack.c.h.b16 %v1322
        %v1399 = vunpack.c.l.b16 %v1323
        %v1400 = vunpack.c.l.b16 %v1324
        %v1401 = vunpack.c.h.b16 %v1324
        %v1402 = vunpack.c.l.b16 %v1325
        %v1403 = vunpack.c.l.b16 %v1326
        %v1404 = vunpack.c.h.b16 %v1326
        %v1405 = vunpack.c.l.b16 %v1327
        %v1406 = vunpack.c.l.b16 %v1328
        %v1407 = vunpack.c.h.b16 %v1328
        %v1408 = vunpack.c.l.b16 %v1329
        %v1409 = vunpack.c.l.b16 %v1330
        %v1410 = vunpack.c.h.b16 %v1330
        %v1411 = vunpack.c.l.b16 %v1331
        %v1412 = vpack.c.b16 %v1367, %v1364
        %v1413 = vpack.c.b16 %v1368, %v1365
        %v1414 = vpack.c.b16 %v1369, %v1366
        %v1415 = vpack.c.b16 %v1373, %v1370
        %v1416 = vpack.c.b16 %v1374, %v1371
        %v1417 = vpack.c.b16 %v1375, %v1372
        %v1418 = vpack.c.b16 %v1379, %v1376
        %v1419 = vpack.c.b16 %v1380, %v1377
        %v1420 = vpack.c.b16 %v1381, %v1378
        %v1421 = vpack.c.b16 %v1385, %v1382
        %v1422 = vpack.c.b16 %v1386, %v1383
        %v1423 = vpack.c.b16 %v1387, %v1384
        %v1424 = vpack.c.b16 %v1391, %v1388
        %v1425 = vpack.c.b16 %v1392, %v1389
        %v1426 = vpack.c.b16 %v1393, %v1390
        %v1427 = vpack.c.b16 %v1397, %v1394
        %v1428 = vpack.c.b16 %v1398, %v1395
        %v1429 = vpack.c.b16 %v1399, %v1396
        %v1430 = vpack.c.b16 %v1403, %v1400
        %v1431 = vpack.c.b16 %v1404, %v1401
        %v1432 = vpack.c.b16 %v1405, %v1402
        %v1433 = vpack.c.b16 %v1409, %v1406
        %v1434 = vpack.c.b16 %v1410, %v1407
        %v1435 = vpack.c.b16 %v1411, %v1408
        %1460 = vmatpush.bf16.msra.mxu0 %v1433
        %1461 = vmatpush.bf16.msra.mxu0 %v1430
        %1462 = vmatpush.bf16.msra.mxu0 %v1427
        %1463 = vmatpush.bf16.msra.mxu0 %v1424
        %1464 = vmatpush.bf16.msra.mxu0 %v1421
        %1465 = vmatpush.bf16.msra.mxu0 %v1418
        %1466 = vmatpush.bf16.msra.mxu0 %v1415
        %1467 = vmatpush.bf16.msra.mxu0 %v1412
        %1468 = vmatmul.bf16.gmra.mxu0 %v1299
        %v1469 = vpop.f32.mrf.mxu0
        %v1470 = vadd.f32 0.0, %v1469
        %v1471 = vpop.f32.mrf.mxu0
        %1472 = vdwg.mxu0
        %1473 = vmatpush.bf16.msra.mxu0 %v1434
        %1474 = vmatpush.bf16.msra.mxu0 %v1431
        %1475 = vmatpush.bf16.msra.mxu0 %v1428
        %1476 = vmatpush.bf16.msra.mxu0 %v1425
        %1477 = vmatpush.bf16.msra.mxu0 %v1422
        %1478 = vmatpush.bf16.msra.mxu0 %v1419
        %1479 = vmatpush.bf16.msra.mxu0 %v1416
        %1480 = vmatpush.bf16.msra.mxu0 %v1413
        %1481 = vmatmul.bf16.gmra.mxu0 %v1299
        %v1482 = vpop.f32.mrf.mxu0
        %v1483 = vadd.f32 0.0, %v1482
        %v1484 = vpop.f32.mrf.mxu0
        %1485 = vdwg.mxu0
        %1486 = vmatpush.bf16.msra.mxu0 %v1435
        %1487 = vmatpush.bf16.msra.mxu0 %v1432
        %1488 = vmatpush.bf16.msra.mxu0 %v1429
        %1489 = vmatpush.bf16.msra.mxu0 %v1426
        %1490 = vmatpush.bf16.msra.mxu0 %v1423
        %1491 = vmatpush.bf16.msra.mxu0 %v1420
        %1492 = vmatpush.bf16.msra.mxu0 %v1417
        %1493 = vmatpush.bf16.msra.mxu0 %v1414
        %1494 = vmatmul.bf16.gmra.mxu0 %v1299
        %v1495 = vpop.f32.mrf.mxu0
        %v1496 = vadd.f32 0.0, %v1495
        %v1497 = vpop.f32.mrf.mxu0
        %1498 = vdwg.mxu0
        %vm1499 = vcmask 261120
        %v1501 = vsel %vm1499, %v1470, 0
        %v1504 = vsel %vm1499, %v1483, 0
        %1506 = vmatpush.xpose.msra.mxu0 0.0
        %1507 = vmatpush.xpose.msra.mxu0 0.0
        %1508 = vmatpush.xpose.msra.mxu0 0.0
        %1509 = vmatpush.xpose.msra.mxu0 0.0
        %1510 = vmatpush.xpose.msra.mxu0 0.0
        %1511 = vmatpush.xpose.msra.mxu0 0.0
        %1512 = vmatpush.xpose.msra.mxu0 0.0
        %1513 = vmatpush.xpose.msra.mxu0 0.0
        %1514 = vmatpush.xpose.msra.mxu0 0.0
        %1515 = vmatpush.xpose.msra.mxu0 0.0
        %1516 = vmatpush.xpose.msra.mxu0 0.0
        %1517 = vmatpush.xpose.msra.mxu0 0.0
        %1518 = vmatpush.xpose.msra.mxu0 0.0
        %1519 = vmatpush.xpose.msra.mxu0 0.0
        %1520 = vmatpush.xpose.msra.mxu0 0.0
        %1521 = vmatpush.xpose.msra.mxu0 %v1504
        %1522 = vmatmul.f32.gmra.mxu0 %v1501
        %v1523 = vpop.f32.mrf.mxu0
        %v1524 = vadd.f32 0.0, %v1523
        %1525 = vdwg.mxu0
        %vm1526 = vcmask 36864
        %v1527 = vsel %vm1526, %v1524, -inf
        %1528 = vmax.xlane.f32.xlu0 %v1527
        %v1529 = vpop.xlane.xlu0 %1528
        %v1530 = vsub.f32 %v1524, %v1529
        %v1531 = vmul.f32 %v1530, 1.442695
        %v1532 = vpow.pop %v1531
        %v1533 = vsel %vm1526, %v1532, 0.0
        %1534 = vadd.xlane.f32.xlu0 %v1533
        %v1535 = vpop.xlane.xlu0 %1534
        %v1536 = vrcp.pop %v1535
        %v1537 = vmul.f32 %v1532, %v1536
        %vm1538 = vcmask 39936
        %v1540 = vsel %vm1538, %v1537, 0
        %v1543 = vsel %vm1261, %v1496, 0
        %1545 = vmatpush.msra.mxu0 0.0
        %1546 = vmatpush.msra.mxu0 0.0
        %1547 = vmatpush.msra.mxu0 0.0
        %1548 = vmatpush.msra.mxu0 0.0
        %1549 = vmatpush.msra.mxu0 0.0
        %1550 = vmatpush.msra.mxu0 0.0
        %1551 = vmatpush.msra.mxu0 0.0
        %1552 = vmatpush.msra.mxu0 0.0
        %1553 = vmatpush.msra.mxu0 0.0
        %1554 = vmatpush.msra.mxu0 0.0
        %1555 = vmatpush.msra.mxu0 0.0
        %1556 = vmatpush.msra.mxu0 0.0
        %1557 = vmatpush.msra.mxu0 0.0
        %1558 = vmatpush.msra.mxu0 0.0
        %1559 = vmatpush.msra.mxu0 0.0
        %1560 = vmatpush.msra.mxu0 %v1543
        %1561 = vmatmul.f32.gmra.mxu0 %v1540
        %v1562 = vpop.f32.mrf.mxu0
        %v1563 = vadd.f32 0.0, %v1562
        %1564 = vdwg.mxu0
        %v1565 = vpack.c.bf16 %v1563, %v1563
        %v1566 = vld [vmem:[%s6] sm:$0xf]
        %v1567 = vld [vmem:[%s6 + $0x4] sm:$0xf]
        %v1568 = vld [vmem:[%s6 + $0x8] sm:$0xf]
        %v1569 = vld [vmem:[%s6 + $0xc] sm:$0xf]
        %1570 = vrot.lane.b32.xlu0 %v1470, 96
        %v1571 = vpop.permute.xlu0 %1570
        %1572 = vrot.lane.b32.xlu0 %v1483, 96
        %v1573 = vpop.permute.xlu0 %1572
        %v1574 = vsel %vm1499, %v1571, 0
        %v1576 = vsel %vm1499, %v1573, 0
        %1578 = vmatpush.xpose.msra.mxu0 0.0
        %1579 = vmatpush.xpose.msra.mxu0 0.0
        %1580 = vmatpush.xpose.msra.mxu0 0.0
        %1581 = vmatpush.xpose.msra.mxu0 0.0
        %1582 = vmatpush.xpose.msra.mxu0 0.0
        %1583 = vmatpush.xpose.msra.mxu0 0.0
        %1584 = vmatpush.xpose.msra.mxu0 0.0
        %1585 = vmatpush.xpose.msra.mxu0 0.0
        %1586 = vmatpush.xpose.msra.mxu0 0.0
        %1587 = vmatpush.xpose.msra.mxu0 0.0
        %1588 = vmatpush.xpose.msra.mxu0 0.0
        %1589 = vmatpush.xpose.msra.mxu0 0.0
        %1590 = vmatpush.xpose.msra.mxu0 0.0
        %1591 = vmatpush.xpose.msra.mxu0 0.0
        %1592 = vmatpush.xpose.msra.mxu0 0.0
        %1593 = vmatpush.xpose.msra.mxu0 %v1576
        %1594 = vmatmul.f32.gmra.mxu0 %v1574
        %v1595 = vpop.f32.mrf.mxu0
        %v1596 = vadd.f32 0.0, %v1595
        %1597 = vdwg.mxu0
        %v1598 = vsel %vm1526, %v1596, -inf
        %1599 = vmax.xlane.f32.xlu0 %v1598
        %v1600 = vpop.xlane.xlu0 %1599
        %v1601 = vsub.f32 %v1596, %v1600
        %v1602 = vmul.f32 %v1601, 1.442695
        %v1603 = vpow.pop %v1602
        %v1604 = vsel %vm1526, %v1603, 0.0
        %1605 = vadd.xlane.f32.xlu0 %v1604
        %v1606 = vpop.xlane.xlu0 %1605
        %v1607 = vrcp.pop %v1606
        %v1608 = vmul.f32 %v1603, %v1607
        %1609 = vrot.lane.b32.xlu0 %v1496, 96
        %v1610 = vpop.permute.xlu0 %1609
        %v1612 = vsel %vm1538, %v1608, 0
        %v1614 = vsel %vm1261, %v1610, 0
        %1616 = vmatpush.msra.mxu0 0.0
        %1617 = vmatpush.msra.mxu0 0.0
        %1618 = vmatpush.msra.mxu0 0.0
        %1619 = vmatpush.msra.mxu0 0.0
        %1620 = vmatpush.msra.mxu0 0.0
        %1621 = vmatpush.msra.mxu0 0.0
        %1622 = vmatpush.msra.mxu0 0.0
        %1623 = vmatpush.msra.mxu0 0.0
        %1624 = vmatpush.msra.mxu0 0.0
        %1625 = vmatpush.msra.mxu0 0.0
        %1626 = vmatpush.msra.mxu0 0.0
        %1627 = vmatpush.msra.mxu0 0.0
        %1628 = vmatpush.msra.mxu0 0.0
        %1629 = vmatpush.msra.mxu0 0.0
        %1630 = vmatpush.msra.mxu0 0.0
        %1631 = vmatpush.msra.mxu0 %v1614
        %1632 = vmatmul.f32.gmra.mxu0 %v1612
        %v1633 = vpop.f32.mrf.mxu0
        %v1634 = vadd.f32 0.0, %v1633
        %1635 = vdwg.mxu0
        %v1636 = vpack.c.bf16 %v1634, %v1634
        %v1637 = vld [vmem:[%s6 + $0x10] sm:$0xf]
        %v1638 = vld [vmem:[%s6 + $0x14] sm:$0xf]
        %v1639 = vld [vmem:[%s6 + $0x18] sm:$0xf]
        %v1640 = vld [vmem:[%s6 + $0x1c] sm:$0xf]
        %v1645 = vunpack.c.l.b16 %v1637
        %v1646 = vunpack.c.l.b16 %v1638
        %v1647 = vunpack.c.l.b16 %v1639
        %v1648 = vunpack.c.l.b16 %v1640
        %v1649 = vpack.c.b16 %v1646, %v1645
        %v1650 = vpack.c.b16 %v1648, %v1647
        %v1654 = vsel %vm1499, %v1636, 0
        %1656 = vmatpush.bf16.msra.mxu0 0
        %1657 = vmatpush.bf16.msra.mxu0 0
        %1658 = vmatpush.bf16.msra.mxu0 0
        %1659 = vmatpush.bf16.msra.mxu0 0
        %1660 = vmatpush.bf16.msra.mxu0 0
        %1661 = vmatpush.bf16.msra.mxu0 0
        %1662 = vmatpush.bf16.msra.mxu0 %v1650
        %1663 = vmatpush.bf16.msra.mxu0 %v1649
        %1664 = vmatmul.bf16.gmra.mxu0 %v1654
        %v1665 = vpop.f32.mrf.mxu0
        %v1666 = vadd.f32 0.0, %v1665
        %v1667 = vpop.f32.mrf.mxu0
        %1668 = vdwg.mxu0
        %v1673 = vunpack.c.l.b16 %v1566
        %v1674 = vunpack.c.l.b16 %v1567
        %v1675 = vunpack.c.l.b16 %v1568
        %v1676 = vunpack.c.l.b16 %v1569
        %v1677 = vpack.c.b16 %v1674, %v1673
        %v1678 = vpack.c.b16 %v1676, %v1675
        %v1682 = vsel %vm1499, %v1565, 0
        %1684 = vmatpush.bf16.msra.mxu0 0
        %1685 = vmatpush.bf16.msra.mxu0 0
        %1686 = vmatpush.bf16.msra.mxu0 0
        %1687 = vmatpush.bf16.msra.mxu0 0
        %1688 = vmatpush.bf16.msra.mxu0 0
        %1689 = vmatpush.bf16.msra.mxu0 0
        %1690 = vmatpush.bf16.msra.mxu0 %v1678
        %1691 = vmatpush.bf16.msra.mxu0 %v1677
        %1692 = vmatmul.bf16.gmra.mxu0 %v1682
        %v1693 = vpop.f32.mrf.mxu0
        %v1694 = vadd.f32 %v1666, %v1693
        %v1695 = vpop.f32.mrf.mxu0
        %1696 = vdwg.mxu0
        %1697 = vrot.lane.b32.xlu0 %v1470, 64
        %v1698 = vpop.permute.xlu0 %1697
        %1699 = vrot.lane.b32.xlu0 %v1483, 64
        %v1700 = vpop.permute.xlu0 %1699
        %v1701 = vsel %vm1499, %v1698, 0
        %v1703 = vsel %vm1499, %v1700, 0
        %1705 = vmatpush.xpose.msra.mxu0 0.0
        %1706 = vmatpush.xpose.msra.mxu0 0.0
        %1707 = vmatpush.xpose.msra.mxu0 0.0
        %1708 = vmatpush.xpose.msra.mxu0 0.0
        %1709 = vmatpush.xpose.msra.mxu0 0.0
        %1710 = vmatpush.xpose.msra.mxu0 0.0
        %1711 = vmatpush.xpose.msra.mxu0 0.0
        %1712 = vmatpush.xpose.msra.mxu0 0.0
        %1713 = vmatpush.xpose.msra.mxu0 0.0
        %1714 = vmatpush.xpose.msra.mxu0 0.0
        %1715 = vmatpush.xpose.msra.mxu0 0.0
        %1716 = vmatpush.xpose.msra.mxu0 0.0
        %1717 = vmatpush.xpose.msra.mxu0 0.0
        %1718 = vmatpush.xpose.msra.mxu0 0.0
        %1719 = vmatpush.xpose.msra.mxu0 0.0
        %1720 = vmatpush.xpose.msra.mxu0 %v1703
        %1721 = vmatmul.f32.gmra.mxu0 %v1701
        %v1722 = vpop.f32.mrf.mxu0
        %v1723 = vadd.f32 0.0, %v1722
        %1724 = vdwg.mxu0
        %v1725 = vsel %vm1526, %v1723, -inf
        %1726 = vmax.xlane.f32.xlu0 %v1725
        %v1727 = vpop.xlane.xlu0 %1726
        %v1728 = vsub.f32 %v1723, %v1727
        %v1729 = vmul.f32 %v1728, 1.442695
        %v1730 = vpow.pop %v1729
        %v1731 = vsel %vm1526, %v1730, 0.0
        %1732 = vadd.xlane.f32.xlu0 %v1731
        %v1733 = vpop.xlane.xlu0 %1732
        %v1734 = vrcp.pop %v1733
        %v1735 = vmul.f32 %v1730, %v1734
        %1736 = vrot.lane.b32.xlu0 %v1496, 64
        %v1737 = vpop.permute.xlu0 %1736
        %v1739 = vsel %vm1538, %v1735, 0
        %v1741 = vsel %vm1261, %v1737, 0
        %1743 = vmatpush.msra.mxu0 0.0
        %1744 = vmatpush.msra.mxu0 0.0
        %1745 = vmatpush.msra.mxu0 0.0
        %1746 = vmatpush.msra.mxu0 0.0
        %1747 = vmatpush.msra.mxu0 0.0
        %1748 = vmatpush.msra.mxu0 0.0
        %1749 = vmatpush.msra.mxu0 0.0
        %1750 = vmatpush.msra.mxu0 0.0
        %1751 = vmatpush.msra.mxu0 0.0
        %1752 = vmatpush.msra.mxu0 0.0
        %1753 = vmatpush.msra.mxu0 0.0
        %1754 = vmatpush.msra.mxu0 0.0
        %1755 = vmatpush.msra.mxu0 0.0
        %1756 = vmatpush.msra.mxu0 0.0
        %1757 = vmatpush.msra.mxu0 0.0
        %1758 = vmatpush.msra.mxu0 %v1741
        %1759 = vmatmul.f32.gmra.mxu0 %v1739
        %v1760 = vpop.f32.mrf.mxu0
        %v1761 = vadd.f32 0.0, %v1760
        %1762 = vdwg.mxu0
        %v1763 = vpack.c.bf16 %v1761, %v1761
        %v1764 = vld [vmem:[%s6 + $0x20] sm:$0xf]
        %v1765 = vld [vmem:[%s6 + $0x24] sm:$0xf]
        %v1766 = vld [vmem:[%s6 + $0x28] sm:$0xf]
        %v1767 = vld [vmem:[%s6 + $0x2c] sm:$0xf]
        %v1772 = vunpack.c.l.b16 %v1764
        %v1773 = vunpack.c.l.b16 %v1765
        %v1774 = vunpack.c.l.b16 %v1766
        %v1775 = vunpack.c.l.b16 %v1767
        %v1776 = vpack.c.b16 %v1773, %v1772
        %v1777 = vpack.c.b16 %v1775, %v1774
        %v1781 = vsel %vm1499, %v1763, 0
        %1783 = vmatpush.bf16.msra.mxu0 0
        %1784 = vmatpush.bf16.msra.mxu0 0
        %1785 = vmatpush.bf16.msra.mxu0 0
        %1786 = vmatpush.bf16.msra.mxu0 0
        %1787 = vmatpush.bf16.msra.mxu0 0
        %1788 = vmatpush.bf16.msra.mxu0 0
        %1789 = vmatpush.bf16.msra.mxu0 %v1777
        %1790 = vmatpush.bf16.msra.mxu0 %v1776
        %1791 = vmatmul.bf16.gmra.mxu0 %v1781
        %v1792 = vpop.f32.mrf.mxu0
        %v1793 = vadd.f32 0.0, %v1792
        %v1794 = vpop.f32.mrf.mxu0
        %1795 = vdwg.mxu0
        %v1796 = vadd.f32 %v1694, %v1793
        %1797 = vrot.lane.b32.xlu0 %v1470, 32
        %v1798 = vpop.permute.xlu0 %1797
        %1799 = vrot.lane.b32.xlu0 %v1483, 32
        %v1800 = vpop.permute.xlu0 %1799
        %v1801 = vsel %vm1499, %v1798, 0
        %v1803 = vsel %vm1499, %v1800, 0
        %1805 = vmatpush.xpose.msra.mxu0 0.0
        %1806 = vmatpush.xpose.msra.mxu0 0.0
        %1807 = vmatpush.xpose.msra.mxu0 0.0
        %1808 = vmatpush.xpose.msra.mxu0 0.0
        %1809 = vmatpush.xpose.msra.mxu0 0.0
        %1810 = vmatpush.xpose.msra.mxu0 0.0
        %1811 = vmatpush.xpose.msra.mxu0 0.0
        %1812 = vmatpush.xpose.msra.mxu0 0.0
        %1813 = vmatpush.xpose.msra.mxu0 0.0
        %1814 = vmatpush.xpose.msra.mxu0 0.0
        %1815 = vmatpush.xpose.msra.mxu0 0.0
        %1816 = vmatpush.xpose.msra.mxu0 0.0
        %1817 = vmatpush.xpose.msra.mxu0 0.0
        %1818 = vmatpush.xpose.msra.mxu0 0.0
        %1819 = vmatpush.xpose.msra.mxu0 0.0
        %1820 = vmatpush.xpose.msra.mxu0 %v1803
        %1821 = vmatmul.f32.gmra.mxu0 %v1801
        %v1822 = vpop.f32.mrf.mxu0
        %v1823 = vadd.f32 0.0, %v1822
        %1824 = vdwg.mxu0
        %v1825 = vsel %vm1526, %v1823, -inf
        %1826 = vmax.xlane.f32.xlu0 %v1825
        %v1827 = vpop.xlane.xlu0 %1826
        %v1828 = vsub.f32 %v1823, %v1827
        %v1829 = vmul.f32 %v1828, 1.442695
        %v1830 = vpow.pop %v1829
        %v1831 = vsel %vm1526, %v1830, 0.0
        %1832 = vadd.xlane.f32.xlu0 %v1831
        %v1833 = vpop.xlane.xlu0 %1832
        %v1834 = vrcp.pop %v1833
        %v1835 = vmul.f32 %v1830, %v1834
        %1836 = vrot.lane.b32.xlu0 %v1496, 32
        %v1837 = vpop.permute.xlu0 %1836
        %v1839 = vsel %vm1538, %v1835, 0
        %v1841 = vsel %vm1261, %v1837, 0
        %1843 = vmatpush.msra.mxu0 0.0
        %1844 = vmatpush.msra.mxu0 0.0
        %1845 = vmatpush.msra.mxu0 0.0
        %1846 = vmatpush.msra.mxu0 0.0
        %1847 = vmatpush.msra.mxu0 0.0
        %1848 = vmatpush.msra.mxu0 0.0
        %1849 = vmatpush.msra.mxu0 0.0
        %1850 = vmatpush.msra.mxu0 0.0
        %1851 = vmatpush.msra.mxu0 0.0
        %1852 = vmatpush.msra.mxu0 0.0
        %1853 = vmatpush.msra.mxu0 0.0
        %1854 = vmatpush.msra.mxu0 0.0
        %1855 = vmatpush.msra.mxu0 0.0
        %1856 = vmatpush.msra.mxu0 0.0
        %1857 = vmatpush.msra.mxu0 0.0
        %1858 = vmatpush.msra.mxu0 %v1841
        %1859 = vmatmul.f32.gmra.mxu0 %v1839
        %v1860 = vpop.f32.mrf.mxu0
        %v1861 = vadd.f32 0.0, %v1860
        %1862 = vdwg.mxu0
        %v1863 = vpack.c.bf16 %v1861, %v1861
        %v1864 = vld [vmem:[%s6 + $0x30] sm:$0xf]
        %v1865 = vld [vmem:[%s6 + $0x34] sm:$0xf]
        %v1866 = vld [vmem:[%s6 + $0x38] sm:$0xf]
        %v1867 = vld [vmem:[%s6 + $0x3c] sm:$0xf]
        %v1872 = vunpack.c.l.b16 %v1864
        %v1873 = vunpack.c.l.b16 %v1865
        %v1874 = vunpack.c.l.b16 %v1866
        %v1875 = vunpack.c.l.b16 %v1867
        %v1876 = vpack.c.b16 %v1873, %v1872
        %v1877 = vpack.c.b16 %v1875, %v1874
        %v1881 = vsel %vm1499, %v1863, 0
        %1883 = vmatpush.bf16.msra.mxu0 0
        %1884 = vmatpush.bf16.msra.mxu0 0
        %1885 = vmatpush.bf16.msra.mxu0 0
        %1886 = vmatpush.bf16.msra.mxu0 0
        %1887 = vmatpush.bf16.msra.mxu0 0
        %1888 = vmatpush.bf16.msra.mxu0 0
        %1889 = vmatpush.bf16.msra.mxu0 %v1877
        %1890 = vmatpush.bf16.msra.mxu0 %v1876
        %1891 = vmatmul.bf16.gmra.mxu0 %v1881
        %v1892 = vpop.f32.mrf.mxu0
        %v1893 = vadd.f32 0.0, %v1892
        %v1894 = vpop.f32.mrf.mxu0
        %1895 = vdwg.mxu0
        %v1896 = vadd.f32 %v1796, %v1893
        %v1897 = vadd.f32 %v1258, %v1896
        %v1898 = vld [vmem:[%s7] sm:$0x1]
        %v1900 = vperm.slane %v1898, 0
        %v1902 = vadd.f32 %v1897, %v1900
        %v1903 = vld [vmem:[%s8] sm:$0x1]
        %v1904 = vld [vmem:[#allocation7] sm:$0x1]
        %v1905 = vsel %vm1261, %v1902, 0.0
        %1906 = vadd.xlane.f32.xlu0 %v1905
        %v1907 = vpop.xlane.xlu0 %1906
        %v1908 = vmul.f32 %v1907, %v1271
        %v1909 = vsub.f32 %v1902, %v1908
        %v1910 = vmul.f32 %v1909, %v1909
        %v1911 = vsel %vm1261, %v1910, 0.0
        %1912 = vadd.xlane.f32.xlu0 %v1911
        %v1913 = vpop.xlane.xlu0 %1912
        %v1914 = vmul.f32 %v1913, %v1271
        %v1915 = vadd.f32 %v1914, 1e-06
        %v1916 = vrsqrt.pop %v1915
        %v1917 = vmul.f32 %v1916, %v1915
        %v1918 = vmul.f32 %v1917, %v1916
        %v1919 = vmul.f32 0.5, %v1918
        %v1920 = vsub.f32 1.5, %v1919
        %v1921 = vmul.f32 %v1916, %v1920
        %vm1922 = vweird.f32 %v1915
        %vm1923 = vweird.f32 %v1916
        %vm1924 = vmor %vm1922, %vm1923
        %v1925 = vsel %vm1924, %v1916, %v1921
        %v1926 = vmul.f32 %v1909, %v1925
        %v1928 = vperm.slane %v1903, 0
        %v1930 = vmul.f32 %v1926, %v1928
        %v1932 = vperm.slane %v1904, 0
        %v1934 = vadd.f32 %v1930, %v1932
        %v1935 = vpack.c.bf16 %v1934, %v1934
        %v1936 = vld [vmem:[%s10] sm:$0xff]
        %v1937 = vld [vmem:[%s10 + $0x8] sm:$0xff]
        %v1938 = vld [vmem:[%s10 + $0x10] sm:$0xff]
        %v1939 = vld [vmem:[%s10 + $0x18] sm:$0xff]
        %v1940 = vld [vmem:[%s10 + $0x20] sm:$0xff]
        %v1941 = vld [vmem:[%s10 + $0x28] sm:$0xff]
        %v1942 = vld [vmem:[%s10 + $0x30] sm:$0xff]
        %v1943 = vld [vmem:[%s10 + $0x38] sm:$0xff]
        %v1944 = vld [vmem:[%s10 + $0x40] sm:$0xff]
        %v1945 = vld [vmem:[%s10 + $0x48] sm:$0xff]
        %v1946 = vld [vmem:[%s10 + $0x50] sm:$0xff]
        %v1947 = vld [vmem:[%s10 + $0x58] sm:$0xff]
        %v1948 = vld [vmem:[%s10 + $0x60] sm:$0xff]
        %v1949 = vld [vmem:[%s10 + $0x68] sm:$0xff]
        %v1950 = vld [vmem:[%s10 + $0x70] sm:$0xff]
        %v1951 = vld [vmem:[%s10 + $0x78] sm:$0xff]
        %v1952 = vld [vmem:[%s10 + $0x80] sm:$0xff]
        %v1953 = vld [vmem:[%s10 + $0x88] sm:$0xff]
        %v1954 = vld [vmem:[%s10 + $0x90] sm:$0xff]
        %v1955 = vld [vmem:[%s10 + $0x98] sm:$0xff]
        %v1956 = vld [vmem:[%s10 + $0xa0] sm:$0xff]
        %v1957 = vld [vmem:[%s10 + $0xa8] sm:$0xff]
        %v1958 = vld [vmem:[%s10 + $0xb0] sm:$0xff]
        %v1959 = vld [vmem:[%s10 + $0xb8] sm:$0xff]
        %v1960 = vld [vmem:[%s10 + $0xc0] sm:$0xff]
        %v1961 = vld [vmem:[%s10 + $0xc8] sm:$0xff]
        %v1962 = vld [vmem:[%s10 + $0xd0] sm:$0xff]
        %v1963 = vld [vmem:[%s10 + $0xd8] sm:$0xff]
        %v1964 = vld [vmem:[%s10 + $0xe0] sm:$0xff]
        %v1965 = vld [vmem:[%s10 + $0xe8] sm:$0xff]
        %v1966 = vld [vmem:[%s10 + $0xf0] sm:$0xff]
        %v1967 = vld [vmem:[%s10 + $0xf8] sm:$0xff]
        %v1968 = vld [vmem:[%s11] sm:$0xf]
        %v1970 = vperm.slane %v1968, 0
        %v1971 = vperm.slane %v1968, 1
        %v1972 = vperm.slane %v1968, 2
        %v1973 = vperm.slane %v1968, 3
        %v2010 = vunpack.c.l.b16 %v1936
        %v2011 = vunpack.c.h.b16 %v1936
        %v2012 = vunpack.c.l.b16 %v1937
        %v2013 = vunpack.c.h.b16 %v1937
        %v2014 = vunpack.c.l.b16 %v1938
        %v2015 = vunpack.c.h.b16 %v1938
        %v2016 = vunpack.c.l.b16 %v1939
        %v2017 = vunpack.c.h.b16 %v1939
        %v2018 = vunpack.c.l.b16 %v1940
        %v2019 = vunpack.c.h.b16 %v1940
        %v2020 = vunpack.c.l.b16 %v1941
        %v2021 = vunpack.c.h.b16 %v1941
        %v2022 = vunpack.c.l.b16 %v1942
        %v2023 = vunpack.c.h.b16 %v1942
        %v2024 = vunpack.c.l.b16 %v1943
        %v2025 = vunpack.c.h.b16 %v1943
        %v2026 = vunpack.c.l.b16 %v1944
        %v2027 = vunpack.c.h.b16 %v1944
        %v2028 = vunpack.c.l.b16 %v1945
        %v2029 = vunpack.c.h.b16 %v1945
        %v2030 = vunpack.c.l.b16 %v1946
        %v2031 = vunpack.c.h.b16 %v1946
        %v2032 = vunpack.c.l.b16 %v1947
        %v2033 = vunpack.c.h.b16 %v1947
        %v2034 = vunpack.c.l.b16 %v1948
        %v2035 = vunpack.c.h.b16 %v1948
        %v2036 = vunpack.c.l.b16 %v1949
        %v2037 = vunpack.c.h.b16 %v1949
        %v2038 = vunpack.c.l.b16 %v1950
        %v2039 = vunpack.c.h.b16 %v1950
        %v2040 = vunpack.c.l.b16 %v1951
        %v2041 = vunpack.c.h.b16 %v1951
        %v2042 = vunpack.c.l.b16 %v1952
        %v2043 = vunpack.c.h.b16 %v1952
        %v2044 = vunpack.c.l.b16 %v1953
        %v2045 = vunpack.c.h.b16 %v1953
        %v2046 = vunpack.c.l.b16 %v1954
        %v2047 = vunpack.c.h.b16 %v1954
        %v2048 = vunpack.c.l.b16 %v1955
        %v2049 = vunpack.c.h.b16 %v1955
        %v2050 = vunpack.c.l.b16 %v1956
        %v2051 = vunpack.c.h.b16 %v1956
        %v2052 = vunpack.c.l.b16 %v1957
        %v2053 = vunpack.c.h.b16 %v1957
        %v2054 = vunpack.c.l.b16 %v1958
        %v2055 = vunpack.c.h.b16 %v1958
        %v2056 = vunpack.c.l.b16 %v1959
        %v2057 = vunpack.c.h.b16 %v1959
        %v2058 = vunpack.c.l.b16 %v1960
        %v2059 = vunpack.c.h.b16 %v1960
        %v2060 = vunpack.c.l.b16 %v1961
        %v2061 = vunpack.c.h.b16 %v1961
        %v2062 = vunpack.c.l.b16 %v1962
        %v2063 = vunpack.c.h.b16 %v1962
        %v2064 = vunpack.c.l.b16 %v1963
        %v2065 = vunpack.c.h.b16 %v1963
        %v2066 = vunpack.c.l.b16 %v1964
        %v2067 = vunpack.c.h.b16 %v1964
        %v2068 = vunpack.c.l.b16 %v1965
        %v2069 = vunpack.c.h.b16 %v1965
        %v2070 = vunpack.c.l.b16 %v1966
        %v2071 = vunpack.c.h.b16 %v1966
        %v2072 = vunpack.c.l.b16 %v1967
        %v2073 = vunpack.c.h.b16 %v1967
        %v2074 = vpack.c.b16 %v2014, %v2010
        %v2075 = vpack.c.b16 %v2015, %v2011
        %v2076 = vpack.c.b16 %v2016, %v2012
        %v2077 = vpack.c.b16 %v2017, %v2013
        %v2078 = vpack.c.b16 %v2022, %v2018
        %v2079 = vpack.c.b16 %v2023, %v2019
        %v2080 = vpack.c.b16 %v2024, %v2020
        %v2081 = vpack.c.b16 %v2025, %v2021
        %v2082 = vpack.c.b16 %v2030, %v2026
        %v2083 = vpack.c.b16 %v2031, %v2027
        %v2084 = vpack.c.b16 %v2032, %v2028
        %v2085 = vpack.c.b16 %v2033, %v2029
        %v2086 = vpack.c.b16 %v2038, %v2034
        %v2087 = vpack.c.b16 %v2039, %v2035
        %v2088 = vpack.c.b16 %v2040, %v2036
        %v2089 = vpack.c.b16 %v2041, %v2037
        %v2090 = vpack.c.b16 %v2046, %v2042
        %v2091 = vpack.c.b16 %v2047, %v2043
        %v2092 = vpack.c.b16 %v2048, %v2044
        %v2093 = vpack.c.b16 %v2049, %v2045
        %v2094 = vpack.c.b16 %v2054, %v2050
        %v2095 = vpack.c.b16 %v2055, %v2051
        %v2096 = vpack.c.b16 %v2056, %v2052
        %v2097 = vpack.c.b16 %v2057, %v2053
        %v2098 = vpack.c.b16 %v2062, %v2058
        %v2099 = vpack.c.b16 %v2063, %v2059
        %v2100 = vpack.c.b16 %v2064, %v2060
        %v2101 = vpack.c.b16 %v2065, %v2061
        %v2102 = vpack.c.b16 %v2070, %v2066
        %v2103 = vpack.c.b16 %v2071, %v2067
        %v2104 = vpack.c.b16 %v2072, %v2068
        %v2105 = vpack.c.b16 %v2073, %v2069
        %2138 = vmatpush.bf16.msra.mxu0 %v2102
        %2139 = vmatpush.bf16.msra.mxu0 %v2098
        %2140 = vmatpush.bf16.msra.mxu0 %v2094
        %2141 = vmatpush.bf16.msra.mxu0 %v2090
        %2142 = vmatpush.bf16.msra.mxu0 %v2086
        %2143 = vmatpush.bf16.msra.mxu0 %v2082
        %2144 = vmatpush.bf16.msra.mxu0 %v2078
        %2145 = vmatpush.bf16.msra.mxu0 %v2074
        %2146 = vmatmul.bf16.gmra.mxu0 %v1935
        %v2147 = vpop.f32.mrf.mxu0
        %v2148 = vadd.f32 %v1970, %v2147
        %v2149 = vpop.f32.mrf.mxu0
        %2150 = vdwg.mxu0
        %2151 = vmatpush.bf16.msra.mxu0 %v2103
        %2152 = vmatpush.bf16.msra.mxu0 %v2099
        %2153 = vmatpush.bf16.msra.mxu0 %v2095
        %2154 = vmatpush.bf16.msra.mxu0 %v2091
        %2155 = vmatpush.bf16.msra.mxu0 %v2087
        %2156 = vmatpush.bf16.msra.mxu0 %v2083
        %2157 = vmatpush.bf16.msra.mxu0 %v2079
        %2158 = vmatpush.bf16.msra.mxu0 %v2075
        %2159 = vmatmul.bf16.gmra.mxu0 %v1935
        %v2160 = vpop.f32.mrf.mxu0
        %v2161 = vadd.f32 %v1971, %v2160
        %v2162 = vpop.f32.mrf.mxu0
        %2163 = vdwg.mxu0
        %2164 = vmatpush.bf16.msra.mxu0 %v2104
        %2165 = vmatpush.bf16.msra.mxu0 %v2100
        %2166 = vmatpush.bf16.msra.mxu0 %v2096
        %2167 = vmatpush.bf16.msra.mxu0 %v2092
        %2168 = vmatpush.bf16.msra.mxu0 %v2088
        %2169 = vmatpush.bf16.msra.mxu0 %v2084
        %2170 = vmatpush.bf16.msra.mxu0 %v2080
        %2171 = vmatpush.bf16.msra.mxu0 %v2076
        %2172 = vmatmul.bf16.gmra.mxu0 %v1935
        %v2173 = vpop.f32.mrf.mxu0
        %v2174 = vadd.f32 %v1972, %v2173
        %v2175 = vpop.f32.mrf.mxu0
        %2176 = vdwg.mxu0
        %2177 = vmatpush.bf16.msra.mxu0 %v2105
        %2178 = vmatpush.bf16.msra.mxu0 %v2101
        %2179 = vmatpush.bf16.msra.mxu0 %v2097
        %2180 = vmatpush.bf16.msra.mxu0 %v2093
        %2181 = vmatpush.bf16.msra.mxu0 %v2089
        %2182 = vmatpush.bf16.msra.mxu0 %v2085
        %2183 = vmatpush.bf16.msra.mxu0 %v2081
        %2184 = vmatpush.bf16.msra.mxu0 %v2077
        %2185 = vmatmul.bf16.gmra.mxu0 %v1935
        %v2186 = vpop.f32.mrf.mxu0
        %v2187 = vadd.f32 %v1973, %v2186
        %v2188 = vpop.f32.mrf.mxu0
        %2189 = vdwg.mxu0
        %v2190 = vmul.f32 %v2148, 0.5
        %v2191 = vmul.f32 %v2161, 0.5
        %v2192 = vmul.f32 %v2174, 0.5
        %v2193 = vmul.f32 %v2187, 0.5
        %v2194 = vmul.f32 %v2148, 0.044715
        %v2195 = vmul.f32 %v2161, 0.044715
        %v2196 = vmul.f32 %v2174, 0.044715
        %v2197 = vmul.f32 %v2187, 0.044715
        %v2198 = vmul.f32 %v2194, %v2148
        %v2199 = vmul.f32 %v2195, %v2161
        %v2200 = vmul.f32 %v2196, %v2174
        %v2201 = vmul.f32 %v2197, %v2187
        %v2202 = vmul.f32 %v2198, %v2148
        %v2203 = vmul.f32 %v2199, %v2161
        %v2204 = vmul.f32 %v2200, %v2174
        %v2205 = vmul.f32 %v2201, %v2187
        %v2206 = vadd.f32 %v2148, %v2202
        %v2207 = vadd.f32 %v2161, %v2203
        %v2208 = vadd.f32 %v2174, %v2204
        %v2209 = vadd.f32 %v2187, %v2205
        %v2210 = vmul.f32 %v2206, 0.7978846
        %v2211 = vmul.f32 %v2207, 0.7978846
        %v2212 = vmul.f32 %v2208, 0.7978846
        %v2213 = vmul.f32 %v2209, 0.7978846
        %v2214 = vtanh.pop %v2210
        %v2215 = vtanh.pop %v2211
        %v2216 = vtanh.pop %v2212
        %v2217 = vtanh.pop %v2213
        %v2218 = vadd.f32 %v2214, 1.0
        %v2219 = vadd.f32 %v2215, 1.0
        %v2220 = vadd.f32 %v2216, 1.0
        %v2221 = vadd.f32 %v2217, 1.0
        %v2222 = vmul.f32 %v2190, %v2218
        %v2223 = vmul.f32 %v2191, %v2219
        %v2224 = vmul.f32 %v2192, %v2220
        %v2225 = vmul.f32 %v2193, %v2221
        %v2226 = vpack.c.bf16 %v2222, %v2222
        %v2227 = vpack.c.bf16 %v2223, %v2223
        %v2228 = vpack.c.bf16 %v2224, %v2224
        %v2229 = vpack.c.bf16 %v2225, %v2225
        %v2230 = vld [vmem:[%s12] sm:$0xf]
        %v2231 = vld [vmem:[%s12 + $0x4] sm:$0xf]
        %v2232 = vld [vmem:[%s12 + $0x8] sm:$0xf]
        %v2233 = vld [vmem:[%s12 + $0xc] sm:$0xf]
        %v2234 = vld [vmem:[%s12 + $0x10] sm:$0xf]
        %v2235 = vld [vmem:[%s12 + $0x14] sm:$0xf]
        %v2236 = vld [vmem:[%s12 + $0x18] sm:$0xf]
        %v2237 = vld [vmem:[%s12 + $0x1c] sm:$0xf]
        %v2238 = vld [vmem:[%s12 + $0x20] sm:$0xf]
        %v2239 = vld [vmem:[%s12 + $0x24] sm:$0xf]
        %v2240 = vld [vmem:[%s12 + $0x28] sm:$0xf]
        %v2241 = vld [vmem:[%s12 + $0x2c] sm:$0xf]
        %v2242 = vld [vmem:[%s12 + $0x30] sm:$0xf]
        %v2243 = vld [vmem:[%s12 + $0x34] sm:$0xf]
        %v2244 = vld [vmem:[%s12 + $0x38] sm:$0xf]
        %v2245 = vld [vmem:[%s12 + $0x3c] sm:$0xf]
        %v2246 = vld [vmem:[%s12 + $0x40] sm:$0xf]
        %v2247 = vld [vmem:[%s12 + $0x44] sm:$0xf]
        %v2248 = vld [vmem:[%s12 + $0x48] sm:$0xf]
        %v2249 = vld [vmem:[%s12 + $0x4c] sm:$0xf]
        %v2250 = vld [vmem:[%s12 + $0x50] sm:$0xf]
        %v2251 = vld [vmem:[%s12 + $0x54] sm:$0xf]
        %v2252 = vld [vmem:[%s12 + $0x58] sm:$0xf]
        %v2253 = vld [vmem:[%s12 + $0x5c] sm:$0xf]
        %v2254 = vld [vmem:[%s12 + $0x60] sm:$0xf]
        %v2255 = vld [vmem:[%s12 + $0x64] sm:$0xf]
        %v2256 = vld [vmem:[%s12 + $0x68] sm:$0xf]
        %v2257 = vld [vmem:[%s12 + $0x6c] sm:$0xf]
        %v2258 = vld [vmem:[%s12 + $0x70] sm:$0xf]
        %v2259 = vld [vmem:[%s12 + $0x74] sm:$0xf]
        %v2260 = vld [vmem:[%s12 + $0x78] sm:$0xf]
        %v2261 = vld [vmem:[%s12 + $0x7c] sm:$0xf]
        %v2262 = vld [vmem:[%s12 + $0x80] sm:$0xf]
        %v2263 = vld [vmem:[%s12 + $0x84] sm:$0xf]
        %v2264 = vld [vmem:[%s12 + $0x88] sm:$0xf]
        %v2265 = vld [vmem:[%s12 + $0x8c] sm:$0xf]
        %v2266 = vld [vmem:[%s12 + $0x90] sm:$0xf]
        %v2267 = vld [vmem:[%s12 + $0x94] sm:$0xf]
        %v2268 = vld [vmem:[%s12 + $0x98] sm:$0xf]
        %v2269 = vld [vmem:[%s12 + $0x9c] sm:$0xf]
        %v2270 = vld [vmem:[%s12 + $0xa0] sm:$0xf]
        %v2271 = vld [vmem:[%s12 + $0xa4] sm:$0xf]
        %v2272 = vld [vmem:[%s12 + $0xa8] sm:$0xf]
        %v2273 = vld [vmem:[%s12 + $0xac] sm:$0xf]
        %v2274 = vld [vmem:[%s12 + $0xb0] sm:$0xf]
        %v2275 = vld [vmem:[%s12 + $0xb4] sm:$0xf]
        %v2276 = vld [vmem:[%s12 + $0xb8] sm:$0xf]
        %v2277 = vld [vmem:[%s12 + $0xbc] sm:$0xf]
        %v2278 = vld [vmem:[%s12 + $0xc0] sm:$0xf]
        %v2279 = vld [vmem:[%s12 + $0xc4] sm:$0xf]
        %v2280 = vld [vmem:[%s12 + $0xc8] sm:$0xf]
        %v2281 = vld [vmem:[%s12 + $0xcc] sm:$0xf]
        %v2282 = vld [vmem:[%s12 + $0xd0] sm:$0xf]
        %v2283 = vld [vmem:[%s12 + $0xd4] sm:$0xf]
        %v2284 = vld [vmem:[%s12 + $0xd8] sm:$0xf]
        %v2285 = vld [vmem:[%s12 + $0xdc] sm:$0xf]
        %v2286 = vld [vmem:[%s12 + $0xe0] sm:$0xf]
        %v2287 = vld [vmem:[%s12 + $0xe4] sm:$0xf]
        %v2288 = vld [vmem:[%s12 + $0xe8] sm:$0xf]
        %v2289 = vld [vmem:[%s12 + $0xec] sm:$0xf]
        %v2290 = vld [vmem:[%s12 + $0xf0] sm:$0xf]
        %v2291 = vld [vmem:[%s12 + $0xf4] sm:$0xf]
        %v2292 = vld [vmem:[%s12 + $0xf8] sm:$0xf]
        %v2293 = vld [vmem:[%s12 + $0xfc] sm:$0xf]
        %v2294 = vld [vmem:[#allocation8] sm:$0x1]
        %v2296 = vperm.slane %v2294, 0
        %v2362 = vunpack.c.l.b16 %v2230
        %v2363 = vunpack.c.l.b16 %v2231
        %v2364 = vunpack.c.l.b16 %v2232
        %v2365 = vunpack.c.l.b16 %v2233
        %v2366 = vunpack.c.l.b16 %v2234
        %v2367 = vunpack.c.l.b16 %v2235
        %v2368 = vunpack.c.l.b16 %v2236
        %v2369 = vunpack.c.l.b16 %v2237
        %v2370 = vunpack.c.l.b16 %v2238
        %v2371 = vunpack.c.l.b16 %v2239
        %v2372 = vunpack.c.l.b16 %v2240
        %v2373 = vunpack.c.l.b16 %v2241
        %v2374 = vunpack.c.l.b16 %v2242
        %v2375 = vunpack.c.l.b16 %v2243
        %v2376 = vunpack.c.l.b16 %v2244
        %v2377 = vunpack.c.l.b16 %v2245
        %v2378 = vunpack.c.l.b16 %v2246
        %v2379 = vunpack.c.l.b16 %v2247
        %v2380 = vunpack.c.l.b16 %v2248
        %v2381 = vunpack.c.l.b16 %v2249
        %v2382 = vunpack.c.l.b16 %v2250
        %v2383 = vunpack.c.l.b16 %v2251
        %v2384 = vunpack.c.l.b16 %v2252
        %v2385 = vunpack.c.l.b16 %v2253
        %v2386 = vunpack.c.l.b16 %v2254
        %v2387 = vunpack.c.l.b16 %v2255
        %v2388 = vunpack.c.l.b16 %v2256
        %v2389 = vunpack.c.l.b16 %v2257
        %v2390 = vunpack.c.l.b16 %v2258
        %v2391 = vunpack.c.l.b16 %v2259
        %v2392 = vunpack.c.l.b16 %v2260
        %v2393 = vunpack.c.l.b16 %v2261
        %v2394 = vunpack.c.l.b16 %v2262
        %v2395 = vunpack.c.l.b16 %v2263
        %v2396 = vunpack.c.l.b16 %v2264
        %v2397 = vunpack.c.l.b16 %v2265
        %v2398 = vunpack.c.l.b16 %v2266
        %v2399 = vunpack.c.l.b16 %v2267
        %v2400 = vunpack.c.l.b16 %v2268
        %v2401 = vunpack.c.l.b16 %v2269
        %v2402 = vunpack.c.l.b16 %v2270
        %v2403 = vunpack.c.l.b16 %v2271
        %v2404 = vunpack.c.l.b16 %v2272
        %v2405 = vunpack.c.l.b16 %v2273
        %v2406 = vunpack.c.l.b16 %v2274
        %v2407 = vunpack.c.l.b16 %v2275
        %v2408 = vunpack.c.l.b16 %v2276
        %v2409 = vunpack.c.l.b16 %v2277
        %v2410 = vunpack.c.l.b16 %v2278
        %v2411 = vunpack.c.l.b16 %v2279
        %v2412 = vunpack.c.l.b16 %v2280
        %v2413 = vunpack.c.l.b16 %v2281
        %v2414 = vunpack.c.l.b16 %v2282
        %v2415 = vunpack.c.l.b16 %v2283
        %v2416 = vunpack.c.l.b16 %v2284
        %v2417 = vunpack.c.l.b16 %v2285
        %v2418 = vunpack.c.l.b16 %v2286
        %v2419 = vunpack.c.l.b16 %v2287
        %v2420 = vunpack.c.l.b16 %v2288
        %v2421 = vunpack.c.l.b16 %v2289
        %v2422 = vunpack.c.l.b16 %v2290
        %v2423 = vunpack.c.l.b16 %v2291
        %v2424 = vunpack.c.l.b16 %v2292
        %v2425 = vunpack.c.l.b16 %v2293
        %v2426 = vpack.c.b16 %v2363, %v2362
        %v2427 = vpack.c.b16 %v2365, %v2364
        %v2428 = vpack.c.b16 %v2367, %v2366
        %v2429 = vpack.c.b16 %v2369, %v2368
        %v2430 = vpack.c.b16 %v2371, %v2370
        %v2431 = vpack.c.b16 %v2373, %v2372
        %v2432 = vpack.c.b16 %v2375, %v2374
        %v2433 = vpack.c.b16 %v2377, %v2376
        %v2434 = vpack.c.b16 %v2379, %v2378
        %v2435 = vpack.c.b16 %v2381, %v2380
        %v2436 = vpack.c.b16 %v2383, %v2382
        %v2437 = vpack.c.b16 %v2385, %v2384
        %v2438 = vpack.c.b16 %v2387, %v2386
        %v2439 = vpack.c.b16 %v2389, %v2388
        %v2440 = vpack.c.b16 %v2391, %v2390
        %v2441 = vpack.c.b16 %v2393, %v2392
        %v2442 = vpack.c.b16 %v2395, %v2394
        %v2443 = vpack.c.b16 %v2397, %v2396
        %v2444 = vpack.c.b16 %v2399, %v2398
        %v2445 = vpack.c.b16 %v2401, %v2400
        %v2446 = vpack.c.b16 %v2403, %v2402
        %v2447 = vpack.c.b16 %v2405, %v2404
        %v2448 = vpack.c.b16 %v2407, %v2406
        %v2449 = vpack.c.b16 %v2409, %v2408
        %v2450 = vpack.c.b16 %v2411, %v2410
        %v2451 = vpack.c.b16 %v2413, %v2412
        %v2452 = vpack.c.b16 %v2415, %v2414
        %v2453 = vpack.c.b16 %v2417, %v2416
        %v2454 = vpack.c.b16 %v2419, %v2418
        %v2455 = vpack.c.b16 %v2421, %v2420
        %v2456 = vpack.c.b16 %v2423, %v2422
        %v2457 = vpack.c.b16 %v2425, %v2424
        %2490 = vmatpush.bf16.msra.mxu0 %v2433
        %2491 = vmatpush.bf16.msra.mxu0 %v2432
        %2492 = vmatpush.bf16.msra.mxu0 %v2431
        %2493 = vmatpush.bf16.msra.mxu0 %v2430
        %2494 = vmatpush.bf16.msra.mxu0 %v2429
        %2495 = vmatpush.bf16.msra.mxu0 %v2428
        %2496 = vmatpush.bf16.msra.mxu0 %v2427
        %2497 = vmatpush.bf16.msra.mxu0 %v2426
        %2498 = vmatmul.bf16.gmra.mxu0 %v2226
        %v2499 = vpop.f32.mrf.mxu0
        %v2500 = vadd.f32 %v2296, %v2499
        %v2501 = vpop.f32.mrf.mxu0
        %2502 = vdwg.mxu0
        %2503 = vmatpush.bf16.msra.mxu0 %v2441
        %2504 = vmatpush.bf16.msra.mxu0 %v2440
        %2505 = vmatpush.bf16.msra.mxu0 %v2439
        %2506 = vmatpush.bf16.msra.mxu0 %v2438
        %2507 = vmatpush.bf16.msra.mxu0 %v2437
        %2508 = vmatpush.bf16.msra.mxu0 %v2436
        %2509 = vmatpush.bf16.msra.mxu0 %v2435
        %2510 = vmatpush.bf16.msra.mxu0 %v2434
        %2511 = vmatmul.bf16.gmra.mxu0 %v2227
        %v2512 = vpop.f32.mrf.mxu0
        %v2513 = vadd.f32 %v2500, %v2512
        %v2514 = vpop.f32.mrf.mxu0
        %2515 = vdwg.mxu0
        %2516 = vmatpush.bf16.msra.mxu0 %v2449
        %2517 = vmatpush.bf16.msra.mxu0 %v2448
        %2518 = vmatpush.bf16.msra.mxu0 %v2447
        %2519 = vmatpush.bf16.msra.mxu0 %v2446
        %2520 = vmatpush.bf16.msra.mxu0 %v2445
        %2521 = vmatpush.bf16.msra.mxu0 %v2444
        %2522 = vmatpush.bf16.msra.mxu0 %v2443
        %2523 = vmatpush.bf16.msra.mxu0 %v2442
        %2524 = vmatmul.bf16.gmra.mxu0 %v2228
        %v2525 = vpop.f32.mrf.mxu0
        %v2526 = vadd.f32 %v2513, %v2525
        %v2527 = vpop.f32.mrf.mxu0
        %2528 = vdwg.mxu0
        %2529 = vmatpush.bf16.msra.mxu0 %v2457
        %2530 = vmatpush.bf16.msra.mxu0 %v2456
        %2531 = vmatpush.bf16.msra.mxu0 %v2455
        %2532 = vmatpush.bf16.msra.mxu0 %v2454
        %2533 = vmatpush.bf16.msra.mxu0 %v2453
        %2534 = vmatpush.bf16.msra.mxu0 %v2452
        %2535 = vmatpush.bf16.msra.mxu0 %v2451
        %2536 = vmatpush.bf16.msra.mxu0 %v2450
        %2537 = vmatmul.bf16.gmra.mxu0 %v2229
        %v2538 = vpop.f32.mrf.mxu0
        %v2539 = vadd.f32 %v2526, %v2538
        %v2540 = vpop.f32.mrf.mxu0
        %2541 = vdwg.mxu0
        %v2542 = vadd.f32 %v1902, %v2539
        %s2543 = scalar_lea.vmem %s3, 1
        %v2544 = vld [vmem:[%s2543] sm:$0x1]
        %s2545 = scalar_lea.vmem %s4, 1
        %v2546 = vld [vmem:[%s2545] sm:$0x1]
        %v2547 = vsel %vm1261, %v2542, 0.0
        %2548 = vadd.xlane.f32.xlu0 %v2547
        %v2549 = vpop.xlane.xlu0 %2548
        %v2550 = vmul.f32 %v2549, %v1271
        %v2551 = vsub.f32 %v2542, %v2550
        %v2552 = vmul.f32 %v2551, %v2551
        %v2553 = vsel %vm1261, %v2552, 0.0
        %2554 = vadd.xlane.f32.xlu0 %v2553
        %v2555 = vpop.xlane.xlu0 %2554
        %v2556 = vmul.f32 %v2555, %v1271
        %v2557 = vadd.f32 %v2556, 1e-06
        %v2558 = vrsqrt.pop %v2557
        %v2559 = vmul.f32 %v2558, %v2557
        %v2560 = vmul.f32 %v2559, %v2558
        %v2561 = vmul.f32 0.5, %v2560
        %v2562 = vsub.f32 1.5, %v2561
        %v2563 = vmul.f32 %v2558, %v2562
        %vm2564 = vweird.f32 %v2557
        %vm2565 = vweird.f32 %v2558
        %vm2566 = vmor %vm2564, %vm2565
        %v2567 = vsel %vm2566, %v2558, %v2563
        %v2568 = vmul.f32 %v2551, %v2567
        %v2570 = vperm.slane %v2544, 0
        %v2572 = vmul.f32 %v2568, %v2570
        %v2574 = vperm.slane %v2546, 0
        %v2576 = vadd.f32 %v2572, %v2574
        %v2577 = vpack.c.bf16 %v2576, %v2576
        %s2578 = scalar_lea.vmem [#allocation5], 192
        %v2579 = vld [vmem:[%s2578] sm:$0xff]
        %v2580 = vld [vmem:[%s2578 + $0x8] sm:$0xf]
        %v2581 = vld [vmem:[%s2578 + $0xc] sm:$0xff]
        %v2582 = vld [vmem:[%s2578 + $0x14] sm:$0xf]
        %v2583 = vld [vmem:[%s2578 + $0x18] sm:$0xff]
        %v2584 = vld [vmem:[%s2578 + $0x20] sm:$0xf]
        %v2585 = vld [vmem:[%s2578 + $0x24] sm:$0xff]
        %v2586 = vld [vmem:[%s2578 + $0x2c] sm:$0xf]
        %v2587 = vld [vmem:[%s2578 + $0x30] sm:$0xff]
        %v2588 = vld [vmem:[%s2578 + $0x38] sm:$0xf]
        %v2589 = vld [vmem:[%s2578 + $0x3c] sm:$0xff]
        %v2590 = vld [vmem:[%s2578 + $0x44] sm:$0xf]
        %v2591 = vld [vmem:[%s2578 + $0x48] sm:$0xff]
        %v2592 = vld [vmem:[%s2578 + $0x50] sm:$0xf]
        %v2593 = vld [vmem:[%s2578 + $0x54] sm:$0xff]
        %v2594 = vld [vmem:[%s2578 + $0x5c] sm:$0xf]
        %v2595 = vld [vmem:[%s2578 + $0x60] sm:$0xff]
        %v2596 = vld [vmem:[%s2578 + $0x68] sm:$0xf]
        %v2597 = vld [vmem:[%s2578 + $0x6c] sm:$0xff]
        %v2598 = vld [vmem:[%s2578 + $0x74] sm:$0xf]
        %v2599 = vld [vmem:[%s2578 + $0x78] sm:$0xff]
        %v2600 = vld [vmem:[%s2578 + $0x80] sm:$0xf]
        %v2601 = vld [vmem:[%s2578 + $0x84] sm:$0xff]
        %v2602 = vld [vmem:[%s2578 + $0x8c] sm:$0xf]
        %v2603 = vld [vmem:[%s2578 + $0x90] sm:$0xff]
        %v2604 = vld [vmem:[%s2578 + $0x98] sm:$0xf]
        %v2605 = vld [vmem:[%s2578 + $0x9c] sm:$0xff]
        %v2606 = vld [vmem:[%s2578 + $0xa4] sm:$0xf]
        %v2607 = vld [vmem:[%s2578 + $0xa8] sm:$0xff]
        %v2608 = vld [vmem:[%s2578 + $0xb0] sm:$0xf]
        %v2609 = vld [vmem:[%s2578 + $0xb4] sm:$0xff]
        %v2610 = vld [vmem:[%s2578 + $0xbc] sm:$0xf]
        %v2643 = vunpack.c.l.b16 %v2579
        %v2644 = vunpack.c.h.b16 %v2579
        %v2645 = vunpack.c.l.b16 %v2580
        %v2646 = vunpack.c.l.b16 %v2581
        %v2647 = vunpack.c.h.b16 %v2581
        %v2648 = vunpack.c.l.b16 %v2582
        %v2649 = vunpack.c.l.b16 %v2583
        %v2650 = vunpack.c.h.b16 %v2583
        %v2651 = vunpack.c.l.b16 %v2584
        %v2652 = vunpack.c.l.b16 %v2585
        %v2653 = vunpack.c.h.b16 %v2585
        %v2654 = vunpack.c.l.b16 %v2586
        %v2655 = vunpack.c.l.b16 %v2587
        %v2656 = vunpack.c.h.b16 %v2587
        %v2657 = vunpack.c.l.b16 %v2588
        %v2658 = vunpack.c.l.b16 %v2589
        %v2659 = vunpack.c.h.b16 %v2589
        %v2660 = vunpack.c.l.b16 %v2590
        %v2661 = vunpack.c.l.b16 %v2591
        %v2662 = vunpack.c.h.b16 %v2591
        %v2663 = vunpack.c.l.b16 %v2592
        %v2664 = vunpack.c.l.b16 %v2593
        %v2665 = vunpack.c.h.b16 %v2593
        %v2666 = vunpack.c.l.b16 %v2594
        %v2667 = vunpack.c.l.b16 %v2595
        %v2668 = vunpack.c.h.b16 %v2595
        %v2669 = vunpack.c.l.b16 %v2596
        %v2670 = vunpack.c.l.b16 %v2597
        %v2671 = vunpack.c.h.b16 %v2597
        %v2672 = vunpack.c.l.b16 %v2598
        %v2673 = vunpack.c.l.b16 %v2599
        %v2674 = vunpack.c.h.b16 %v2599
        %v2675 = vunpack.c.l.b16 %v2600
        %v2676 = vunpack.c.l.b16 %v2601
        %v2677 = vunpack.c.h.b16 %v2601
        %v2678 = vunpack.c.l.b16 %v2602
        %v2679 = vunpack.c.l.b16 %v2603
        %v2680 = vunpack.c.h.b16 %v2603
        %v2681 = vunpack.c.l.b16 %v2604
        %v2682 = vunpack.c.l.b16 %v2605
        %v2683 = vunpack.c.h.b16 %v2605
        %v2684 = vunpack.c.l.b16 %v2606
        %v2685 = vunpack.c.l.b16 %v2607
        %v2686 = vunpack.c.h.b16 %v2607
        %v2687 = vunpack.c.l.b16 %v2608
        %v2688 = vunpack.c.l.b16 %v2609
        %v2689 = vunpack.c.h.b16 %v2609
        %v2690 = vunpack.c.l.b16 %v2610
        %v2691 = vpack.c.b16 %v2646, %v2643
        %v2692 = vpack.c.b16 %v2647, %v2644
        %v2693 = vpack.c.b16 %v2648, %v2645
        %v2694 = vpack.c.b16 %v2652, %v2649
        %v2695 = vpack.c.b16 %v2653, %v2650
        %v2696 = vpack.c.b16 %v2654, %v2651
        %v2697 = vpack.c.b16 %v2658, %v2655
        %v2698 = vpack.c.b16 %v2659, %v2656
        %v2699 = vpack.c.b16 %v2660, %v2657
        %v2700 = vpack.c.b16 %v2664, %v2661
        %v2701 = vpack.c.b16 %v2665, %v2662
        %v2702 = vpack.c.b16 %v2666, %v2663
        %v2703 = vpack.c.b16 %v2670, %v2667
        %v2704 = vpack.c.b16 %v2671, %v2668
        %v2705 = vpack.c.b16 %v2672, %v2669
        %v2706 = vpack.c.b16 %v2676, %v2673
        %v2707 = vpack.c.b16 %v2677, %v2674
        %v2708 = vpack.c.b16 %v2678, %v2675
        %v2709 = vpack.c.b16 %v2682, %v2679
        %v2710 = vpack.c.b16 %v2683, %v2680
        %v2711 = vpack.c.b16 %v2684, %v2681
        %v2712 = vpack.c.b16 %v2688, %v2685
        %v2713 = vpack.c.b16 %v2689, %v2686
        %v2714 = vpack.c.b16 %v2690, %v2687
        %2739 = vmatpush.bf16.msra.mxu0 %v2712
        %2740 = vmatpush.bf16.msra.mxu0 %v2709
        %2741 = vmatpush.bf16.msra.mxu0 %v2706
        %2742 = vmatpush.bf16.msra.mxu0 %v2703
        %2743 = vmatpush.bf16.msra.mxu0 %v2700
        %2744 = vmatpush.bf16.msra.mxu0 %v2697
        %2745 = vmatpush.bf16.msra.mxu0 %v2694
        %2746 = vmatpush.bf16.msra.mxu0 %v2691
        %2747 = vmatmul.bf16.gmra.mxu0 %v2577
        %v2748 = vpop.f32.mrf.mxu0
        %v2749 = vadd.f32 0.0, %v2748
        %v2750 = vpop.f32.mrf.mxu0
        %2751 = vdwg.mxu0
        %2752 = vmatpush.bf16.msra.mxu0 %v2713
        %2753 = vmatpush.bf16.msra.mxu0 %v2710
        %2754 = vmatpush.bf16.msra.mxu0 %v2707
        %2755 = vmatpush.bf16.msra.mxu0 %v2704
        %2756 = vmatpush.bf16.msra.mxu0 %v2701
        %2757 = vmatpush.bf16.msra.mxu0 %v2698
        %2758 = vmatpush.bf16.msra.mxu0 %v2695
        %2759 = vmatpush.bf16.msra.mxu0 %v2692
        %2760 = vmatmul.bf16.gmra.mxu0 %v2577
        %v2761 = vpop.f32.mrf.mxu0
        %v2762 = vadd.f32 0.0, %v2761
        %v2763 = vpop.f32.mrf.mxu0
        %2764 = vdwg.mxu0
        %2765 = vmatpush.bf16.msra.mxu0 %v2714
        %2766 = vmatpush.bf16.msra.mxu0 %v2711
        %2767 = vmatpush.bf16.msra.mxu0 %v2708
        %2768 = vmatpush.bf16.msra.mxu0 %v2705
        %2769 = vmatpush.bf16.msra.mxu0 %v2702
        %2770 = vmatpush.bf16.msra.mxu0 %v2699
        %2771 = vmatpush.bf16.msra.mxu0 %v2696
        %2772 = vmatpush.bf16.msra.mxu0 %v2693
        %2773 = vmatmul.bf16.gmra.mxu0 %v2577
        %v2774 = vpop.f32.mrf.mxu0
        %v2775 = vadd.f32 0.0, %v2774
        %v2776 = vpop.f32.mrf.mxu0
        %2777 = vdwg.mxu0
        %v2779 = vsel %vm1499, %v2749, 0
        %v2782 = vsel %vm1499, %v2762, 0
        %2784 = vmatpush.xpose.msra.mxu0 0.0
        %2785 = vmatpush.xpose.msra.mxu0 0.0
        %2786 = vmatpush.xpose.msra.mxu0 0.0
        %2787 = vmatpush.xpose.msra.mxu0 0.0
        %2788 = vmatpush.xpose.msra.mxu0 0.0
        %2789 = vmatpush.xpose.msra.mxu0 0.0
        %2790 = vmatpush.xpose.msra.mxu0 0.0
        %2791 = vmatpush.xpose.msra.mxu0 0.0
        %2792 = vmatpush.xpose.msra.mxu0 0.0
        %2793 = vmatpush.xpose.msra.mxu0 0.0
        %2794 = vmatpush.xpose.msra.mxu0 0.0
        %2795 = vmatpush.xpose.msra.mxu0 0.0
        %2796 = vmatpush.xpose.msra.mxu0 0.0
        %2797 = vmatpush.xpose.msra.mxu0 0.0
        %2798 = vmatpush.xpose.msra.mxu0 0.0
        %2799 = vmatpush.xpose.msra.mxu0 %v2782
        %2800 = vmatmul.f32.gmra.mxu0 %v2779
        %v2801 = vpop.f32.mrf.mxu0
        %v2802 = vadd.f32 0.0, %v2801
        %2803 = vdwg.mxu0
        %v2804 = vsel %vm1526, %v2802, -inf
        %2805 = vmax.xlane.f32.xlu0 %v2804
        %v2806 = vpop.xlane.xlu0 %2805
        %v2807 = vsub.f32 %v2802, %v2806
        %v2808 = vmul.f32 %v2807, 1.442695
        %v2809 = vpow.pop %v2808
        %v2810 = vsel %vm1526, %v2809, 0.0
        %2811 = vadd.xlane.f32.xlu0 %v2810
        %v2812 = vpop.xlane.xlu0 %2811
        %v2813 = vrcp.pop %v2812
        %v2814 = vmul.f32 %v2809, %v2813
        %v2816 = vsel %vm1538, %v2814, 0
        %v2819 = vsel %vm1261, %v2775, 0
        %2821 = vmatpush.msra.mxu0 0.0
        %2822 = vmatpush.msra.mxu0 0.0
        %2823 = vmatpush.msra.mxu0 0.0
        %2824 = vmatpush.msra.mxu0 0.0
        %2825 = vmatpush.msra.mxu0 0.0
        %2826 = vmatpush.msra.mxu0 0.0
        %2827 = vmatpush.msra.mxu0 0.0
        %2828 = vmatpush.msra.mxu0 0.0
        %2829 = vmatpush.msra.mxu0 0.0
        %2830 = vmatpush.msra.mxu0 0.0
        %2831 = vmatpush.msra.mxu0 0.0
        %2832 = vmatpush.msra.mxu0 0.0
        %2833 = vmatpush.msra.mxu0 0.0
        %2834 = vmatpush.msra.mxu0 0.0
        %2835 = vmatpush.msra.mxu0 0.0
        %2836 = vmatpush.msra.mxu0 %v2819
        %2837 = vmatmul.f32.gmra.mxu0 %v2816
        %v2838 = vpop.f32.mrf.mxu0
        %v2839 = vadd.f32 0.0, %v2838
        %2840 = vdwg.mxu0
        %v2841 = vpack.c.bf16 %v2839, %v2839
        %s2842 = scalar_lea.vmem %s6, 64
        %v2843 = vld [vmem:[%s2842] sm:$0xf]
        %v2844 = vld [vmem:[%s2842 + $0x4] sm:$0xf]
        %v2845 = vld [vmem:[%s2842 + $0x8] sm:$0xf]
        %v2846 = vld [vmem:[%s2842 + $0xc] sm:$0xf]
        %2847 = vrot.lane.b32.xlu0 %v2749, 96
        %v2848 = vpop.permute.xlu0 %2847
        %2849 = vrot.lane.b32.xlu0 %v2762, 96
        %v2850 = vpop.permute.xlu0 %2849
        %v2851 = vsel %vm1499, %v2848, 0
        %v2853 = vsel %vm1499, %v2850, 0
        %2855 = vmatpush.xpose.msra.mxu0 0.0
        %2856 = vmatpush.xpose.msra.mxu0 0.0
        %2857 = vmatpush.xpose.msra.mxu0 0.0
        %2858 = vmatpush.xpose.msra.mxu0 0.0
        %2859 = vmatpush.xpose.msra.mxu0 0.0
        %2860 = vmatpush.xpose.msra.mxu0 0.0
        %2861 = vmatpush.xpose.msra.mxu0 0.0
        %2862 = vmatpush.xpose.msra.mxu0 0.0
        %2863 = vmatpush.xpose.msra.mxu0 0.0
        %2864 = vmatpush.xpose.msra.mxu0 0.0
        %2865 = vmatpush.xpose.msra.mxu0 0.0
        %2866 = vmatpush.xpose.msra.mxu0 0.0
        %2867 = vmatpush.xpose.msra.mxu0 0.0
        %2868 = vmatpush.xpose.msra.mxu0 0.0
        %2869 = vmatpush.xpose.msra.mxu0 0.0
        %2870 = vmatpush.xpose.msra.mxu0 %v2853
        %2871 = vmatmul.f32.gmra.mxu0 %v2851
        %v2872 = vpop.f32.mrf.mxu0
        %v2873 = vadd.f32 0.0, %v2872
        %2874 = vdwg.mxu0
        %v2875 = vsel %vm1526, %v2873, -inf
        %2876 = vmax.xlane.f32.xlu0 %v2875
        %v2877 = vpop.xlane.xlu0 %2876
        %v2878 = vsub.f32 %v2873, %v2877
        %v2879 = vmul.f32 %v2878, 1.442695
        %v2880 = vpow.pop %v2879
        %v2881 = vsel %vm1526, %v2880, 0.0
        %2882 = vadd.xlane.f32.xlu0 %v2881
        %v2883 = vpop.xlane.xlu0 %2882
        %v2884 = vrcp.pop %v2883
        %v2885 = vmul.f32 %v2880, %v2884
        %2886 = vrot.lane.b32.xlu0 %v2775, 96
        %v2887 = vpop.permute.xlu0 %2886
        %v2889 = vsel %vm1538, %v2885, 0
        %v2891 = vsel %vm1261, %v2887, 0
        %2893 = vmatpush.msra.mxu0 0.0
        %2894 = vmatpush.msra.mxu0 0.0
        %2895 = vmatpush.msra.mxu0 0.0
        %2896 = vmatpush.msra.mxu0 0.0
        %2897 = vmatpush.msra.mxu0 0.0
        %2898 = vmatpush.msra.mxu0 0.0
        %2899 = vmatpush.msra.mxu0 0.0
        %2900 = vmatpush.msra.mxu0 0.0
        %2901 = vmatpush.msra.mxu0 0.0
        %2902 = vmatpush.msra.mxu0 0.0
        %2903 = vmatpush.msra.mxu0 0.0
        %2904 = vmatpush.msra.mxu0 0.0
        %2905 = vmatpush.msra.mxu0 0.0
        %2906 = vmatpush.msra.mxu0 0.0
        %2907 = vmatpush.msra.mxu0 0.0
        %2908 = vmatpush.msra.mxu0 %v2891
        %2909 = vmatmul.f32.gmra.mxu0 %v2889
        %v2910 = vpop.f32.mrf.mxu0
        %v2911 = vadd.f32 0.0, %v2910
        %2912 = vdwg.mxu0
        %v2913 = vpack.c.bf16 %v2911, %v2911
        %v2914 = vld [vmem:[%s2842 + $0x10] sm:$0xf]
        %v2915 = vld [vmem:[%s2842 + $0x14] sm:$0xf]
        %v2916 = vld [vmem:[%s2842 + $0x18] sm:$0xf]
        %v2917 = vld [vmem:[%s2842 + $0x1c] sm:$0xf]
        %v2922 = vunpack.c.l.b16 %v2914
        %v2923 = vunpack.c.l.b16 %v2915
        %v2924 = vunpack.c.l.b16 %v2916
        %v2925 = vunpack.c.l.b16 %v2917
        %v2926 = vpack.c.b16 %v2923, %v2922
        %v2927 = vpack.c.b16 %v2925, %v2924
        %v2931 = vsel %vm1499, %v2913, 0
        %2933 = vmatpush.bf16.msra.mxu0 0
        %2934 = vmatpush.bf16.msra.mxu0 0
        %2935 = vmatpush.bf16.msra.mxu0 0
        %2936 = vmatpush.bf16.msra.mxu0 0
        %2937 = vmatpush.bf16.msra.mxu0 0
        %2938 = vmatpush.bf16.msra.mxu0 0
        %2939 = vmatpush.bf16.msra.mxu0 %v2927
        %2940 = vmatpush.bf16.msra.mxu0 %v2926
        %2941 = vmatmul.bf16.gmra.mxu0 %v2931
        %v2942 = vpop.f32.mrf.mxu0
        %v2943 = vadd.f32 0.0, %v2942
        %v2944 = vpop.f32.mrf.mxu0
        %2945 = vdwg.mxu0
        %v2950 = vunpack.c.l.b16 %v2843
        %v2951 = vunpack.c.l.b16 %v2844
        %v2952 = vunpack.c.l.b16 %v2845
        %v2953 = vunpack.c.l.b16 %v2846
        %v2954 = vpack.c.b16 %v2951, %v2950
        %v2955 = vpack.c.b16 %v2953, %v2952
        %v2959 = vsel %vm1499, %v2841, 0
        %2961 = vmatpush.bf16.msra.mxu0 0
        %2962 = vmatpush.bf16.msra.mxu0 0
        %2963 = vmatpush.bf16.msra.mxu0 0
        %2964 = vmatpush.bf16.msra.mxu0 0
        %2965 = vmatpush.bf16.msra.mxu0 0
        %2966 = vmatpush.bf16.msra.mxu0 0
        %2967 = vmatpush.bf16.msra.mxu0 %v2955
        %2968 = vmatpush.bf16.msra.mxu0 %v2954
        %2969 = vmatmul.bf16.gmra.mxu0 %v2959
        %v2970 = vpop.f32.mrf.mxu0
        %v2971 = vadd.f32 %v2943, %v2970
        %v2972 = vpop.f32.mrf.mxu0
        %2973 = vdwg.mxu0
        %2974 = vrot.lane.b32.xlu0 %v2749, 64
        %v2975 = vpop.permute.xlu0 %2974
        %2976 = vrot.lane.b32.xlu0 %v2762, 64
        %v2977 = vpop.permute.xlu0 %2976
        %v2978 = vsel %vm1499, %v2975, 0
        %v2980 = vsel %vm1499, %v2977, 0
        %2982 = vmatpush.xpose.msra.mxu0 0.0
        %2983 = vmatpush.xpose.msra.mxu0 0.0
        %2984 = vmatpush.xpose.msra.mxu0 0.0
        %2985 = vmatpush.xpose.msra.mxu0 0.0
        %2986 = vmatpush.xpose.msra.mxu0 0.0
        %2987 = vmatpush.xpose.msra.mxu0 0.0
        %2988 = vmatpush.xpose.msra.mxu0 0.0
        %2989 = vmatpush.xpose.msra.mxu0 0.0
        %2990 = vmatpush.xpose.msra.mxu0 0.0
        %2991 = vmatpush.xpose.msra.mxu0 0.0
        %2992 = vmatpush.xpose.msra.mxu0 0.0
        %2993 = vmatpush.xpose.msra.mxu0 0.0
        %2994 = vmatpush.xpose.msra.mxu0 0.0
        %2995 = vmatpush.xpose.msra.mxu0 0.0
        %2996 = vmatpush.xpose.msra.mxu0 0.0
        %2997 = vmatpush.xpose.msra.mxu0 %v2980
        %2998 = vmatmul.f32.gmra.mxu0 %v2978
        %v2999 = vpop.f32.mrf.mxu0
        %v3000 = vadd.f32 0.0, %v2999
        %3001 = vdwg.mxu0
        %v3002 = vsel %vm1526, %v3000, -inf
        %3003 = vmax.xlane.f32.xlu0 %v3002
        %v3004 = vpop.xlane.xlu0 %3003
        %v3005 = vsub.f32 %v3000, %v3004
        %v3006 = vmul.f32 %v3005, 1.442695
        %v3007 = vpow.pop %v3006
        %v3008 = vsel %vm1526, %v3007, 0.0
        %3009 = vadd.xlane.f32.xlu0 %v3008
        %v3010 = vpop.xlane.xlu0 %3009
        %v3011 = vrcp.pop %v3010
        %v3012 = vmul.f32 %v3007, %v3011
        %3013 = vrot.lane.b32.xlu0 %v2775, 64
        %v3014 = vpop.permute.xlu0 %3013
        %v3016 = vsel %vm1538, %v3012, 0
        %v3018 = vsel %vm1261, %v3014, 0
        %3020 = vmatpush.msra.mxu0 0.0
        %3021 = vmatpush.msra.mxu0 0.0
        %3022 = vmatpush.msra.mxu0 0.0
        %3023 = vmatpush.msra.mxu0 0.0
        %3024 = vmatpush.msra.mxu0 0.0
        %3025 = vmatpush.msra.mxu0 0.0
        %3026 = vmatpush.msra.mxu0 0.0
        %3027 = vmatpush.msra.mxu0 0.0
        %3028 = vmatpush.msra.mxu0 0.0
        %3029 = vmatpush.msra.mxu0 0.0
        %3030 = vmatpush.msra.mxu0 0.0
        %3031 = vmatpush.msra.mxu0 0.0
        %3032 = vmatpush.msra.mxu0 0.0
        %3033 = vmatpush.msra.mxu0 0.0
        %3034 = vmatpush.msra.mxu0 0.0
        %3035 = vmatpush.msra.mxu0 %v3018
        %3036 = vmatmul.f32.gmra.mxu0 %v3016
        %v3037 = vpop.f32.mrf.mxu0
        %v3038 = vadd.f32 0.0, %v3037
        %3039 = vdwg.mxu0
        %v3040 = vpack.c.bf16 %v3038, %v3038
        %v3041 = vld [vmem:[%s2842 + $0x20] sm:$0xf]
        %v3042 = vld [vmem:[%s2842 + $0x24] sm:$0xf]
        %v3043 = vld [vmem:[%s2842 + $0x28] sm:$0xf]
        %v3044 = vld [vmem:[%s2842 + $0x2c] sm:$0xf]
        %v3049 = vunpack.c.l.b16 %v3041
        %v3050 = vunpack.c.l.b16 %v3042
        %v3051 = vunpack.c.l.b16 %v3043
        %v3052 = vunpack.c.l.b16 %v3044
        %v3053 = vpack.c.b16 %v3050, %v3049
        %v3054 = vpack.c.b16 %v3052, %v3051
        %v3058 = vsel %vm1499, %v3040, 0
        %3060 = vmatpush.bf16.msra.mxu0 0
        %3061 = vmatpush.bf16.msra.mxu0 0
        %3062 = vmatpush.bf16.msra.mxu0 0
        %3063 = vmatpush.bf16.msra.mxu0 0
        %3064 = vmatpush.bf16.msra.mxu0 0
        %3065 = vmatpush.bf16.msra.mxu0 0
        %3066 = vmatpush.bf16.msra.mxu0 %v3054
        %3067 = vmatpush.bf16.msra.mxu0 %v3053
        %3068 = vmatmul.bf16.gmra.mxu0 %v3058
        %v3069 = vpop.f32.mrf.mxu0
        %v3070 = vadd.f32 0.0, %v3069
        %v3071 = vpop.f32.mrf.mxu0
        %3072 = vdwg.mxu0
        %v3073 = vadd.f32 %v2971, %v3070
        %3074 = vrot.lane.b32.xlu0 %v2749, 32
        %v3075 = vpop.permute.xlu0 %3074
        %3076 = vrot.lane.b32.xlu0 %v2762, 32
        %v3077 = vpop.permute.xlu0 %3076
        %v3078 = vsel %vm1499, %v3075, 0
        %v3080 = vsel %vm1499, %v3077, 0
        %3082 = vmatpush.xpose.msra.mxu0 0.0
        %3083 = vmatpush.xpose.msra.mxu0 0.0
        %3084 = vmatpush.xpose.msra.mxu0 0.0
        %3085 = vmatpush.xpose.msra.mxu0 0.0
        %3086 = vmatpush.xpose.msra.mxu0 0.0
        %3087 = vmatpush.xpose.msra.mxu0 0.0
        %3088 = vmatpush.xpose.msra.mxu0 0.0
        %3089 = vmatpush.xpose.msra.mxu0 0.0
        %3090 = vmatpush.xpose.msra.mxu0 0.0
        %3091 = vmatpush.xpose.msra.mxu0 0.0
        %3092 = vmatpush.xpose.msra.mxu0 0.0
        %3093 = vmatpush.xpose.msra.mxu0 0.0
        %3094 = vmatpush.xpose.msra.mxu0 0.0
        %3095 = vmatpush.xpose.msra.mxu0 0.0
        %3096 = vmatpush.xpose.msra.mxu0 0.0
        %3097 = vmatpush.xpose.msra.mxu0 %v3080
        %3098 = vmatmul.f32.gmra.mxu0 %v3078
        %v3099 = vpop.f32.mrf.mxu0
        %v3100 = vadd.f32 0.0, %v3099
        %3101 = vdwg.mxu0
        %v3102 = vsel %vm1526, %v3100, -inf
        %3103 = vmax.xlane.f32.xlu0 %v3102
        %v3104 = vpop.xlane.xlu0 %3103
        %v3105 = vsub.f32 %v3100, %v3104
        %v3106 = vmul.f32 %v3105, 1.442695
        %v3107 = vpow.pop %v3106
        %v3108 = vsel %vm1526, %v3107, 0.0
        %3109 = vadd.xlane.f32.xlu0 %v3108
        %v3110 = vpop.xlane.xlu0 %3109
        %v3111 = vrcp.pop %v3110
        %v3112 = vmul.f32 %v3107, %v3111
        %3113 = vrot.lane.b32.xlu0 %v2775, 32
        %v3114 = vpop.permute.xlu0 %3113
        %v3116 = vsel %vm1538, %v3112, 0
        %v3118 = vsel %vm1261, %v3114, 0
        %3120 = vmatpush.msra.mxu0 0.0
        %3121 = vmatpush.msra.mxu0 0.0
        %3122 = vmatpush.msra.mxu0 0.0
        %3123 = vmatpush.msra.mxu0 0.0
        %3124 = vmatpush.msra.mxu0 0.0
        %3125 = vmatpush.msra.mxu0 0.0
        %3126 = vmatpush.msra.mxu0 0.0
        %3127 = vmatpush.msra.mxu0 0.0
        %3128 = vmatpush.msra.mxu0 0.0
        %3129 = vmatpush.msra.mxu0 0.0
        %3130 = vmatpush.msra.mxu0 0.0
        %3131 = vmatpush.msra.mxu0 0.0
        %3132 = vmatpush.msra.mxu0 0.0
        %3133 = vmatpush.msra.mxu0 0.0
        %3134 = vmatpush.msra.mxu0 0.0
        %3135 = vmatpush.msra.mxu0 %v3118
        %3136 = vmatmul.f32.gmra.mxu0 %v3116
        %v3137 = vpop.f32.mrf.mxu0
        %v3138 = vadd.f32 0.0, %v3137
        %3139 = vdwg.mxu0
        %v3140 = vpack.c.bf16 %v3138, %v3138
        %v3141 = vld [vmem:[%s2842 + $0x30] sm:$0xf]
        %v3142 = vld [vmem:[%s2842 + $0x34] sm:$0xf]
        %v3143 = vld [vmem:[%s2842 + $0x38] sm:$0xf]
        %v3144 = vld [vmem:[%s2842 + $0x3c] sm:$0xf]
        %v3149 = vunpack.c.l.b16 %v3141
        %v3150 = vunpack.c.l.b16 %v3142
        %v3151 = vunpack.c.l.b16 %v3143
        %v3152 = vunpack.c.l.b16 %v3144
        %v3153 = vpack.c.b16 %v3150, %v3149
        %v3154 = vpack.c.b16 %v3152, %v3151
        %v3158 = vsel %vm1499, %v3140, 0
        %3160 = vmatpush.bf16.msra.mxu0 0
        %3161 = vmatpush.bf16.msra.mxu0 0
        %3162 = vmatpush.bf16.msra.mxu0 0
        %3163 = vmatpush.bf16.msra.mxu0 0
        %3164 = vmatpush.bf16.msra.mxu0 0
        %3165 = vmatpush.bf16.msra.mxu0 0
        %3166 = vmatpush.bf16.msra.mxu0 %v3154
        %3167 = vmatpush.bf16.msra.mxu0 %v3153
        %3168 = vmatmul.bf16.gmra.mxu0 %v3158
        %v3169 = vpop.f32.mrf.mxu0
        %v3170 = vadd.f32 0.0, %v3169
        %v3171 = vpop.f32.mrf.mxu0
        %3172 = vdwg.mxu0
        %v3173 = vadd.f32 %v3073, %v3170
        %v3174 = vadd.f32 %v2542, %v3173
        %s3175 = scalar_lea.vmem %s7, 1
        %v3176 = vld [vmem:[%s3175] sm:$0x1]
        %v3178 = vperm.slane %v3176, 0
        %v3180 = vadd.f32 %v3174, %v3178
        %s3181 = scalar_lea.vmem %s8, 1
        %v3182 = vld [vmem:[%s3181] sm:$0x1]
        %s3183 = scalar_lea.vmem [#allocation7], 1
        %v3184 = vld [vmem:[%s3183] sm:$0x1]
        %v3185 = vsel %vm1261, %v3180, 0.0
        %3186 = vadd.xlane.f32.xlu0 %v3185
        %v3187 = vpop.xlane.xlu0 %3186
        %v3188 = vmul.f32 %v3187, %v1271
        %v3189 = vsub.f32 %v3180, %v3188
        %v3190 = vmul.f32 %v3189, %v3189
        %v3191 = vsel %vm1261, %v3190, 0.0
        %3192 = vadd.xlane.f32.xlu0 %v3191
        %v3193 = vpop.xlane.xlu0 %3192
        %v3194 = vmul.f32 %v3193, %v1271
        %v3195 = vadd.f32 %v3194, 1e-06
        %v3196 = vrsqrt.pop %v3195
        %v3197 = vmul.f32 %v3196, %v3195
        %v3198 = vmul.f32 %v3197, %v3196
        %v3199 = vmul.f32 0.5, %v3198
        %v3200 = vsub.f32 1.5, %v3199
        %v3201 = vmul.f32 %v3196, %v3200
        %vm3202 = vweird.f32 %v3195
        %vm3203 = vweird.f32 %v3196
        %vm3204 = vmor %vm3202, %vm3203
        %v3205 = vsel %vm3204, %v3196, %v3201
        %v3206 = vmul.f32 %v3189, %v3205
        %v3208 = vperm.slane %v3182, 0
        %v3210 = vmul.f32 %v3206, %v3208
        %v3212 = vperm.slane %v3184, 0
        %v3214 = vadd.f32 %v3210, %v3212
        %v3215 = vpack.c.bf16 %v3214, %v3214
        %s3216 = scalar_lea.vmem %s10, 256
        %v3217 = vld [vmem:[%s3216] sm:$0xff]
        %v3218 = vld [vmem:[%s3216 + $0x8] sm:$0xff]
        %v3219 = vld [vmem:[%s3216 + $0x10] sm:$0xff]
        %v3220 = vld [vmem:[%s3216 + $0x18] sm:$0xff]
        %v3221 = vld [vmem:[%s3216 + $0x20] sm:$0xff]
        %v3222 = vld [vmem:[%s3216 + $0x28] sm:$0xff]
        %v3223 = vld [vmem:[%s3216 + $0x30] sm:$0xff]
        %v3224 = vld [vmem:[%s3216 + $0x38] sm:$0xff]
        %v3225 = vld [vmem:[%s3216 + $0x40] sm:$0xff]
        %v3226 = vld [vmem:[%s3216 + $0x48] sm:$0xff]
        %v3227 = vld [vmem:[%s3216 + $0x50] sm:$0xff]
        %v3228 = vld [vmem:[%s3216 + $0x58] sm:$0xff]
        %v3229 = vld [vmem:[%s3216 + $0x60] sm:$0xff]
        %v3230 = vld [vmem:[%s3216 + $0x68] sm:$0xff]
        %v3231 = vld [vmem:[%s3216 + $0x70] sm:$0xff]
        %v3232 = vld [vmem:[%s3216 + $0x78] sm:$0xff]
        %v3233 = vld [vmem:[%s3216 + $0x80] sm:$0xff]
        %v3234 = vld [vmem:[%s3216 + $0x88] sm:$0xff]
        %v3235 = vld [vmem:[%s3216 + $0x90] sm:$0xff]
        %v3236 = vld [vmem:[%s3216 + $0x98] sm:$0xff]
        %v3237 = vld [vmem:[%s3216 + $0xa0] sm:$0xff]
        %v3238 = vld [vmem:[%s3216 + $0xa8] sm:$0xff]
        %v3239 = vld [vmem:[%s3216 + $0xb0] sm:$0xff]
        %v3240 = vld [vmem:[%s3216 + $0xb8] sm:$0xff]
        %v3241 = vld [vmem:[%s3216 + $0xc0] sm:$0xff]
        %v3242 = vld [vmem:[%s3216 + $0xc8] sm:$0xff]
        %v3243 = vld [vmem:[%s3216 + $0xd0] sm:$0xff]
        %v3244 = vld [vmem:[%s3216 + $0xd8] sm:$0xff]
        %v3245 = vld [vmem:[%s3216 + $0xe0] sm:$0xff]
        %v3246 = vld [vmem:[%s3216 + $0xe8] sm:$0xff]
        %v3247 = vld [vmem:[%s3216 + $0xf0] sm:$0xff]
        %v3248 = vld [vmem:[%s3216 + $0xf8] sm:$0xff]
        %s3249 = scalar_lea.vmem %s11, 4
        %v3250 = vld [vmem:[%s3249] sm:$0xf]
        %v3252 = vperm.slane %v3250, 0
        %v3253 = vperm.slane %v3250, 1
        %v3254 = vperm.slane %v3250, 2
        %v3255 = vperm.slane %v3250, 3
        %v3292 = vunpack.c.l.b16 %v3217
        %v3293 = vunpack.c.h.b16 %v3217
        %v3294 = vunpack.c.l.b16 %v3218
        %v3295 = vunpack.c.h.b16 %v3218
        %v3296 = vunpack.c.l.b16 %v3219
        %v3297 = vunpack.c.h.b16 %v3219
        %v3298 = vunpack.c.l.b16 %v3220
        %v3299 = vunpack.c.h.b16 %v3220
        %v3300 = vunpack.c.l.b16 %v3221
        %v3301 = vunpack.c.h.b16 %v3221
        %v3302 = vunpack.c.l.b16 %v3222
        %v3303 = vunpack.c.h.b16 %v3222
        %v3304 = vunpack.c.l.b16 %v3223
        %v3305 = vunpack.c.h.b16 %v3223
        %v3306 = vunpack.c.l.b16 %v3224
        %v3307 = vunpack.c.h.b16 %v3224
        %v3308 = vunpack.c.l.b16 %v3225
        %v3309 = vunpack.c.h.b16 %v3225
        %v3310 = vunpack.c.l.b16 %v3226
        %v3311 = vunpack.c.h.b16 %v3226
        %v3312 = vunpack.c.l.b16 %v3227
        %v3313 = vunpack.c.h.b16 %v3227
        %v3314 = vunpack.c.l.b16 %v3228
        %v3315 = vunpack.c.h.b16 %v3228
        %v3316 = vunpack.c.l.b16 %v3229
        %v3317 = vunpack.c.h.b16 %v3229
        %v3318 = vunpack.c.l.b16 %v3230
        %v3319 = vunpack.c.h.b16 %v3230
        %v3320 = vunpack.c.l.b16 %v3231
        %v3321 = vunpack.c.h.b16 %v3231
        %v3322 = vunpack.c.l.b16 %v3232
        %v3323 = vunpack.c.h.b16 %v3232
        %v3324 = vunpack.c.l.b16 %v3233
        %v3325 = vunpack.c.h.b16 %v3233
        %v3326 = vunpack.c.l.b16 %v3234
        %v3327 = vunpack.c.h.b16 %v3234
        %v3328 = vunpack.c.l.b16 %v3235
        %v3329 = vunpack.c.h.b16 %v3235
        %v3330 = vunpack.c.l.b16 %v3236
        %v3331 = vunpack.c.h.b16 %v3236
        %v3332 = vunpack.c.l.b16 %v3237
        %v3333 = vunpack.c.h.b16 %v3237
        %v3334 = vunpack.c.l.b16 %v3238
        %v3335 = vunpack.c.h.b16 %v3238
        %v3336 = vunpack.c.l.b16 %v3239
        %v3337 = vunpack.c.h.b16 %v3239
        %v3338 = vunpack.c.l.b16 %v3240
        %v3339 = vunpack.c.h.b16 %v3240
        %v3340 = vunpack.c.l.b16 %v3241
        %v3341 = vunpack.c.h.b16 %v3241
        %v3342 = vunpack.c.l.b16 %v3242
        %v3343 = vunpack.c.h.b16 %v3242
        %v3344 = vunpack.c.l.b16 %v3243
        %v3345 = vunpack.c.h.b16 %v3243
        %v3346 = vunpack.c.l.b16 %v3244
        %v3347 = vunpack.c.h.b16 %v3244
        %v3348 = vunpack.c.l.b16 %v3245
        %v3349 = vunpack.c.h.b16 %v3245
        %v3350 = vunpack.c.l.b16 %v3246
        %v3351 = vunpack.c.h.b16 %v3246
        %v3352 = vunpack.c.l.b16 %v3247
        %v3353 = vunpack.c.h.b16 %v3247
        %v3354 = vunpack.c.l.b16 %v3248
        %v3355 = vunpack.c.h.b16 %v3248
        %v3356 = vpack.c.b16 %v3296, %v3292
        %v3357 = vpack.c.b16 %v3297, %v3293
        %v3358 = vpack.c.b16 %v3298, %v3294
        %v3359 = vpack.c.b16 %v3299, %v3295
        %v3360 = vpack.c.b16 %v3304, %v3300
        %v3361 = vpack.c.b16 %v3305, %v3301
        %v3362 = vpack.c.b16 %v3306, %v3302
        %v3363 = vpack.c.b16 %v3307, %v3303
        %v3364 = vpack.c.b16 %v3312, %v3308
        %v3365 = vpack.c.b16 %v3313, %v3309
        %v3366 = vpack.c.b16 %v3314, %v3310
        %v3367 = vpack.c.b16 %v3315, %v3311
        %v3368 = vpack.c.b16 %v3320, %v3316
        %v3369 = vpack.c.b16 %v3321, %v3317
        %v3370 = vpack.c.b16 %v3322, %v3318
        %v3371 = vpack.c.b16 %v3323, %v3319
        %v3372 = vpack.c.b16 %v3328, %v3324
        %v3373 = vpack.c.b16 %v3329, %v3325
        %v3374 = vpack.c.b16 %v3330, %v3326
        %v3375 = vpack.c.b16 %v3331, %v3327
        %v3376 = vpack.c.b16 %v3336, %v3332
        %v3377 = vpack.c.b16 %v3337, %v3333
        %v3378 = vpack.c.b16 %v3338, %v3334
        %v3379 = vpack.c.b16 %v3339, %v3335
        %v3380 = vpack.c.b16 %v3344, %v3340
        %v3381 = vpack.c.b16 %v3345, %v3341
        %v3382 = vpack.c.b16 %v3346, %v3342
        %v3383 = vpack.c.b16 %v3347, %v3343
        %v3384 = vpack.c.b16 %v3352, %v3348
        %v3385 = vpack.c.b16 %v3353, %v3349
        %v3386 = vpack.c.b16 %v3354, %v3350
        %v3387 = vpack.c.b16 %v3355, %v3351
        %3420 = vmatpush.bf16.msra.mxu0 %v3384
        %3421 = vmatpush.bf16.msra.mxu0 %v3380
        %3422 = vmatpush.bf16.msra.mxu0 %v3376
        %3423 = vmatpush.bf16.msra.mxu0 %v3372
        %3424 = vmatpush.bf16.msra.mxu0 %v3368
        %3425 = vmatpush.bf16.msra.mxu0 %v3364
        %3426 = vmatpush.bf16.msra.mxu0 %v3360
        %3427 = vmatpush.bf16.msra.mxu0 %v3356
        %3428 = vmatmul.bf16.gmra.mxu0 %v3215
        %v3429 = vpop.f32.mrf.mxu0
        %v3430 = vadd.f32 %v3252, %v3429
        %v3431 = vpop.f32.mrf.mxu0
        %3432 = vdwg.mxu0
        %3433 = vmatpush.bf16.msra.mxu0 %v3385
        %3434 = vmatpush.bf16.msra.mxu0 %v3381
        %3435 = vmatpush.bf16.msra.mxu0 %v3377
        %3436 = vmatpush.bf16.msra.mxu0 %v3373
        %3437 = vmatpush.bf16.msra.mxu0 %v3369
        %3438 = vmatpush.bf16.msra.mxu0 %v3365
        %3439 = vmatpush.bf16.msra.mxu0 %v3361
        %3440 = vmatpush.bf16.msra.mxu0 %v3357
        %3441 = vmatmul.bf16.gmra.mxu0 %v3215
        %v3442 = vpop.f32.mrf.mxu0
        %v3443 = vadd.f32 %v3253, %v3442
        %v3444 = vpop.f32.mrf.mxu0
        %3445 = vdwg.mxu0
        %3446 = vmatpush.bf16.msra.mxu0 %v3386
        %3447 = vmatpush.bf16.msra.mxu0 %v3382
        %3448 = vmatpush.bf16.msra.mxu0 %v3378
        %3449 = vmatpush.bf16.msra.mxu0 %v3374
        %3450 = vmatpush.bf16.msra.mxu0 %v3370
        %3451 = vmatpush.bf16.msra.mxu0 %v3366
        %3452 = vmatpush.bf16.msra.mxu0 %v3362
        %3453 = vmatpush.bf16.msra.mxu0 %v3358
        %3454 = vmatmul.bf16.gmra.mxu0 %v3215
        %v3455 = vpop.f32.mrf.mxu0
        %v3456 = vadd.f32 %v3254, %v3455
        %v3457 = vpop.f32.mrf.mxu0
        %3458 = vdwg.mxu0
        %3459 = vmatpush.bf16.msra.mxu0 %v3387
        %3460 = vmatpush.bf16.msra.mxu0 %v3383
        %3461 = vmatpush.bf16.msra.mxu0 %v3379
        %3462 = vmatpush.bf16.msra.mxu0 %v3375
        %3463 = vmatpush.bf16.msra.mxu0 %v3371
        %3464 = vmatpush.bf16.msra.mxu0 %v3367
        %3465 = vmatpush.bf16.msra.mxu0 %v3363
        %3466 = vmatpush.bf16.msra.mxu0 %v3359
        %3467 = vmatmul.bf16.gmra.mxu0 %v3215
        %v3468 = vpop.f32.mrf.mxu0
        %v3469 = vadd.f32 %v3255, %v3468
        %v3470 = vpop.f32.mrf.mxu0
        %3471 = vdwg.mxu0
        %v3472 = vmul.f32 %v3430, 0.5
        %v3473 = vmul.f32 %v3443, 0.5
        %v3474 = vmul.f32 %v3456, 0.5
        %v3475 = vmul.f32 %v3469, 0.5
        %v3476 = vmul.f32 %v3430, 0.044715
        %v3477 = vmul.f32 %v3443, 0.044715
        %v3478 = vmul.f32 %v3456, 0.044715
        %v3479 = vmul.f32 %v3469, 0.044715
        %v3480 = vmul.f32 %v3476, %v3430
        %v3481 = vmul.f32 %v3477, %v3443
        %v3482 = vmul.f32 %v3478, %v3456
        %v3483 = vmul.f32 %v3479, %v3469
        %v3484 = vmul.f32 %v3480, %v3430
        %v3485 = vmul.f32 %v3481, %v3443
        %v3486 = vmul.f32 %v3482, %v3456
        %v3487 = vmul.f32 %v3483, %v3469
        %v3488 = vadd.f32 %v3430, %v3484
        %v3489 = vadd.f32 %v3443, %v3485
        %v3490 = vadd.f32 %v3456, %v3486
        %v3491 = vadd.f32 %v3469, %v3487
        %v3492 = vmul.f32 %v3488, 0.7978846
        %v3493 = vmul.f32 %v3489, 0.7978846
        %v3494 = vmul.f32 %v3490, 0.7978846
        %v3495 = vmul.f32 %v3491, 0.7978846
        %v3496 = vtanh.pop %v3492
        %v3497 = vtanh.pop %v3493
        %v3498 = vtanh.pop %v3494
        %v3499 = vtanh.pop %v3495
        %v3500 = vadd.f32 %v3496, 1.0
        %v3501 = vadd.f32 %v3497, 1.0
        %v3502 = vadd.f32 %v3498, 1.0
        %v3503 = vadd.f32 %v3499, 1.0
        %v3504 = vmul.f32 %v3472, %v3500
        %v3505 = vmul.f32 %v3473, %v3501
        %v3506 = vmul.f32 %v3474, %v3502
        %v3507 = vmul.f32 %v3475, %v3503
        %v3508 = vpack.c.bf16 %v3504, %v3504
        %v3509 = vpack.c.bf16 %v3505, %v3505
        %v3510 = vpack.c.bf16 %v3506, %v3506
        %v3511 = vpack.c.bf16 %v3507, %v3507
        %s3512 = scalar_lea.vmem %s12, 256
        %v3513 = vld [vmem:[%s3512] sm:$0xf]
        %v3514 = vld [vmem:[%s3512 + $0x4] sm:$0xf]
        %v3515 = vld [vmem:[%s3512 + $0x8] sm:$0xf]
        %v3516 = vld [vmem:[%s3512 + $0xc] sm:$0xf]
        %v3517 = vld [vmem:[%s3512 + $0x10] sm:$0xf]
        %v3518 = vld [vmem:[%s3512 + $0x14] sm:$0xf]
        %v3519 = vld [vmem:[%s3512 + $0x18] sm:$0xf]
        %v3520 = vld [vmem:[%s3512 + $0x1c] sm:$0xf]
        %v3521 = vld [vmem:[%s3512 + $0x20] sm:$0xf]
        %v3522 = vld [vmem:[%s3512 + $0x24] sm:$0xf]
        %v3523 = vld [vmem:[%s3512 + $0x28] sm:$0xf]
        %v3524 = vld [vmem:[%s3512 + $0x2c] sm:$0xf]
        %v3525 = vld [vmem:[%s3512 + $0x30] sm:$0xf]
        %v3526 = vld [vmem:[%s3512 + $0x34] sm:$0xf]
        %v3527 = vld [vmem:[%s3512 + $0x38] sm:$0xf]
        %v3528 = vld [vmem:[%s3512 + $0x3c] sm:$0xf]
        %v3529 = vld [vmem:[%s3512 + $0x40] sm:$0xf]
        %v3530 = vld [vmem:[%s3512 + $0x44] sm:$0xf]
        %v3531 = vld [vmem:[%s3512 + $0x48] sm:$0xf]
        %v3532 = vld [vmem:[%s3512 + $0x4c] sm:$0xf]
        %v3533 = vld [vmem:[%s3512 + $0x50] sm:$0xf]
        %v3534 = vld [vmem:[%s3512 + $0x54] sm:$0xf]
        %v3535 = vld [vmem:[%s3512 + $0x58] sm:$0xf]
        %v3536 = vld [vmem:[%s3512 + $0x5c] sm:$0xf]
        %v3537 = vld [vmem:[%s3512 + $0x60] sm:$0xf]
        %v3538 = vld [vmem:[%s3512 + $0x64] sm:$0xf]
        %v3539 = vld [vmem:[%s3512 + $0x68] sm:$0xf]
        %v3540 = vld [vmem:[%s3512 + $0x6c] sm:$0xf]
        %v3541 = vld [vmem:[%s3512 + $0x70] sm:$0xf]
        %v3542 = vld [vmem:[%s3512 + $0x74] sm:$0xf]
        %v3543 = vld [vmem:[%s3512 + $0x78] sm:$0xf]
        %v3544 = vld [vmem:[%s3512 + $0x7c] sm:$0xf]
        %v3545 = vld [vmem:[%s3512 + $0x80] sm:$0xf]
        %v3546 = vld [vmem:[%s3512 + $0x84] sm:$0xf]
        %v3547 = vld [vmem:[%s3512 + $0x88] sm:$0xf]
        %v3548 = vld [vmem:[%s3512 + $0x8c] sm:$0xf]
        %v3549 = vld [vmem:[%s3512 + $0x90] sm:$0xf]
        %v3550 = vld [vmem:[%s3512 + $0x94] sm:$0xf]
        %v3551 = vld [vmem:[%s3512 + $0x98] sm:$0xf]
        %v3552 = vld [vmem:[%s3512 + $0x9c] sm:$0xf]
        %v3553 = vld [vmem:[%s3512 + $0xa0] sm:$0xf]
        %v3554 = vld [vmem:[%s3512 + $0xa4] sm:$0xf]
        %v3555 = vld [vmem:[%s3512 + $0xa8] sm:$0xf]
        %v3556 = vld [vmem:[%s3512 + $0xac] sm:$0xf]
        %v3557 = vld [vmem:[%s3512 + $0xb0] sm:$0xf]
        %v3558 = vld [vmem:[%s3512 + $0xb4] sm:$0xf]
        %v3559 = vld [vmem:[%s3512 + $0xb8] sm:$0xf]
        %v3560 = vld [vmem:[%s3512 + $0xbc] sm:$0xf]
        %v3561 = vld [vmem:[%s3512 + $0xc0] sm:$0xf]
        %v3562 = vld [vmem:[%s3512 + $0xc4] sm:$0xf]
        %v3563 = vld [vmem:[%s3512 + $0xc8] sm:$0xf]
        %v3564 = vld [vmem:[%s3512 + $0xcc] sm:$0xf]
        %v3565 = vld [vmem:[%s3512 + $0xd0] sm:$0xf]
        %v3566 = vld [vmem:[%s3512 + $0xd4] sm:$0xf]
        %v3567 = vld [vmem:[%s3512 + $0xd8] sm:$0xf]
        %v3568 = vld [vmem:[%s3512 + $0xdc] sm:$0xf]
        %v3569 = vld [vmem:[%s3512 + $0xe0] sm:$0xf]
        %v3570 = vld [vmem:[%s3512 + $0xe4] sm:$0xf]
        %v3571 = vld [vmem:[%s3512 + $0xe8] sm:$0xf]
        %v3572 = vld [vmem:[%s3512 + $0xec] sm:$0xf]
        %v3573 = vld [vmem:[%s3512 + $0xf0] sm:$0xf]
        %v3574 = vld [vmem:[%s3512 + $0xf4] sm:$0xf]
        %v3575 = vld [vmem:[%s3512 + $0xf8] sm:$0xf]
        %v3576 = vld [vmem:[%s3512 + $0xfc] sm:$0xf]
        %s3577 = scalar_lea.vmem [#allocation8], 1
        %v3578 = vld [vmem:[%s3577] sm:$0x1]
        %v3580 = vperm.slane %v3578, 0
        %v3646 = vunpack.c.l.b16 %v3513
        %v3647 = vunpack.c.l.b16 %v3514
        %v3648 = vunpack.c.l.b16 %v3515
        %v3649 = vunpack.c.l.b16 %v3516
        %v3650 = vunpack.c.l.b16 %v3517
        %v3651 = vunpack.c.l.b16 %v3518
        %v3652 = vunpack.c.l.b16 %v3519
        %v3653 = vunpack.c.l.b16 %v3520
        %v3654 = vunpack.c.l.b16 %v3521
        %v3655 = vunpack.c.l.b16 %v3522
        %v3656 = vunpack.c.l.b16 %v3523
        %v3657 = vunpack.c.l.b16 %v3524
        %v3658 = vunpack.c.l.b16 %v3525
        %v3659 = vunpack.c.l.b16 %v3526
        %v3660 = vunpack.c.l.b16 %v3527
        %v3661 = vunpack.c.l.b16 %v3528
        %v3662 = vunpack.c.l.b16 %v3529
        %v3663 = vunpack.c.l.b16 %v3530
        %v3664 = vunpack.c.l.b16 %v3531
        %v3665 = vunpack.c.l.b16 %v3532
        %v3666 = vunpack.c.l.b16 %v3533
        %v3667 = vunpack.c.l.b16 %v3534
        %v3668 = vunpack.c.l.b16 %v3535
        %v3669 = vunpack.c.l.b16 %v3536
        %v3670 = vunpack.c.l.b16 %v3537
        %v3671 = vunpack.c.l.b16 %v3538
        %v3672 = vunpack.c.l.b16 %v3539
        %v3673 = vunpack.c.l.b16 %v3540
        %v3674 = vunpack.c.l.b16 %v3541
        %v3675 = vunpack.c.l.b16 %v3542
        %v3676 = vunpack.c.l.b16 %v3543
        %v3677 = vunpack.c.l.b16 %v3544
        %v3678 = vunpack.c.l.b16 %v3545
        %v3679 = vunpack.c.l.b16 %v3546
        %v3680 = vunpack.c.l.b16 %v3547
        %v3681 = vunpack.c.l.b16 %v3548
        %v3682 = vunpack.c.l.b16 %v3549
        %v3683 = vunpack.c.l.b16 %v3550
        %v3684 = vunpack.c.l.b16 %v3551
        %v3685 = vunpack.c.l.b16 %v3552
        %v3686 = vunpack.c.l.b16 %v3553
        %v3687 = vunpack.c.l.b16 %v3554
        %v3688 = vunpack.c.l.b16 %v3555
        %v3689 = vunpack.c.l.b16 %v3556
        %v3690 = vunpack.c.l.b16 %v3557
        %v3691 = vunpack.c.l.b16 %v3558
        %v3692 = vunpack.c.l.b16 %v3559
        %v3693 = vunpack.c.l.b16 %v3560
        %v3694 = vunpack.c.l.b16 %v3561
        %v3695 = vunpack.c.l.b16 %v3562
        %v3696 = vunpack.c.l.b16 %v3563
        %v3697 = vunpack.c.l.b16 %v3564
        %v3698 = vunpack.c.l.b16 %v3565
        %v3699 = vunpack.c.l.b16 %v3566
        %v3700 = vunpack.c.l.b16 %v3567
        %v3701 = vunpack.c.l.b16 %v3568
        %v3702 = vunpack.c.l.b16 %v3569
        %v3703 = vunpack.c.l.b16 %v3570
        %v3704 = vunpack.c.l.b16 %v3571
        %v3705 = vunpack.c.l.b16 %v3572
        %v3706 = vunpack.c.l.b16 %v3573
        %v3707 = vunpack.c.l.b16 %v3574
        %v3708 = vunpack.c.l.b16 %v3575
        %v3709 = vunpack.c.l.b16 %v3576
        %v3710 = vpack.c.b16 %v3647, %v3646
        %v3711 = vpack.c.b16 %v3649, %v3648
        %v3712 = vpack.c.b16 %v3651, %v3650
        %v3713 = vpack.c.b16 %v3653, %v3652
        %v3714 = vpack.c.b16 %v3655, %v3654
        %v3715 = vpack.c.b16 %v3657, %v3656
        %v3716 = vpack.c.b16 %v3659, %v3658
        %v3717 = vpack.c.b16 %v3661, %v3660
        %v3718 = vpack.c.b16 %v3663, %v3662
        %v3719 = vpack.c.b16 %v3665, %v3664
        %v3720 = vpack.c.b16 %v3667, %v3666
        %v3721 = vpack.c.b16 %v3669, %v3668
        %v3722 = vpack.c.b16 %v3671, %v3670
        %v3723 = vpack.c.b16 %v3673, %v3672
        %v3724 = vpack.c.b16 %v3675, %v3674
        %v3725 = vpack.c.b16 %v3677, %v3676
        %v3726 = vpack.c.b16 %v3679, %v3678
        %v3727 = vpack.c.b16 %v3681, %v3680
        %v3728 = vpack.c.b16 %v3683, %v3682
        %v3729 = vpack.c.b16 %v3685, %v3684
        %v3730 = vpack.c.b16 %v3687, %v3686
        %v3731 = vpack.c.b16 %v3689, %v3688
        %v3732 = vpack.c.b16 %v3691, %v3690
        %v3733 = vpack.c.b16 %v3693, %v3692
        %v3734 = vpack.c.b16 %v3695, %v3694
        %v3735 = vpack.c.b16 %v3697, %v3696
        %v3736 = vpack.c.b16 %v3699, %v3698
        %v3737 = vpack.c.b16 %v3701, %v3700
        %v3738 = vpack.c.b16 %v3703, %v3702
        %v3739 = vpack.c.b16 %v3705, %v3704
        %v3740 = vpack.c.b16 %v3707, %v3706
        %v3741 = vpack.c.b16 %v3709, %v3708
        %3774 = vmatpush.bf16.msra.mxu0 %v3717
        %3775 = vmatpush.bf16.msra.mxu0 %v3716
        %3776 = vmatpush.bf16.msra.mxu0 %v3715
        %3777 = vmatpush.bf16.msra.mxu0 %v3714
        %3778 = vmatpush.bf16.msra.mxu0 %v3713
        %3779 = vmatpush.bf16.msra.mxu0 %v3712
        %3780 = vmatpush.bf16.msra.mxu0 %v3711
        %3781 = vmatpush.bf16.msra.mxu0 %v3710
        %3782 = vmatmul.bf16.gmra.mxu0 %v3508
        %v3783 = vpop.f32.mrf.mxu0
        %v3784 = vadd.f32 %v3580, %v3783
        %v3785 = vpop.f32.mrf.mxu0
        %3786 = vdwg.mxu0
        %3787 = vmatpush.bf16.msra.mxu0 %v3725
        %3788 = vmatpush.bf16.msra.mxu0 %v3724
        %3789 = vmatpush.bf16.msra.mxu0 %v3723
        %3790 = vmatpush.bf16.msra.mxu0 %v3722
        %3791 = vmatpush.bf16.msra.mxu0 %v3721
        %3792 = vmatpush.bf16.msra.mxu0 %v3720
        %3793 = vmatpush.bf16.msra.mxu0 %v3719
        %3794 = vmatpush.bf16.msra.mxu0 %v3718
        %3795 = vmatmul.bf16.gmra.mxu0 %v3509
        %v3796 = vpop.f32.mrf.mxu0
        %v3797 = vadd.f32 %v3784, %v3796
        %v3798 = vpop.f32.mrf.mxu0
        %3799 = vdwg.mxu0
        %3800 = vmatpush.bf16.msra.mxu0 %v3733
        %3801 = vmatpush.bf16.msra.mxu0 %v3732
        %3802 = vmatpush.bf16.msra.mxu0 %v3731
        %3803 = vmatpush.bf16.msra.mxu0 %v3730
        %3804 = vmatpush.bf16.msra.mxu0 %v3729
        %3805 = vmatpush.bf16.msra.mxu0 %v3728
        %3806 = vmatpush.bf16.msra.mxu0 %v3727
        %3807 = vmatpush.bf16.msra.mxu0 %v3726
        %3808 = vmatmul.bf16.gmra.mxu0 %v3510
        %v3809 = vpop.f32.mrf.mxu0
        %v3810 = vadd.f32 %v3797, %v3809
        %v3811 = vpop.f32.mrf.mxu0
        %3812 = vdwg.mxu0
        %3813 = vmatpush.bf16.msra.mxu0 %v3741
        %3814 = vmatpush.bf16.msra.mxu0 %v3740
        %3815 = vmatpush.bf16.msra.mxu0 %v3739
        %3816 = vmatpush.bf16.msra.mxu0 %v3738
        %3817 = vmatpush.bf16.msra.mxu0 %v3737
        %3818 = vmatpush.bf16.msra.mxu0 %v3736
        %3819 = vmatpush.bf16.msra.mxu0 %v3735
        %3820 = vmatpush.bf16.msra.mxu0 %v3734
        %3821 = vmatmul.bf16.gmra.mxu0 %v3511
        %v3822 = vpop.f32.mrf.mxu0
        %v3823 = vadd.f32 %v3810, %v3822
        %v3824 = vpop.f32.mrf.mxu0
        %3825 = vdwg.mxu0
        %v3826 = vadd.f32 %v3180, %v3823
        %v3827 = vld [vmem:[%s14] sm:$0x1]
        %v3828 = vld [vmem:[#allocation10] sm:$0x1]
        %v3829 = vsel %vm1257, %v3826, 0.0
        %3830 = vadd.xlane.f32.xlu0 %v3829
        %v3831 = vpop.xlane.xlu0 %3830
        %v3832 = vmul.f32 %v3831, %v1271
        %v3833 = vsub.f32 %v3826, %v3832
        %v3834 = vmul.f32 %v3833, %v3833
        %v3835 = vsel %vm1257, %v3834, 0.0
        %3836 = vadd.xlane.f32.xlu0 %v3835
        %v3837 = vpop.xlane.xlu0 %3836
        %v3838 = vmul.f32 %v3837, %v1271
        %v3839 = vadd.f32 %v3838, 1e-06
        %v3840 = vrsqrt.pop %v3839
        %v3841 = vmul.f32 %v3840, %v3839
        %v3842 = vmul.f32 %v3841, %v3840
        %v3843 = vmul.f32 0.5, %v3842
        %v3844 = vsub.f32 1.5, %v3843
        %v3845 = vmul.f32 %v3840, %v3844
        %vm3846 = vweird.f32 %v3839
        %vm3847 = vweird.f32 %v3840
        %vm3848 = vmor %vm3846, %vm3847
        %v3849 = vsel %vm3848, %v3840, %v3845
        %v3850 = vmul.f32 %v3833, %v3849
        %v3851 = vmul.f32 %v3850, %v3827
        %v3852 = vadd.f32 %v3851, %v3828
        %v3853 = vpack.c.bf16 %v3852, %v3852
        %v3854 = vld [vmem:[#allocation11] sm:$0xf]
        %v3855 = vld [vmem:[#allocation11 + $0x4] sm:$0xf]
        %v3856 = vld [vmem:[#allocation11 + $0x8] sm:$0xf]
        %v3857 = vld [vmem:[#allocation11 + $0xc] sm:$0xf]
        %v3858 = vld [vmem:[#allocation11 + $0x10] sm:$0xf]
        %v3859 = vld [vmem:[#allocation11 + $0x14] sm:$0xf]
        %v3860 = vld [vmem:[#allocation11 + $0x18] sm:$0xf]
        %v3861 = vld [vmem:[#allocation11 + $0x1c] sm:$0xf]
        %v3862 = vld [vmem:[#allocation11 + $0x20] sm:$0xf]
        %v3863 = vld [vmem:[#allocation11 + $0x24] sm:$0xf]
        %v3864 = vld [vmem:[#allocation11 + $0x28] sm:$0xf]
        %v3865 = vld [vmem:[#allocation11 + $0x2c] sm:$0xf]
        %v3866 = vld [vmem:[#allocation11 + $0x30] sm:$0xf]
        %v3867 = vld [vmem:[#allocation11 + $0x34] sm:$0xf]
        %v3868 = vld [vmem:[#allocation11 + $0x38] sm:$0xf]
        %v3869 = vld [vmem:[#allocation11 + $0x3c] sm:$0xf]
        %v3870 = vld [vmem:[#allocation13] sm:$0x1]
        %v3887 = vunpack.c.l.b16 %v3854
        %v3888 = vunpack.c.l.b16 %v3855
        %v3889 = vunpack.c.l.b16 %v3856
        %v3890 = vunpack.c.l.b16 %v3857
        %v3891 = vunpack.c.l.b16 %v3858
        %v3892 = vunpack.c.l.b16 %v3859
        %v3893 = vunpack.c.l.b16 %v3860
        %v3894 = vunpack.c.l.b16 %v3861
        %v3895 = vunpack.c.l.b16 %v3862
        %v3896 = vunpack.c.l.b16 %v3863
        %v3897 = vunpack.c.l.b16 %v3864
        %v3898 = vunpack.c.l.b16 %v3865
        %v3899 = vunpack.c.l.b16 %v3866
        %v3900 = vunpack.c.l.b16 %v3867
        %v3901 = vunpack.c.l.b16 %v3868
        %v3902 = vunpack.c.l.b16 %v3869
        %v3903 = vpack.c.b16 %v3888, %v3887
        %v3904 = vpack.c.b16 %v3890, %v3889
        %v3905 = vpack.c.b16 %v3892, %v3891
        %v3906 = vpack.c.b16 %v3894, %v3893
        %v3907 = vpack.c.b16 %v3896, %v3895
        %v3908 = vpack.c.b16 %v3898, %v3897
        %v3909 = vpack.c.b16 %v3900, %v3899
        %v3910 = vpack.c.b16 %v3902, %v3901
        %3919 = vmatpush.bf16.msra.mxu0 %v3910
        %3920 = vmatpush.bf16.msra.mxu0 %v3909
        %3921 = vmatpush.bf16.msra.mxu0 %v3908
        %3922 = vmatpush.bf16.msra.mxu0 %v3907
        %3923 = vmatpush.bf16.msra.mxu0 %v3906
        %3924 = vmatpush.bf16.msra.mxu0 %v3905
        %3925 = vmatpush.bf16.msra.mxu0 %v3904
        %3926 = vmatpush.bf16.msra.mxu0 %v3903
        %3927 = vmatmul.bf16.gmra.mxu0 %v3853
        %v3928 = vpop.f32.mrf.mxu0
        %v3929 = vadd.f32 %v3870, %v3928
        %v3930 = vpop.f32.mrf.mxu0
        %3931 = vdwg.mxu0
        %v3932 = vmax.f32 %v3929, 0.0
        %v3933 = vpack.c.bf16 %v3932, %v3932
        %v3934 = vld [vmem:[#allocation14] sm:$0xf]
        %v3935 = vld [vmem:[#allocation14 + $0x4] sm:$0xf]
        %v3936 = vld [vmem:[#allocation14 + $0x8] sm:$0xf]
        %v3937 = vld [vmem:[#allocation14 + $0xc] sm:$0xf]
        %v3938 = vld [vmem:[#allocation14 + $0x10] sm:$0xf]
        %v3939 = vld [vmem:[#allocation14 + $0x14] sm:$0xf]
        %v3940 = vld [vmem:[#allocation14 + $0x18] sm:$0xf]
        %v3941 = vld [vmem:[#allocation14 + $0x1c] sm:$0xf]
        %v3942 = vld [vmem:[#allocation14 + $0x20] sm:$0xf]
        %v3943 = vld [vmem:[#allocation14 + $0x24] sm:$0xf]
        %v3944 = vld [vmem:[#allocation14 + $0x28] sm:$0xf]
        %v3945 = vld [vmem:[#allocation14 + $0x2c] sm:$0xf]
        %v3946 = vld [vmem:[#allocation14 + $0x30] sm:$0xf]
        %v3947 = vld [vmem:[#allocation14 + $0x34] sm:$0xf]
        %v3948 = vld [vmem:[#allocation14 + $0x38] sm:$0xf]
        %v3949 = vld [vmem:[#allocation14 + $0x3c] sm:$0xf]
        %v3950 = vld [vmem:[#allocation16] sm:$0x1]
        %v3967 = vunpack.c.l.b16 %v3934
        %v3968 = vunpack.c.l.b16 %v3935
        %v3969 = vunpack.c.l.b16 %v3936
        %v3970 = vunpack.c.l.b16 %v3937
        %v3971 = vunpack.c.l.b16 %v3938
        %v3972 = vunpack.c.l.b16 %v3939
        %v3973 = vunpack.c.l.b16 %v3940
        %v3974 = vunpack.c.l.b16 %v3941
        %v3975 = vunpack.c.l.b16 %v3942
        %v3976 = vunpack.c.l.b16 %v3943
        %v3977 = vunpack.c.l.b16 %v3944
        %v3978 = vunpack.c.l.b16 %v3945
        %v3979 = vunpack.c.l.b16 %v3946
        %v3980 = vunpack.c.l.b16 %v3947
        %v3981 = vunpack.c.l.b16 %v3948
        %v3982 = vunpack.c.l.b16 %v3949
        %v3983 = vpack.c.b16 %v3968, %v3967
        %v3984 = vpack.c.b16 %v3970, %v3969
        %v3985 = vpack.c.b16 %v3972, %v3971
        %v3986 = vpack.c.b16 %v3974, %v3973
        %v3987 = vpack.c.b16 %v3976, %v3975
        %v3988 = vpack.c.b16 %v3978, %v3977
        %v3989 = vpack.c.b16 %v3980, %v3979
        %v3990 = vpack.c.b16 %v3982, %v3981
        %3999 = vmatpush.bf16.msra.mxu0 %v3990
        %4000 = vmatpush.bf16.msra.mxu0 %v3989
        %4001 = vmatpush.bf16.msra.mxu0 %v3988
        %4002 = vmatpush.bf16.msra.mxu0 %v3987
        %4003 = vmatpush.bf16.msra.mxu0 %v3986
        %4004 = vmatpush.bf16.msra.mxu0 %v3985
        %4005 = vmatpush.bf16.msra.mxu0 %v3984
        %4006 = vmatpush.bf16.msra.mxu0 %v3983
        %4007 = vmatmul.bf16.gmra.mxu0 %v3933
        %v4008 = vpop.f32.mrf.mxu0
        %v4009 = vadd.f32 %v3950, %v4008
        %v4010 = vpop.f32.mrf.mxu0
        %4011 = vdwg.mxu0
        %4012 = vst [vmem:[%s764] sm:$0x1] %v4009
        %s4013 = sand.u32 %s472, 1
        %s4014 = scalar_lea.sflag [#allocation4], %s4013
        %s4015 = sand.u32 %s472, 1
        %s4016 = scalar_lea.vmem [#allocation17], %s4015
        // Predicated region
        $region137: #{vit_model_xray_forward.1} parent=99 // pred_check
          %p4017 = pneg %p482
        $region138: #{vit_model_xray_forward.1} parent=99 // pred_check_branch
          %4019 = sbr.rel (%p4017) target = $region140
        $region139: #{vit_model_xray_forward.1} parent=99 // pred_region
          %4021 = vsyncadd %s4014, 0
          %s4022 = scalar_lea.hbm %s20, %s39
          %s4024 = sshll.u32 %s4016, 4
          %s4025 = int_to_ptr.vmem [resolvable:$true] %s4024
          %s4026 = sshll.u32 %s4022, 4
          %s4027 = int_to_ptr.hbm [resolvable:$true] %s4026
          %4029 = dma.vmem_to_hbm [thread:$0]  %s4025, 16, %s4027, %s4014
        $region140: #{vit_model_xray_forward.1} parent=99 // pred_fallthru
          _
      $region100: #{vit_model_xray_forward.1} parent=5 // pred_fallthru
        _
      %p4030 = scmp.le.s32.totalorder 2, %s34
      // Predicated region
      $region141: #{vit_model_xray_forward.1} parent=5 // pred_check
        %p4031 = pneg %p4030
      $region142: #{vit_model_xray_forward.1} parent=5 // pred_check_branch
        %4033 = sbr.rel (%p4031) target = $region144
      $region143: #{vit_model_xray_forward.1} parent=5 // pred_region
        %s4034 = ssub.s32 %s34, 2
        // Predicated region
        $region145: #{vit_model_xray_forward.1} parent=143 // pred_check
          %p4035 = pneg %p488
        $region146: #{vit_model_xray_forward.1} parent=143 // pred_check_branch
          %4037 = sbr.rel (%p4035) target = $region148
        $region147: #{vit_model_xray_forward.1} parent=143 // pred_region
          %s4038 = sand.u32 %s473, 1
          %s4039 = scalar_lea.sflag [#allocation4], %s4038
          %s4040 = sand.u32 %s473, 1
          %s4041 = scalar_lea.vmem [#allocation17], %s4040
          %4043 = dma.done %s4039, 16
        $region148: #{vit_model_xray_forward.1} parent=143 // pred_fallthru
          _
      $region144: #{vit_model_xray_forward.1} parent=5 // pred_fallthru
        _
    $region6: #{vit_model_xray_forward.1} parent=1 // loop_footer
      %s38 = sadd.s32 1, %s34
    $region7: #{vit_model_xray_forward.1} parent=1 // loop_footer_branch
      %33 = sbr.rel target = $region3
    $region8: #{vit_model_xray_forward.1} parent=1 // loop_exit
      _
    %4044 = vsyncpa [#allocation3], 1
    %s4045 = scalar_lea.sflag [#allocation3], 1
    %4046 = vsyncpa %s4045, 1
    %4047 = vsyncpa [#allocation6], 1
    %4048 = vsyncpa [#allocation9], 1
    %4049 = vsyncpa [#allocation12], 1
    %4050 = vsyncpa [#allocation15], 1
    %4051 = vsyncpa [#allocation4], 1
    %s4052 = scalar_lea.sflag [#allocation4], 1
    %4053 = vsyncpa %s4052, 1

</llo_original>
